<compile_context>
chip_gen: v7x
topology: tpu7x:2x2x1
jax: 0.10.0
libtpu: 0.0.40
codegen_flags: <defaults>
</compile_context>

<pallas_src>
import functools

import jax
import jax.numpy as jnp
from jax import lax
from jax.experimental import pallas as pl
from jax.experimental.pallas import tpu as pltpu

_LANE = 128      # vreg lane width
_SUBLANE = 8     # vreg sublane count


def _round_up(x, m):
    return (x + m - 1) // m * m


# ------------------------------ Pallas kernel ---------------------------------


def _encoder_kernel(x_ref, wih_ref, whh_ref, b_ref, out_ref, act_scr, gx_scr,
                    *, num_layers, seq_len, bp):
    """Fused stacked-LSTM encoder: one kernel invocation covers every layer and
    every time step.

    x_ref   : (T*Bp, Dp)      zero-padded, time-major flattened input
    wih_ref : (L, Dp, 4*Dp)   padded W_ih^T per layer (each gate 128-lane aligned)
    whh_ref : (L, Dp, 4*Dp)   padded W_hh^T per layer
    b_ref   : (L, 1, 4*Dp)    padded (b_ih + b_hh) per layer (f32)
    out_ref : (T*Bp, Dp)      last-layer hidden states (lane-dense stores)
    act_scr : (T*Bp, Dp)      inter-layer activations (hidden states of the
                              layer just computed; next layer's input)
    gx_scr  : (T*Bp, 4*Dp)    hoisted input projection for the current layer
    """
    dp = act_scr.shape[1]
    mm_dtype = wih_ref.dtype  # bf16 on v6e/v7x if requested, else f32

    for layer in range(num_layers):  # static unroll; layer count is small
        # Layer-0 reads the input block directly; the last layer writes its
        # hidden states straight into the output block.
        src_ref = x_ref if layer == 0 else act_scr
        dst_ref = out_ref if layer == num_layers - 1 else act_scr

        # 1) Hoisted input projection: all time steps in ONE big MXU matmul
        #    (the only part of the LSTM with no sequential dependency).
        gx_scr[...] = (
            jnp.dot(src_ref[...].astype(mm_dtype), wih_ref[layer],
                    preferred_element_type=jnp.float32)
            + b_ref[layer]
        )

        # 2) Sequential recurrence: only h @ W_hh^T + elementwise per step.
        def step(t, carry):
            h_prev, c_prev = carry
            row = pl.multiple_of(t * bp, bp)          # sublane-aligned row block
            gates = gx_scr[pl.ds(row, bp), :] + jnp.dot(
                h_prev.astype(mm_dtype), whh_ref[layer],
                preferred_element_type=jnp.float32)
            # Each gate occupies its own 128-lane-aligned block -> free slices.
            i_g = jax.nn.sigmoid(gates[:, 0 * dp:1 * dp])
            f_g = jax.nn.sigmoid(gates[:, 1 * dp:2 * dp])
            g_g = jnp.tanh(gates[:, 2 * dp:3 * dp])
            o_g = jax.nn.sigmoid(gates[:, 3 * dp:4 * dp])
            c_new = f_g * c_prev + i_g * g_g          # f32 cell update
            h_new = o_g * jnp.tanh(c_new)
            dst_ref[pl.ds(row, bp), :] = h_new        # next layer input / output
            return h_new, c_new

        h0 = jnp.zeros((bp, dp), jnp.float32)
        c0 = jnp.zeros((bp, dp), jnp.float32)
        lax.fori_loop(0, seq_len, step, (h0, c0), unroll=seq_len <= 16)


def _encoder_pallas_call(x_flat, wih, whh, bias, *, seq_len, bp):
    tb, dp = x_flat.shape
    num_layers, _, gw = wih.shape
    kernel = functools.partial(
        _encoder_kernel, num_layers=num_layers, seq_len=seq_len, bp=bp)
    return pl.pallas_call(
        kernel,
        out_shape=jax.ShapeDtypeStruct((tb, dp), jnp.float32),
        grid=(1,),  # whole problem in one kernel invocation (recurrence inside)
        in_specs=[
            pl.BlockSpec((tb, dp), lambda i: (0, 0)),
            pl.BlockSpec((num_layers, dp, gw), lambda i: (0, 0, 0)),
            pl.BlockSpec((num_layers, dp, gw), lambda i: (0, 0, 0)),
            pl.BlockSpec((num_layers, 1, gw), lambda i: (0, 0, 0)),
        ],
        out_specs=pl.BlockSpec((tb, dp), lambda i: (0, 0)),
        scratch_shapes=[
            pltpu.VMEM((tb, dp), jnp.float32),   # inter-layer activations
            pltpu.VMEM((tb, gw), jnp.float32),   # hoisted input projection
        ],
        compiler_params=pltpu.CompilerParams(
            dimension_semantics=("arbitrary",),
        ),
        # TODO(synk): for very long T on v7x (64 MiB VMEM) keep x/out in HBM
        # (memory_space=pl.ANY) with manual double-buffered T-chunk DMAs, and add
        # a "parallel" batch-tile grid axis to use both TensorCores.
    )(x_flat, wih, whh, bias)


# --------------------------- parameter preparation -----------------------------


def init_encoder_params(key, input_size, hidden_sizes):
    """Deterministic init matching PyTorch LSTM param shapes (U(-1/sqrt(H), 1/sqrt(H)))."""
    params = []
    in_sz = input_size
    for h in hidden_sizes:
        key, k1, k2, k3, k4 = jax.random.split(key, 5)
        bound = 1.0 / jnp.sqrt(jnp.float32(h))
        params.append(
            dict(
                w_ih=jax.random.uniform(k1, (4 * h, in_sz), jnp.float32, -bound, bound),
                w_hh=jax.random.uniform(k2, (4 * h, h), jnp.float32, -bound, bound),
                b_ih=jax.random.uniform(k3, (4 * h,), jnp.float32, -bound, bound),
                b_hh=jax.random.uniform(k4, (4 * h,), jnp.float32, -bound, bound),
            )
        )
        in_sz = h
    return params


def prepare_encoder_params(params, input_size, hidden_sizes,
                           compute_dtype=jnp.float32):
    """One-time prep: transpose, combine biases, pad gates to 128-lane blocks and
    stack all layers into (L, Dp, 4*Dp) tensors.  compute_dtype=jnp.bfloat16 is
    recommended on v6e/v7x (f32 accumulation is kept inside the kernel)."""
    dp = _round_up(max([input_size] + list(hidden_sizes)), _LANE)

    def pad_gates_t(w, in_dim, h):
        # w: (4h, in_dim)  ->  (Dp, 4*Dp), gate g lives in cols [g*Dp, g*Dp + h)
        w4 = w.reshape(4, h, in_dim)
        w4 = jnp.transpose(w4, (0, 2, 1))                          # (4, in, h)
        w4 = jnp.pad(w4, ((0, 0), (0, dp - in_dim), (0, dp - h)))  # (4, Dp, Dp)
        return jnp.transpose(w4, (1, 0, 2)).reshape(dp, 4 * dp)

    wih_l, whh_l, b_l = [], [], []
    in_sz = input_size
    for p, h in zip(params, hidden_sizes):
        wih_l.append(pad_gates_t(p["w_ih"], in_sz, h).astype(compute_dtype))
        whh_l.append(pad_gates_t(p["w_hh"], h, h).astype(compute_dtype))
        bsum = (p["b_ih"] + p["b_hh"]).reshape(4, h)
        bsum = jnp.pad(bsum, ((0, 0), (0, dp - h))).reshape(1, 4 * dp)
        b_l.append(bsum.astype(jnp.float32))
        in_sz = h

    return dict(
        w_ih_t=jnp.stack(wih_l),    # (L, Dp, 4*Dp)
        w_hh_t=jnp.stack(whh_l),    # (L, Dp, 4*Dp)
        bias=jnp.stack(b_l),        # (L, 1, 4*Dp)
        h_last=int(hidden_sizes[-1]),
    )


# ------------------------------ Encoder forward --------------------------------


@functools.partial(jax.jit, static_argnames=("h_last",))
def _encoder_forward_impl(x_btd, wih, whh, bias, h_last):
    b, t, d_in = x_btd.shape
    _, dp, _ = wih.shape
    bp = _round_up(max(b, 1), _SUBLANE)
    # (B, T, Din) -> time-major, batch padded to 8 sublanes, features to 128 lanes.
    x = jnp.transpose(x_btd.astype(jnp.float32), (1, 0, 2))        # (T, B, Din)
    x = jnp.pad(x, ((0, 0), (0, bp - b), (0, dp - d_in)))          # (T, Bp, Dp)
    x_flat = x.reshape(t * bp, dp)
    out_flat = _encoder_pallas_call(x_flat, wih, whh, bias, seq_len=t, bp=bp)
    out = out_flat.reshape(t, bp, dp)[:, :b, :h_last]
    return jnp.transpose(out, (1, 0, 2))                           # (B, T, H_last)


def encoder_forward(x_btd, prepared):
    """Stacked-LSTM encoder forward. x_btd: (B, T, D) batch_first, like PyTorch."""
    return _encoder_forward_impl(x_btd, prepared["w_ih_t"], prepared["w_hh_t"],
                                 prepared["bias"], prepared["h_last"])


# ------------------------------ pure-JAX reference ------------------------------


def _lstm_layer_ref(x_btd, w_ih, w_hh, b_ih, b_hh):
    B, T, _ = x_btd.shape
    H = w_hh.shape[1]

    def step(carry, x_t):
        h, c = carry
        gates = x_t @ w_ih.T + h @ w_hh.T + b_ih + b_hh
        i_g, f_g, g_g, o_g = jnp.split(gates, 4, axis=-1)
        i_g = jax.nn.sigmoid(i_g)
        f_g = jax.nn.sigmoid(f_g)
        g_g = jnp.tanh(g_g)
        o_g = jax.nn.sigmoid(o_g)
        c_new = f_g * c + i_g * g_g
        h_new = o_g * jnp.tanh(c_new)
        return (h_new, c_new), h_new

    h0 = jnp.zeros((B, H), jnp.float32)
    c0 = jnp.zeros((B, H), jnp.float32)
    _, ys = lax.scan(step, (h0, c0), jnp.transpose(x_btd, (1, 0, 2)))
    return jnp.transpose(ys, (1, 0, 2))


def encoder_ref(x_btd, params):
    x = x_btd.astype(jnp.float32)
    for p in params:
        x = _lstm_layer_ref(x, p["w_ih"], p["w_hh"], p["b_ih"], p["b_hh"])
    return x


# ------------------------------------ main --------------------------------------


if __name__ == "__main__":
    B, T = 2, 8
    input_size = 16
    hidden_sizes = [32, 16]

    key = jax.random.PRNGKey(0)
    key, kx = jax.random.split(key)
    x = jax.random.normal(kx, (B, T, input_size), jnp.float32)

    params = init_encoder_params(key, input_size, hidden_sizes)
    # compute_dtype=jnp.bfloat16 recommended on v6e/v7x; f32 here for exactness.
    prepared = prepare_encoder_params(params, input_size, hidden_sizes,
                                      compute_dtype=jnp.float32)

    out = encoder_forward(x, prepared)
    out = jax.block_until_ready(out)

    ref = encoder_ref(x, params)

    assert out.shape == (B, T, hidden_sizes[-1]), out.shape
    max_err = float(jnp.max(jnp.abs(out - ref)))
    assert jnp.allclose(out, ref, atol=1e-3, rtol=1e-3), max_err

    print("KERNEL_OK")
</pallas_src>

<mosaic_0001>
module attributes {stable_mosaic.version = 11 : i64} {
  func.func @_encoder_kernel(%arg0: i32, %arg1: memref<64x128xf32, #tpu.memory_space<vmem>>, %arg2: memref<2x128x512xf32, #tpu.memory_space<vmem>>, %arg3: memref<2x128x512xf32, #tpu.memory_space<vmem>>, %arg4: memref<2x1x512xf32, #tpu.memory_space<vmem>>, %arg5: memref<64x128xf32, #tpu.memory_space<vmem>>, %arg6: memref<64x128xf32, #tpu.memory_space<vmem>>, %arg7: memref<64x512xf32, #tpu.memory_space<vmem>>) attributes {dimension_semantics = [#tpu.dimension_semantics<arbitrary>], iteration_bounds = array<i64: 1>, scalar_prefetch = 0 : i64, scratch_operands = 2 : i64, tpu.core_type = #tpu.core_type<tc>, window_params = [{pipeline_mode = #tpu.pipeline_mode<synchronous>, transform_indices = @transform_0, window_bounds = array<i64: 64, 128>}, {pipeline_mode = #tpu.pipeline_mode<synchronous>, transform_indices = @transform_1, window_bounds = array<i64: 2, 128, 512>}, {pipeline_mode = #tpu.pipeline_mode<synchronous>, transform_indices = @transform_2, window_bounds = array<i64: 2, 128, 512>}, {pipeline_mode = #tpu.pipeline_mode<synchronous>, transform_indices = @transform_3, window_bounds = array<i64: 2, 1, 512>}, {pipeline_mode = #tpu.pipeline_mode<synchronous>, transform_indices = @transform_4, window_bounds = array<i64: 64, 128>}]} {
    %c0 = arith.constant 0 : index
    %c0_0 = arith.constant 0 : index
    %0 = vector.load %arg1[%c0, %c0_0] : memref<64x128xf32, #tpu.memory_space<vmem>>, vector<64x128xf32>
    %c0_1 = arith.constant 0 : index
    %c0_2 = arith.constant 0 : index
    %c0_3 = arith.constant 0 : index
    %1 = vector.load %arg2[%c0_1, %c0_2, %c0_3] : memref<2x128x512xf32, #tpu.memory_space<vmem>>, vector<1x128x512xf32>
    %2 = vector.shape_cast %1 : vector<1x128x512xf32> to vector<128x512xf32>
    %cst = arith.constant dense<0.000000e+00> : vector<64x512xf32>
    %3 = tpu.matmul %0, %2, %cst {dimension_numbers = #tpu.dot_dimension_numbers<[1], [0], [0], [1], [0, 0, 1, 1], [], []>} : vector<64x128xf32>, vector<128x512xf32>, vector<64x512xf32> -> vector<64x512xf32>
    %c0_4 = arith.constant 0 : index
    %c0_5 = arith.constant 0 : index
    %c0_6 = arith.constant 0 : index
    %4 = vector.load %arg4[%c0_4, %c0_5, %c0_6] : memref<2x1x512xf32, #tpu.memory_space<vmem>>, vector<1x1x512xf32>
    %5 = vector.shape_cast %4 : vector<1x1x512xf32> to vector<1x512xf32>
    %6 = vector.broadcast %5 : vector<1x512xf32> to vector<64x512xf32>
    %7 = arith.addf %3, %6 : vector<64x512xf32>
    %c0_7 = arith.constant 0 : index
    %c0_8 = arith.constant 0 : index
    %8 = vector.load %arg7[%c0_7, %c0_8] : memref<64x512xf32, #tpu.memory_space<vmem>>, vector<64x512xf32>
    tpu.vector_store %arg7[%c0_7, %c0_8], %7 {strides = array<i32>} : memref<64x512xf32, #tpu.memory_space<vmem>>, vector<64x512xf32>,
    %cst_9 = arith.constant 0.000000e+00 : f32
    %9 = vector.broadcast %cst_9 : f32 to vector<8x128xf32>
    %cst_10 = arith.constant 0.000000e+00 : f32
    %10 = vector.broadcast %cst_10 : f32 to vector<8x128xf32>
    %c0_i32 = arith.constant 0 : i32
    %c8_i32 = arith.constant 8 : i32
    %11 = arith.muli %c0_i32, %c8_i32 : i32
    %12 = tpu.assume_multiple %11, 8 : i32
    %13 = arith.index_cast %12 : i32 to index
    %c0_11 = arith.constant 0 : index
    %14 = vector.load %arg7[%13, %c0_11] : memref<64x512xf32, #tpu.memory_space<vmem>>, vector<8x512xf32>
    %c0_12 = arith.constant 0 : index
    %c0_13 = arith.constant 0 : index
    %c0_14 = arith.constant 0 : index
    %15 = vector.load %arg3[%c0_12, %c0_13, %c0_14] : memref<2x128x512xf32, #tpu.memory_space<vmem>>, vector<1x128x512xf32>
    %16 = vector.shape_cast %15 : vector<1x128x512xf32> to vector<128x512xf32>
    %cst_15 = arith.constant dense<0.000000e+00> : vector<8x512xf32>
    %17 = tpu.matmul %9, %16, %cst_15 {dimension_numbers = #tpu.dot_dimension_numbers<[1], [0], [0], [1], [0, 0, 1, 1], [], []>} : vector<8x128xf32>, vector<128x512xf32>, vector<8x512xf32> -> vector<8x512xf32>
    %18 = arith.addf %14, %17 : vector<8x512xf32>
    %19 = vector.extract_strided_slice %18 {offsets = [0, 0], sizes = [8, 128], strides = [1, 1]} : vector<8x512xf32> to vector<8x128xf32>
    %20 = arith.negf %19 : vector<8x128xf32>
    %21 = math.exp %20 : vector<8x128xf32>
    %cst_16 = arith.constant 1.000000e+00 : f32
    %22 = vector.broadcast %cst_16 : f32 to vector<8x128xf32>
    %23 = arith.addf %22, %21 : vector<8x128xf32>
    %24 = arith.divf %22, %23 : vector<8x128xf32>
    %25 = vector.extract_strided_slice %18 {offsets = [0, 128], sizes = [8, 128], strides = [1, 1]} : vector<8x512xf32> to vector<8x128xf32>
    %26 = arith.negf %25 : vector<8x128xf32>
    %27 = math.exp %26 : vector<8x128xf32>
    %cst_17 = arith.constant 1.000000e+00 : f32
    %28 = vector.broadcast %cst_17 : f32 to vector<8x128xf32>
    %29 = arith.addf %28, %27 : vector<8x128xf32>
    %30 = arith.divf %28, %29 : vector<8x128xf32>
    %31 = vector.extract_strided_slice %18 {offsets = [0, 256], sizes = [8, 128], strides = [1, 1]} : vector<8x512xf32> to vector<8x128xf32>
    %32 = math.tanh %31 : vector<8x128xf32>
    %33 = vector.extract_strided_slice %18 {offsets = [0, 384], sizes = [8, 128], strides = [1, 1]} : vector<8x512xf32> to vector<8x128xf32>
    %34 = arith.negf %33 : vector<8x128xf32>
    %35 = math.exp %34 : vector<8x128xf32>
    %cst_18 = arith.constant 1.000000e+00 : f32
    %36 = vector.broadcast %cst_18 : f32 to vector<8x128xf32>
    %37 = arith.addf %36, %35 : vector<8x128xf32>
    %38 = arith.divf %36, %37 : vector<8x128xf32>
    %39 = arith.mulf %30, %10 : vector<8x128xf32>
    %40 = arith.mulf %24, %32 : vector<8x128xf32>
    %41 = arith.addf %39, %40 : vector<8x128xf32>
    %42 = math.tanh %41 : vector<8x128xf32>
    %43 = arith.mulf %38, %42 : vector<8x128xf32>
    %44 = arith.index_cast %12 : i32 to index
    %c0_19 = arith.constant 0 : index
    %45 = vector.load %arg6[%44, %c0_19] : memref<64x128xf32, #tpu.memory_space<vmem>>, vector<8x128xf32>
    tpu.vector_store %arg6[%44, %c0_19], %43 {strides = array<i32>} : memref<64x128xf32, #tpu.memory_space<vmem>>, vector<8x128xf32>,
    %c1_i32 = arith.constant 1 : i32
    %c8_i32_20 = arith.constant 8 : i32
    %46 = arith.muli %c1_i32, %c8_i32_20 : i32
    %47 = tpu.assume_multiple %46, 8 : i32
    %48 = arith.index_cast %47 : i32 to index
    %c0_21 = arith.constant 0 : index
    %49 = vector.load %arg7[%48, %c0_21] : memref<64x512xf32, #tpu.memory_space<vmem>>, vector<8x512xf32>
    %c0_22 = arith.constant 0 : index
    %c0_23 = arith.constant 0 : index
    %c0_24 = arith.constant 0 : index
    %50 = vector.load %arg3[%c0_22, %c0_23, %c0_24] : memref<2x128x512xf32, #tpu.memory_space<vmem>>, vector<1x128x512xf32>
    %51 = vector.shape_cast %50 : vector<1x128x512xf32> to vector<128x512xf32>
    %cst_25 = arith.constant dense<0.000000e+00> : vector<8x512xf32>
    %52 = tpu.matmul %43, %51, %cst_25 {dimension_numbers = #tpu.dot_dimension_numbers<[1], [0], [0], [1], [0, 0, 1, 1], [], []>} : vector<8x128xf32>, vector<128x512xf32>, vector<8x512xf32> -> vector<8x512xf32>
    %53 = arith.addf %49, %52 : vector<8x512xf32>
    %54 = vector.extract_strided_slice %53 {offsets = [0, 0], sizes = [8, 128], strides = [1, 1]} : vector<8x512xf32> to vector<8x128xf32>
    %55 = arith.negf %54 : vector<8x128xf32>
    %56 = math.exp %55 : vector<8x128xf32>
    %cst_26 = arith.constant 1.000000e+00 : f32
    %57 = vector.broadcast %cst_26 : f32 to vector<8x128xf32>
    %58 = arith.addf %57, %56 : vector<8x128xf32>
    %59 = arith.divf %57, %58 : vector<8x128xf32>
    %60 = vector.extract_strided_slice %53 {offsets = [0, 128], sizes = [8, 128], strides = [1, 1]} : vector<8x512xf32> to vector<8x128xf32>
    %61 = arith.negf %60 : vector<8x128xf32>
    %62 = math.exp %61 : vector<8x128xf32>
    %cst_27 = arith.constant 1.000000e+00 : f32
    %63 = vector.broadcast %cst_27 : f32 to vector<8x128xf32>
    %64 = arith.addf %63, %62 : vector<8x128xf32>
    %65 = arith.divf %63, %64 : vector<8x128xf32>
    %66 = vector.extract_strided_slice %53 {offsets = [0, 256], sizes = [8, 128], strides = [1, 1]} : vector<8x512xf32> to vector<8x128xf32>
    %67 = math.tanh %66 : vector<8x128xf32>
    %68 = vector.extract_strided_slice %53 {offsets = [0, 384], sizes = [8, 128], strides = [1, 1]} : vector<8x512xf32> to vector<8x128xf32>
    %69 = arith.negf %68 : vector<8x128xf32>
    %70 = math.exp %69 : vector<8x128xf32>
    %cst_28 = arith.constant 1.000000e+00 : f32
    %71 = vector.broadcast %cst_28 : f32 to vector<8x128xf32>
    %72 = arith.addf %71, %70 : vector<8x128xf32>
    %73 = arith.divf %71, %72 : vector<8x128xf32>
    %74 = arith.mulf %65, %41 : vector<8x128xf32>
    %75 = arith.mulf %59, %67 : vector<8x128xf32>
    %76 = arith.addf %74, %75 : vector<8x128xf32>
    %77 = math.tanh %76 : vector<8x128xf32>
    %78 = arith.mulf %73, %77 : vector<8x128xf32>
    %79 = arith.index_cast %47 : i32 to index
    %c0_29 = arith.constant 0 : index
    %80 = vector.load %arg6[%79, %c0_29] : memref<64x128xf32, #tpu.memory_space<vmem>>, vector<8x128xf32>
    tpu.vector_store %arg6[%79, %c0_29], %78 {strides = array<i32>} : memref<64x128xf32, #tpu.memory_space<vmem>>, vector<8x128xf32>,
    %c2_i32 = arith.constant 2 : i32
    %c8_i32_30 = arith.constant 8 : i32
    %81 = arith.muli %c2_i32, %c8_i32_30 : i32
    %82 = tpu.assume_multiple %81, 8 : i32
    %83 = arith.index_cast %82 : i32 to index
    %c0_31 = arith.constant 0 : index
    %84 = vector.load %arg7[%83, %c0_31] : memref<64x512xf32, #tpu.memory_space<vmem>>, vector<8x512xf32>
    %c0_32 = arith.constant 0 : index
    %c0_33 = arith.constant 0 : index
    %c0_34 = arith.constant 0 : index
    %85 = vector.load %arg3[%c0_32, %c0_33, %c0_34] : memref<2x128x512xf32, #tpu.memory_space<vmem>>, vector<1x128x512xf32>
    %86 = vector.shape_cast %85 : vector<1x128x512xf32> to vector<128x512xf32>
    %cst_35 = arith.constant dense<0.000000e+00> : vector<8x512xf32>
    %87 = tpu.matmul %78, %86, %cst_35 {dimension_numbers = #tpu.dot_dimension_numbers<[1], [0], [0], [1], [0, 0, 1, 1], [], []>} : vector<8x128xf32>, vector<128x512xf32>, vector<8x512xf32> -> vector<8x512xf32>
    %88 = arith.addf %84, %87 : vector<8x512xf32>
    %89 = vector.extract_strided_slice %88 {offsets = [0, 0], sizes = [8, 128], strides = [1, 1]} : vector<8x512xf32> to vector<8x128xf32>
    %90 = arith.negf %89 : vector<8x128xf32>
    %91 = math.exp %90 : vector<8x128xf32>
    %cst_36 = arith.constant 1.000000e+00 : f32
    %92 = vector.broadcast %cst_36 : f32 to vector<8x128xf32>
    %93 = arith.addf %92, %91 : vector<8x128xf32>
    %94 = arith.divf %92, %93 : vector<8x128xf32>
    %95 = vector.extract_strided_slice %88 {offsets = [0, 128], sizes = [8, 128], strides = [1, 1]} : vector<8x512xf32> to vector<8x128xf32>
    %96 = arith.negf %95 : vector<8x128xf32>
    %97 = math.exp %96 : vector<8x128xf32>
    %cst_37 = arith.constant 1.000000e+00 : f32
    %98 = vector.broadcast %cst_37 : f32 to vector<8x128xf32>
    %99 = arith.addf %98, %97 : vector<8x128xf32>
    %100 = arith.divf %98, %99 : vector<8x128xf32>
    %101 = vector.extract_strided_slice %88 {offsets = [0, 256], sizes = [8, 128], strides = [1, 1]} : vector<8x512xf32> to vector<8x128xf32>
    %102 = math.tanh %101 : vector<8x128xf32>
    %103 = vector.extract_strided_slice %88 {offsets = [0, 384], sizes = [8, 128], strides = [1, 1]} : vector<8x512xf32> to vector<8x128xf32>
    %104 = arith.negf %103 : vector<8x128xf32>
    %105 = math.exp %104 : vector<8x128xf32>
    %cst_38 = arith.constant 1.000000e+00 : f32
    %106 = vector.broadcast %cst_38 : f32 to vector<8x128xf32>
    %107 = arith.addf %106, %105 : vector<8x128xf32>
    %108 = arith.divf %106, %107 : vector<8x128xf32>
    %109 = arith.mulf %100, %76 : vector<8x128xf32>
    %110 = arith.mulf %94, %102 : vector<8x128xf32>
    %111 = arith.addf %109, %110 : vector<8x128xf32>
    %112 = math.tanh %111 : vector<8x128xf32>
    %113 = arith.mulf %108, %112 : vector<8x128xf32>
    %114 = arith.index_cast %82 : i32 to index
    %c0_39 = arith.constant 0 : index
    %115 = vector.load %arg6[%114, %c0_39] : memref<64x128xf32, #tpu.memory_space<vmem>>, vector<8x128xf32>
    tpu.vector_store %arg6[%114, %c0_39], %113 {strides = array<i32>} : memref<64x128xf32, #tpu.memory_space<vmem>>, vector<8x128xf32>,
    %c3_i32 = arith.constant 3 : i32
    %c8_i32_40 = arith.constant 8 : i32
    %116 = arith.muli %c3_i32, %c8_i32_40 : i32
    %117 = tpu.assume_multiple %116, 8 : i32
    %118 = arith.index_cast %117 : i32 to index
    %c0_41 = arith.constant 0 : index
    %119 = vector.load %arg7[%118, %c0_41] : memref<64x512xf32, #tpu.memory_space<vmem>>, vector<8x512xf32>
    %c0_42 = arith.constant 0 : index
    %c0_43 = arith.constant 0 : index
    %c0_44 = arith.constant 0 : index
    %120 = vector.load %arg3[%c0_42, %c0_43, %c0_44] : memref<2x128x512xf32, #tpu.memory_space<vmem>>, vector<1x128x512xf32>
    %121 = vector.shape_cast %120 : vector<1x128x512xf32> to vector<128x512xf32>
    %cst_45 = arith.constant dense<0.000000e+00> : vector<8x512xf32>
    %122 = tpu.matmul %113, %121, %cst_45 {dimension_numbers = #tpu.dot_dimension_numbers<[1], [0], [0], [1], [0, 0, 1, 1], [], []>} : vector<8x128xf32>, vector<128x512xf32>, vector<8x512xf32> -> vector<8x512xf32>
    %123 = arith.addf %119, %122 : vector<8x512xf32>
    %124 = vector.extract_strided_slice %123 {offsets = [0, 0], sizes = [8, 128], strides = [1, 1]} : vector<8x512xf32> to vector<8x128xf32>
    %125 = arith.negf %124 : vector<8x128xf32>
    %126 = math.exp %125 : vector<8x128xf32>
    %cst_46 = arith.constant 1.000000e+00 : f32
    %127 = vector.broadcast %cst_46 : f32 to vector<8x128xf32>
    %128 = arith.addf %127, %126 : vector<8x128xf32>
    %129 = arith.divf %127, %128 : vector<8x128xf32>
    %130 = vector.extract_strided_slice %123 {offsets = [0, 128], sizes = [8, 128], strides = [1, 1]} : vector<8x512xf32> to vector<8x128xf32>
    %131 = arith.negf %130 : vector<8x128xf32>
    %132 = math.exp %131 : vector<8x128xf32>
    %cst_47 = arith.constant 1.000000e+00 : f32
    %133 = vector.broadcast %cst_47 : f32 to vector<8x128xf32>
    %134 = arith.addf %133, %132 : vector<8x128xf32>
    %135 = arith.divf %133, %134 : vector<8x128xf32>
    %136 = vector.extract_strided_slice %123 {offsets = [0, 256], sizes = [8, 128], strides = [1, 1]} : vector<8x512xf32> to vector<8x128xf32>
    %137 = math.tanh %136 : vector<8x128xf32>
    %138 = vector.extract_strided_slice %123 {offsets = [0, 384], sizes = [8, 128], strides = [1, 1]} : vector<8x512xf32> to vector<8x128xf32>
    %139 = arith.negf %138 : vector<8x128xf32>
    %140 = math.exp %139 : vector<8x128xf32>
    %cst_48 = arith.constant 1.000000e+00 : f32
    %141 = vector.broadcast %cst_48 : f32 to vector<8x128xf32>
    %142 = arith.addf %141, %140 : vector<8x128xf32>
    %143 = arith.divf %141, %142 : vector<8x128xf32>
    %144 = arith.mulf %135, %111 : vector<8x128xf32>
    %145 = arith.mulf %129, %137 : vector<8x128xf32>
    %146 = arith.addf %144, %145 : vector<8x128xf32>
    %147 = math.tanh %146 : vector<8x128xf32>
    %148 = arith.mulf %143, %147 : vector<8x128xf32>
    %149 = arith.index_cast %117 : i32 to index
    %c0_49 = arith.constant 0 : index
    %150 = vector.load %arg6[%149, %c0_49] : memref<64x128xf32, #tpu.memory_space<vmem>>, vector<8x128xf32>
    tpu.vector_store %arg6[%149, %c0_49], %148 {strides = array<i32>} : memref<64x128xf32, #tpu.memory_space<vmem>>, vector<8x128xf32>,
    %c4_i32 = arith.constant 4 : i32
    %c8_i32_50 = arith.constant 8 : i32
    %151 = arith.muli %c4_i32, %c8_i32_50 : i32
    %152 = tpu.assume_multiple %151, 8 : i32
    %153 = arith.index_cast %152 : i32 to index
    %c0_51 = arith.constant 0 : index
    %154 = vector.load %arg7[%153, %c0_51] : memref<64x512xf32, #tpu.memory_space<vmem>>, vector<8x512xf32>
    %c0_52 = arith.constant 0 : index
    %c0_53 = arith.constant 0 : index
    %c0_54 = arith.constant 0 : index
    %155 = vector.load %arg3[%c0_52, %c0_53, %c0_54] : memref<2x128x512xf32, #tpu.memory_space<vmem>>, vector<1x128x512xf32>
    %156 = vector.shape_cast %155 : vector<1x128x512xf32> to vector<128x512xf32>
    %cst_55 = arith.constant dense<0.000000e+00> : vector<8x512xf32>
    %157 = tpu.matmul %148, %156, %cst_55 {dimension_numbers = #tpu.dot_dimension_numbers<[1], [0], [0], [1], [0, 0, 1, 1], [], []>} : vector<8x128xf32>, vector<128x512xf32>, vector<8x512xf32> -> vector<8x512xf32>
    %158 = arith.addf %154, %157 : vector<8x512xf32>
    %159 = vector.extract_strided_slice %158 {offsets = [0, 0], sizes = [8, 128], strides = [1, 1]} : vector<8x512xf32> to vector<8x128xf32>
    %160 = arith.negf %159 : vector<8x128xf32>
    %161 = math.exp %160 : vector<8x128xf32>
    %cst_56 = arith.constant 1.000000e+00 : f32
    %162 = vector.broadcast %cst_56 : f32 to vector<8x128xf32>
    %163 = arith.addf %162, %161 : vector<8x128xf32>
    %164 = arith.divf %162, %163 : vector<8x128xf32>
    %165 = vector.extract_strided_slice %158 {offsets = [0, 128], sizes = [8, 128], strides = [1, 1]} : vector<8x512xf32> to vector<8x128xf32>
    %166 = arith.negf %165 : vector<8x128xf32>
    %167 = math.exp %166 : vector<8x128xf32>
    %cst_57 = arith.constant 1.000000e+00 : f32
    %168 = vector.broadcast %cst_57 : f32 to vector<8x128xf32>
    %169 = arith.addf %168, %167 : vector<8x128xf32>
    %170 = arith.divf %168, %169 : vector<8x128xf32>
    %171 = vector.extract_strided_slice %158 {offsets = [0, 256], sizes = [8, 128], strides = [1, 1]} : vector<8x512xf32> to vector<8x128xf32>
    %172 = math.tanh %171 : vector<8x128xf32>
    %173 = vector.extract_strided_slice %158 {offsets = [0, 384], sizes = [8, 128], strides = [1, 1]} : vector<8x512xf32> to vector<8x128xf32>
    %174 = arith.negf %173 : vector<8x128xf32>
    %175 = math.exp %174 : vector<8x128xf32>
    %cst_58 = arith.constant 1.000000e+00 : f32
    %176 = vector.broadcast %cst_58 : f32 to vector<8x128xf32>
    %177 = arith.addf %176, %175 : vector<8x128xf32>
    %178 = arith.divf %176, %177 : vector<8x128xf32>
    %179 = arith.mulf %170, %146 : vector<8x128xf32>
    %180 = arith.mulf %164, %172 : vector<8x128xf32>
    %181 = arith.addf %179, %180 : vector<8x128xf32>
    %182 = math.tanh %181 : vector<8x128xf32>
    %183 = arith.mulf %178, %182 : vector<8x128xf32>
    %184 = arith.index_cast %152 : i32 to index
    %c0_59 = arith.constant 0 : index
    %185 = vector.load %arg6[%184, %c0_59] : memref<64x128xf32, #tpu.memory_space<vmem>>, vector<8x128xf32>
    tpu.vector_store %arg6[%184, %c0_59], %183 {strides = array<i32>} : memref<64x128xf32, #tpu.memory_space<vmem>>, vector<8x128xf32>,
    %c5_i32 = arith.constant 5 : i32
    %c8_i32_60 = arith.constant 8 : i32
    %186 = arith.muli %c5_i32, %c8_i32_60 : i32
    %187 = tpu.assume_multiple %186, 8 : i32
    %188 = arith.index_cast %187 : i32 to index
    %c0_61 = arith.constant 0 : index
    %189 = vector.load %arg7[%188, %c0_61] : memref<64x512xf32, #tpu.memory_space<vmem>>, vector<8x512xf32>
    %c0_62 = arith.constant 0 : index
    %c0_63 = arith.constant 0 : index
    %c0_64 = arith.constant 0 : index
    %190 = vector.load %arg3[%c0_62, %c0_63, %c0_64] : memref<2x128x512xf32, #tpu.memory_space<vmem>>, vector<1x128x512xf32>
    %191 = vector.shape_cast %190 : vector<1x128x512xf32> to vector<128x512xf32>
    %cst_65 = arith.constant dense<0.000000e+00> : vector<8x512xf32>
    %192 = tpu.matmul %183, %191, %cst_65 {dimension_numbers = #tpu.dot_dimension_numbers<[1], [0], [0], [1], [0, 0, 1, 1], [], []>} : vector<8x128xf32>, vector<128x512xf32>, vector<8x512xf32> -> vector<8x512xf32>
    %193 = arith.addf %189, %192 : vector<8x512xf32>
    %194 = vector.extract_strided_slice %193 {offsets = [0, 0], sizes = [8, 128], strides = [1, 1]} : vector<8x512xf32> to vector<8x128xf32>
    %195 = arith.negf %194 : vector<8x128xf32>
    %196 = math.exp %195 : vector<8x128xf32>
    %cst_66 = arith.constant 1.000000e+00 : f32
    %197 = vector.broadcast %cst_66 : f32 to vector<8x128xf32>
    %198 = arith.addf %197, %196 : vector<8x128xf32>
    %199 = arith.divf %197, %198 : vector<8x128xf32>
    %200 = vector.extract_strided_slice %193 {offsets = [0, 128], sizes = [8, 128], strides = [1, 1]} : vector<8x512xf32> to vector<8x128xf32>
    %201 = arith.negf %200 : vector<8x128xf32>
    %202 = math.exp %201 : vector<8x128xf32>
    %cst_67 = arith.constant 1.000000e+00 : f32
    %203 = vector.broadcast %cst_67 : f32 to vector<8x128xf32>
    %204 = arith.addf %203, %202 : vector<8x128xf32>
    %205 = arith.divf %203, %204 : vector<8x128xf32>
    %206 = vector.extract_strided_slice %193 {offsets = [0, 256], sizes = [8, 128], strides = [1, 1]} : vector<8x512xf32> to vector<8x128xf32>
    %207 = math.tanh %206 : vector<8x128xf32>
    %208 = vector.extract_strided_slice %193 {offsets = [0, 384], sizes = [8, 128], strides = [1, 1]} : vector<8x512xf32> to vector<8x128xf32>
    %209 = arith.negf %208 : vector<8x128xf32>
    %210 = math.exp %209 : vector<8x128xf32>
    %cst_68 = arith.constant 1.000000e+00 : f32
    %211 = vector.broadcast %cst_68 : f32 to vector<8x128xf32>
    %212 = arith.addf %211, %210 : vector<8x128xf32>
    %213 = arith.divf %211, %212 : vector<8x128xf32>
    %214 = arith.mulf %205, %181 : vector<8x128xf32>
    %215 = arith.mulf %199, %207 : vector<8x128xf32>
    %216 = arith.addf %214, %215 : vector<8x128xf32>
    %217 = math.tanh %216 : vector<8x128xf32>
    %218 = arith.mulf %213, %217 : vector<8x128xf32>
    %219 = arith.index_cast %187 : i32 to index
    %c0_69 = arith.constant 0 : index
    %220 = vector.load %arg6[%219, %c0_69] : memref<64x128xf32, #tpu.memory_space<vmem>>, vector<8x128xf32>
    tpu.vector_store %arg6[%219, %c0_69], %218 {strides = array<i32>} : memref<64x128xf32, #tpu.memory_space<vmem>>, vector<8x128xf32>,
    %c6_i32 = arith.constant 6 : i32
    %c8_i32_70 = arith.constant 8 : i32
    %221 = arith.muli %c6_i32, %c8_i32_70 : i32
    %222 = tpu.assume_multiple %221, 8 : i32
    %223 = arith.index_cast %222 : i32 to index
    %c0_71 = arith.constant 0 : index
    %224 = vector.load %arg7[%223, %c0_71] : memref<64x512xf32, #tpu.memory_space<vmem>>, vector<8x512xf32>
    %c0_72 = arith.constant 0 : index
    %c0_73 = arith.constant 0 : index
    %c0_74 = arith.constant 0 : index
    %225 = vector.load %arg3[%c0_72, %c0_73, %c0_74] : memref<2x128x512xf32, #tpu.memory_space<vmem>>, vector<1x128x512xf32>
    %226 = vector.shape_cast %225 : vector<1x128x512xf32> to vector<128x512xf32>
    %cst_75 = arith.constant dense<0.000000e+00> : vector<8x512xf32>
    %227 = tpu.matmul %218, %226, %cst_75 {dimension_numbers = #tpu.dot_dimension_numbers<[1], [0], [0], [1], [0, 0, 1, 1], [], []>} : vector<8x128xf32>, vector<128x512xf32>, vector<8x512xf32> -> vector<8x512xf32>
    %228 = arith.addf %224, %227 : vector<8x512xf32>
    %229 = vector.extract_strided_slice %228 {offsets = [0, 0], sizes = [8, 128], strides = [1, 1]} : vector<8x512xf32> to vector<8x128xf32>
    %230 = arith.negf %229 : vector<8x128xf32>
    %231 = math.exp %230 : vector<8x128xf32>
    %cst_76 = arith.constant 1.000000e+00 : f32
    %232 = vector.broadcast %cst_76 : f32 to vector<8x128xf32>
    %233 = arith.addf %232, %231 : vector<8x128xf32>
    %234 = arith.divf %232, %233 : vector<8x128xf32>
    %235 = vector.extract_strided_slice %228 {offsets = [0, 128], sizes = [8, 128], strides = [1, 1]} : vector<8x512xf32> to vector<8x128xf32>
    %236 = arith.negf %235 : vector<8x128xf32>
    %237 = math.exp %236 : vector<8x128xf32>
    %cst_77 = arith.constant 1.000000e+00 : f32
    %238 = vector.broadcast %cst_77 : f32 to vector<8x128xf32>
    %239 = arith.addf %238, %237 : vector<8x128xf32>
    %240 = arith.divf %238, %239 : vector<8x128xf32>
    %241 = vector.extract_strided_slice %228 {offsets = [0, 256], sizes = [8, 128], strides = [1, 1]} : vector<8x512xf32> to vector<8x128xf32>
    %242 = math.tanh %241 : vector<8x128xf32>
    %243 = vector.extract_strided_slice %228 {offsets = [0, 384], sizes = [8, 128], strides = [1, 1]} : vector<8x512xf32> to vector<8x128xf32>
    %244 = arith.negf %243 : vector<8x128xf32>
    %245 = math.exp %244 : vector<8x128xf32>
    %cst_78 = arith.constant 1.000000e+00 : f32
    %246 = vector.broadcast %cst_78 : f32 to vector<8x128xf32>
    %247 = arith.addf %246, %245 : vector<8x128xf32>
    %248 = arith.divf %246, %247 : vector<8x128xf32>
    %249 = arith.mulf %240, %216 : vector<8x128xf32>
    %250 = arith.mulf %234, %242 : vector<8x128xf32>
    %251 = arith.addf %249, %250 : vector<8x128xf32>
    %252 = math.tanh %251 : vector<8x128xf32>
    %253 = arith.mulf %248, %252 : vector<8x128xf32>
    %254 = arith.index_cast %222 : i32 to index
    %c0_79 = arith.constant 0 : index
    %255 = vector.load %arg6[%254, %c0_79] : memref<64x128xf32, #tpu.memory_space<vmem>>, vector<8x128xf32>
    tpu.vector_store %arg6[%254, %c0_79], %253 {strides = array<i32>} : memref<64x128xf32, #tpu.memory_space<vmem>>, vector<8x128xf32>,
    %c7_i32 = arith.constant 7 : i32
    %c8_i32_80 = arith.constant 8 : i32
    %256 = arith.muli %c7_i32, %c8_i32_80 : i32
    %257 = tpu.assume_multiple %256, 8 : i32
    %258 = arith.index_cast %257 : i32 to index
    %c0_81 = arith.constant 0 : index
    %259 = vector.load %arg7[%258, %c0_81] : memref<64x512xf32, #tpu.memory_space<vmem>>, vector<8x512xf32>
    %c0_82 = arith.constant 0 : index
    %c0_83 = arith.constant 0 : index
    %c0_84 = arith.constant 0 : index
    %260 = vector.load %arg3[%c0_82, %c0_83, %c0_84] : memref<2x128x512xf32, #tpu.memory_space<vmem>>, vector<1x128x512xf32>
    %261 = vector.shape_cast %260 : vector<1x128x512xf32> to vector<128x512xf32>
    %cst_85 = arith.constant dense<0.000000e+00> : vector<8x512xf32>
    %262 = tpu.matmul %253, %261, %cst_85 {dimension_numbers = #tpu.dot_dimension_numbers<[1], [0], [0], [1], [0, 0, 1, 1], [], []>} : vector<8x128xf32>, vector<128x512xf32>, vector<8x512xf32> -> vector<8x512xf32>
    %263 = arith.addf %259, %262 : vector<8x512xf32>
    %264 = vector.extract_strided_slice %263 {offsets = [0, 0], sizes = [8, 128], strides = [1, 1]} : vector<8x512xf32> to vector<8x128xf32>
    %265 = arith.negf %264 : vector<8x128xf32>
    %266 = math.exp %265 : vector<8x128xf32>
    %cst_86 = arith.constant 1.000000e+00 : f32
    %267 = vector.broadcast %cst_86 : f32 to vector<8x128xf32>
    %268 = arith.addf %267, %266 : vector<8x128xf32>
    %269 = arith.divf %267, %268 : vector<8x128xf32>
    %270 = vector.extract_strided_slice %263 {offsets = [0, 128], sizes = [8, 128], strides = [1, 1]} : vector<8x512xf32> to vector<8x128xf32>
    %271 = arith.negf %270 : vector<8x128xf32>
    %272 = math.exp %271 : vector<8x128xf32>
    %cst_87 = arith.constant 1.000000e+00 : f32
    %273 = vector.broadcast %cst_87 : f32 to vector<8x128xf32>
    %274 = arith.addf %273, %272 : vector<8x128xf32>
    %275 = arith.divf %273, %274 : vector<8x128xf32>
    %276 = vector.extract_strided_slice %263 {offsets = [0, 256], sizes = [8, 128], strides = [1, 1]} : vector<8x512xf32> to vector<8x128xf32>
    %277 = math.tanh %276 : vector<8x128xf32>
    %278 = vector.extract_strided_slice %263 {offsets = [0, 384], sizes = [8, 128], strides = [1, 1]} : vector<8x512xf32> to vector<8x128xf32>
    %279 = arith.negf %278 : vector<8x128xf32>
    %280 = math.exp %279 : vector<8x128xf32>
    %cst_88 = arith.constant 1.000000e+00 : f32
    %281 = vector.broadcast %cst_88 : f32 to vector<8x128xf32>
    %282 = arith.addf %281, %280 : vector<8x128xf32>
    %283 = arith.divf %281, %282 : vector<8x128xf32>
    %284 = arith.mulf %275, %251 : vector<8x128xf32>
    %285 = arith.mulf %269, %277 : vector<8x128xf32>
    %286 = arith.addf %284, %285 : vector<8x128xf32>
    %287 = math.tanh %286 : vector<8x128xf32>
    %288 = arith.mulf %283, %287 : vector<8x128xf32>
    %289 = arith.index_cast %257 : i32 to index
    %c0_89 = arith.constant 0 : index
    %290 = vector.load %arg6[%289, %c0_89] : memref<64x128xf32, #tpu.memory_space<vmem>>, vector<8x128xf32>
    tpu.vector_store %arg6[%289, %c0_89], %288 {strides = array<i32>} : memref<64x128xf32, #tpu.memory_space<vmem>>, vector<8x128xf32>,
    %c8_i32_90 = arith.constant 8 : i32
    %c0_91 = arith.constant 0 : index
    %c0_92 = arith.constant 0 : index
    %291 = vector.load %arg6[%c0_91, %c0_92] : memref<64x128xf32, #tpu.memory_space<vmem>>, vector<64x128xf32>
    %c1 = arith.constant 1 : index
    %c0_93 = arith.constant 0 : index
    %c0_94 = arith.constant 0 : index
    %292 = vector.load %arg2[%c1, %c0_93, %c0_94] : memref<2x128x512xf32, #tpu.memory_space<vmem>>, vector<1x128x512xf32>
    %293 = vector.shape_cast %292 : vector<1x128x512xf32> to vector<128x512xf32>
    %cst_95 = arith.constant dense<0.000000e+00> : vector<64x512xf32>
    %294 = tpu.matmul %291, %293, %cst_95 {dimension_numbers = #tpu.dot_dimension_numbers<[1], [0], [0], [1], [0, 0, 1, 1], [], []>} : vector<64x128xf32>, vector<128x512xf32>, vector<64x512xf32> -> vector<64x512xf32>
    %c1_96 = arith.constant 1 : index
    %c0_97 = arith.constant 0 : index
    %c0_98 = arith.constant 0 : index
    %295 = vector.load %arg4[%c1_96, %c0_97, %c0_98] : memref<2x1x512xf32, #tpu.memory_space<vmem>>, vector<1x1x512xf32>
    %296 = vector.shape_cast %295 : vector<1x1x512xf32> to vector<1x512xf32>
    %297 = vector.broadcast %296 : vector<1x512xf32> to vector<64x512xf32>
    %298 = arith.addf %294, %297 : vector<64x512xf32>
    %c0_99 = arith.constant 0 : index
    %c0_100 = arith.constant 0 : index
    %299 = vector.load %arg7[%c0_99, %c0_100] : memref<64x512xf32, #tpu.memory_space<vmem>>, vector<64x512xf32>
    tpu.vector_store %arg7[%c0_99, %c0_100], %298 {strides = array<i32>} : memref<64x512xf32, #tpu.memory_space<vmem>>, vector<64x512xf32>,
    %cst_101 = arith.constant 0.000000e+00 : f32
    %300 = vector.broadcast %cst_101 : f32 to vector<8x128xf32>
    %cst_102 = arith.constant 0.000000e+00 : f32
    %301 = vector.broadcast %cst_102 : f32 to vector<8x128xf32>
    %c0_i32_103 = arith.constant 0 : i32
    %c8_i32_104 = arith.constant 8 : i32
    %302 = arith.muli %c0_i32_103, %c8_i32_104 : i32
    %303 = tpu.assume_multiple %302, 8 : i32
    %304 = arith.index_cast %303 : i32 to index
    %c0_105 = arith.constant 0 : index
    %305 = vector.load %arg7[%304, %c0_105] : memref<64x512xf32, #tpu.memory_space<vmem>>, vector<8x512xf32>
    %c1_106 = arith.constant 1 : index
    %c0_107 = arith.constant 0 : index
    %c0_108 = arith.constant 0 : index
    %306 = vector.load %arg3[%c1_106, %c0_107, %c0_108] : memref<2x128x512xf32, #tpu.memory_space<vmem>>, vector<1x128x512xf32>
    %307 = vector.shape_cast %306 : vector<1x128x512xf32> to vector<128x512xf32>
    %cst_109 = arith.constant dense<0.000000e+00> : vector<8x512xf32>
    %308 = tpu.matmul %300, %307, %cst_109 {dimension_numbers = #tpu.dot_dimension_numbers<[1], [0], [0], [1], [0, 0, 1, 1], [], []>} : vector<8x128xf32>, vector<128x512xf32>, vector<8x512xf32> -> vector<8x512xf32>
    %309 = arith.addf %305, %308 : vector<8x512xf32>
    %310 = vector.extract_strided_slice %309 {offsets = [0, 0], sizes = [8, 128], strides = [1, 1]} : vector<8x512xf32> to vector<8x128xf32>
    %311 = arith.negf %310 : vector<8x128xf32>
    %312 = math.exp %311 : vector<8x128xf32>
    %cst_110 = arith.constant 1.000000e+00 : f32
    %313 = vector.broadcast %cst_110 : f32 to vector<8x128xf32>
    %314 = arith.addf %313, %312 : vector<8x128xf32>
    %315 = arith.divf %313, %314 : vector<8x128xf32>
    %316 = vector.extract_strided_slice %309 {offsets = [0, 128], sizes = [8, 128], strides = [1, 1]} : vector<8x512xf32> to vector<8x128xf32>
    %317 = arith.negf %316 : vector<8x128xf32>
    %318 = math.exp %317 : vector<8x128xf32>
    %cst_111 = arith.constant 1.000000e+00 : f32
    %319 = vector.broadcast %cst_111 : f32 to vector<8x128xf32>
    %320 = arith.addf %319, %318 : vector<8x128xf32>
    %321 = arith.divf %319, %320 : vector<8x128xf32>
    %322 = vector.extract_strided_slice %309 {offsets = [0, 256], sizes = [8, 128], strides = [1, 1]} : vector<8x512xf32> to vector<8x128xf32>
    %323 = math.tanh %322 : vector<8x128xf32>
    %324 = vector.extract_strided_slice %309 {offsets = [0, 384], sizes = [8, 128], strides = [1, 1]} : vector<8x512xf32> to vector<8x128xf32>
    %325 = arith.negf %324 : vector<8x128xf32>
    %326 = math.exp %325 : vector<8x128xf32>
    %cst_112 = arith.constant 1.000000e+00 : f32
    %327 = vector.broadcast %cst_112 : f32 to vector<8x128xf32>
    %328 = arith.addf %327, %326 : vector<8x128xf32>
    %329 = arith.divf %327, %328 : vector<8x128xf32>
    %330 = arith.mulf %321, %301 : vector<8x128xf32>
    %331 = arith.mulf %315, %323 : vector<8x128xf32>
    %332 = arith.addf %330, %331 : vector<8x128xf32>
    %333 = math.tanh %332 : vector<8x128xf32>
    %334 = arith.mulf %329, %333 : vector<8x128xf32>
    %335 = arith.index_cast %303 : i32 to index
    %c0_113 = arith.constant 0 : index
    %336 = vector.load %arg5[%335, %c0_113] : memref<64x128xf32, #tpu.memory_space<vmem>>, vector<8x128xf32>
    tpu.vector_store %arg5[%335, %c0_113], %334 {strides = array<i32>} : memref<64x128xf32, #tpu.memory_space<vmem>>, vector<8x128xf32>,
    %c1_i32_114 = arith.constant 1 : i32
    %c8_i32_115 = arith.constant 8 : i32
    %337 = arith.muli %c1_i32_114, %c8_i32_115 : i32
    %338 = tpu.assume_multiple %337, 8 : i32
    %339 = arith.index_cast %338 : i32 to index
    %c0_116 = arith.constant 0 : index
    %340 = vector.load %arg7[%339, %c0_116] : memref<64x512xf32, #tpu.memory_space<vmem>>, vector<8x512xf32>
    %c1_117 = arith.constant 1 : index
    %c0_118 = arith.constant 0 : index
    %c0_119 = arith.constant 0 : index
    %341 = vector.load %arg3[%c1_117, %c0_118, %c0_119] : memref<2x128x512xf32, #tpu.memory_space<vmem>>, vector<1x128x512xf32>
    %342 = vector.shape_cast %341 : vector<1x128x512xf32> to vector<128x512xf32>
    %cst_120 = arith.constant dense<0.000000e+00> : vector<8x512xf32>
    %343 = tpu.matmul %334, %342, %cst_120 {dimension_numbers = #tpu.dot_dimension_numbers<[1], [0], [0], [1], [0, 0, 1, 1], [], []>} : vector<8x128xf32>, vector<128x512xf32>, vector<8x512xf32> -> vector<8x512xf32>
    %344 = arith.addf %340, %343 : vector<8x512xf32>
    %345 = vector.extract_strided_slice %344 {offsets = [0, 0], sizes = [8, 128], strides = [1, 1]} : vector<8x512xf32> to vector<8x128xf32>
    %346 = arith.negf %345 : vector<8x128xf32>
    %347 = math.exp %346 : vector<8x128xf32>
    %cst_121 = arith.constant 1.000000e+00 : f32
    %348 = vector.broadcast %cst_121 : f32 to vector<8x128xf32>
    %349 = arith.addf %348, %347 : vector<8x128xf32>
    %350 = arith.divf %348, %349 : vector<8x128xf32>
    %351 = vector.extract_strided_slice %344 {offsets = [0, 128], sizes = [8, 128], strides = [1, 1]} : vector<8x512xf32> to vector<8x128xf32>
    %352 = arith.negf %351 : vector<8x128xf32>
    %353 = math.exp %352 : vector<8x128xf32>
    %cst_122 = arith.constant 1.000000e+00 : f32
    %354 = vector.broadcast %cst_122 : f32 to vector<8x128xf32>
    %355 = arith.addf %354, %353 : vector<8x128xf32>
    %356 = arith.divf %354, %355 : vector<8x128xf32>
    %357 = vector.extract_strided_slice %344 {offsets = [0, 256], sizes = [8, 128], strides = [1, 1]} : vector<8x512xf32> to vector<8x128xf32>
    %358 = math.tanh %357 : vector<8x128xf32>
    %359 = vector.extract_strided_slice %344 {offsets = [0, 384], sizes = [8, 128], strides = [1, 1]} : vector<8x512xf32> to vector<8x128xf32>
    %360 = arith.negf %359 : vector<8x128xf32>
    %361 = math.exp %360 : vector<8x128xf32>
    %cst_123 = arith.constant 1.000000e+00 : f32
    %362 = vector.broadcast %cst_123 : f32 to vector<8x128xf32>
    %363 = arith.addf %362, %361 : vector<8x128xf32>
    %364 = arith.divf %362, %363 : vector<8x128xf32>
    %365 = arith.mulf %356, %332 : vector<8x128xf32>
    %366 = arith.mulf %350, %358 : vector<8x128xf32>
    %367 = arith.addf %365, %366 : vector<8x128xf32>
    %368 = math.tanh %367 : vector<8x128xf32>
    %369 = arith.mulf %364, %368 : vector<8x128xf32>
    %370 = arith.index_cast %338 : i32 to index
    %c0_124 = arith.constant 0 : index
    %371 = vector.load %arg5[%370, %c0_124] : memref<64x128xf32, #tpu.memory_space<vmem>>, vector<8x128xf32>
    tpu.vector_store %arg5[%370, %c0_124], %369 {strides = array<i32>} : memref<64x128xf32, #tpu.memory_space<vmem>>, vector<8x128xf32>,
    %c2_i32_125 = arith.constant 2 : i32
    %c8_i32_126 = arith.constant 8 : i32
    %372 = arith.muli %c2_i32_125, %c8_i32_126 : i32
    %373 = tpu.assume_multiple %372, 8 : i32
    %374 = arith.index_cast %373 : i32 to index
    %c0_127 = arith.constant 0 : index
    %375 = vector.load %arg7[%374, %c0_127] : memref<64x512xf32, #tpu.memory_space<vmem>>, vector<8x512xf32>
    %c1_128 = arith.constant 1 : index
    %c0_129 = arith.constant 0 : index
    %c0_130 = arith.constant 0 : index
    %376 = vector.load %arg3[%c1_128, %c0_129, %c0_130] : memref<2x128x512xf32, #tpu.memory_space<vmem>>, vector<1x128x512xf32>
    %377 = vector.shape_cast %376 : vector<1x128x512xf32> to vector<128x512xf32>
    %cst_131 = arith.constant dense<0.000000e+00> : vector<8x512xf32>
    %378 = tpu.matmul %369, %377, %cst_131 {dimension_numbers = #tpu.dot_dimension_numbers<[1], [0], [0], [1], [0, 0, 1, 1], [], []>} : vector<8x128xf32>, vector<128x512xf32>, vector<8x512xf32> -> vector<8x512xf32>
    %379 = arith.addf %375, %378 : vector<8x512xf32>
    %380 = vector.extract_strided_slice %379 {offsets = [0, 0], sizes = [8, 128], strides = [1, 1]} : vector<8x512xf32> to vector<8x128xf32>
    %381 = arith.negf %380 : vector<8x128xf32>
    %382 = math.exp %381 : vector<8x128xf32>
    %cst_132 = arith.constant 1.000000e+00 : f32
    %383 = vector.broadcast %cst_132 : f32 to vector<8x128xf32>
    %384 = arith.addf %383, %382 : vector<8x128xf32>
    %385 = arith.divf %383, %384 : vector<8x128xf32>
    %386 = vector.extract_strided_slice %379 {offsets = [0, 128], sizes = [8, 128], strides = [1, 1]} : vector<8x512xf32> to vector<8x128xf32>
    %387 = arith.negf %386 : vector<8x128xf32>
    %388 = math.exp %387 : vector<8x128xf32>
    %cst_133 = arith.constant 1.000000e+00 : f32
    %389 = vector.broadcast %cst_133 : f32 to vector<8x128xf32>
    %390 = arith.addf %389, %388 : vector<8x128xf32>
    %391 = arith.divf %389, %390 : vector<8x128xf32>
    %392 = vector.extract_strided_slice %379 {offsets = [0, 256], sizes = [8, 128], strides = [1, 1]} : vector<8x512xf32> to vector<8x128xf32>
    %393 = math.tanh %392 : vector<8x128xf32>
    %394 = vector.extract_strided_slice %379 {offsets = [0, 384], sizes = [8, 128], strides = [1, 1]} : vector<8x512xf32> to vector<8x128xf32>
    %395 = arith.negf %394 : vector<8x128xf32>
    %396 = math.exp %395 : vector<8x128xf32>
    %cst_134 = arith.constant 1.000000e+00 : f32
    %397 = vector.broadcast %cst_134 : f32 to vector<8x128xf32>
    %398 = arith.addf %397, %396 : vector<8x128xf32>
    %399 = arith.divf %397, %398 : vector<8x128xf32>
    %400 = arith.mulf %391, %367 : vector<8x128xf32>
    %401 = arith.mulf %385, %393 : vector<8x128xf32>
    %402 = arith.addf %400, %401 : vector<8x128xf32>
    %403 = math.tanh %402 : vector<8x128xf32>
    %404 = arith.mulf %399, %403 : vector<8x128xf32>
    %405 = arith.index_cast %373 : i32 to index
    %c0_135 = arith.constant 0 : index
    %406 = vector.load %arg5[%405, %c0_135] : memref<64x128xf32, #tpu.memory_space<vmem>>, vector<8x128xf32>
    tpu.vector_store %arg5[%405, %c0_135], %404 {strides = array<i32>} : memref<64x128xf32, #tpu.memory_space<vmem>>, vector<8x128xf32>,
    %c3_i32_136 = arith.constant 3 : i32
    %c8_i32_137 = arith.constant 8 : i32
    %407 = arith.muli %c3_i32_136, %c8_i32_137 : i32
    %408 = tpu.assume_multiple %407, 8 : i32
    %409 = arith.index_cast %408 : i32 to index
    %c0_138 = arith.constant 0 : index
    %410 = vector.load %arg7[%409, %c0_138] : memref<64x512xf32, #tpu.memory_space<vmem>>, vector<8x512xf32>
    %c1_139 = arith.constant 1 : index
    %c0_140 = arith.constant 0 : index
    %c0_141 = arith.constant 0 : index
    %411 = vector.load %arg3[%c1_139, %c0_140, %c0_141] : memref<2x128x512xf32, #tpu.memory_space<vmem>>, vector<1x128x512xf32>
    %412 = vector.shape_cast %411 : vector<1x128x512xf32> to vector<128x512xf32>
    %cst_142 = arith.constant dense<0.000000e+00> : vector<8x512xf32>
    %413 = tpu.matmul %404, %412, %cst_142 {dimension_numbers = #tpu.dot_dimension_numbers<[1], [0], [0], [1], [0, 0, 1, 1], [], []>} : vector<8x128xf32>, vector<128x512xf32>, vector<8x512xf32> -> vector<8x512xf32>
    %414 = arith.addf %410, %413 : vector<8x512xf32>
    %415 = vector.extract_strided_slice %414 {offsets = [0, 0], sizes = [8, 128], strides = [1, 1]} : vector<8x512xf32> to vector<8x128xf32>
    %416 = arith.negf %415 : vector<8x128xf32>
    %417 = math.exp %416 : vector<8x128xf32>
    %cst_143 = arith.constant 1.000000e+00 : f32
    %418 = vector.broadcast %cst_143 : f32 to vector<8x128xf32>
    %419 = arith.addf %418, %417 : vector<8x128xf32>
    %420 = arith.divf %418, %419 : vector<8x128xf32>
    %421 = vector.extract_strided_slice %414 {offsets = [0, 128], sizes = [8, 128], strides = [1, 1]} : vector<8x512xf32> to vector<8x128xf32>
    %422 = arith.negf %421 : vector<8x128xf32>
    %423 = math.exp %422 : vector<8x128xf32>
    %cst_144 = arith.constant 1.000000e+00 : f32
    %424 = vector.broadcast %cst_144 : f32 to vector<8x128xf32>
    %425 = arith.addf %424, %423 : vector<8x128xf32>
    %426 = arith.divf %424, %425 : vector<8x128xf32>
    %427 = vector.extract_strided_slice %414 {offsets = [0, 256], sizes = [8, 128], strides = [1, 1]} : vector<8x512xf32> to vector<8x128xf32>
    %428 = math.tanh %427 : vector<8x128xf32>
    %429 = vector.extract_strided_slice %414 {offsets = [0, 384], sizes = [8, 128], strides = [1, 1]} : vector<8x512xf32> to vector<8x128xf32>
    %430 = arith.negf %429 : vector<8x128xf32>
    %431 = math.exp %430 : vector<8x128xf32>
    %cst_145 = arith.constant 1.000000e+00 : f32
    %432 = vector.broadcast %cst_145 : f32 to vector<8x128xf32>
    %433 = arith.addf %432, %431 : vector<8x128xf32>
    %434 = arith.divf %432, %433 : vector<8x128xf32>
    %435 = arith.mulf %426, %402 : vector<8x128xf32>
    %436 = arith.mulf %420, %428 : vector<8x128xf32>
    %437 = arith.addf %435, %436 : vector<8x128xf32>
    %438 = math.tanh %437 : vector<8x128xf32>
    %439 = arith.mulf %434, %438 : vector<8x128xf32>
    %440 = arith.index_cast %408 : i32 to index
    %c0_146 = arith.constant 0 : index
    %441 = vector.load %arg5[%440, %c0_146] : memref<64x128xf32, #tpu.memory_space<vmem>>, vector<8x128xf32>
    tpu.vector_store %arg5[%440, %c0_146], %439 {strides = array<i32>} : memref<64x128xf32, #tpu.memory_space<vmem>>, vector<8x128xf32>,
    %c4_i32_147 = arith.constant 4 : i32
    %c8_i32_148 = arith.constant 8 : i32
    %442 = arith.muli %c4_i32_147, %c8_i32_148 : i32
    %443 = tpu.assume_multiple %442, 8 : i32
    %444 = arith.index_cast %443 : i32 to index
    %c0_149 = arith.constant 0 : index
    %445 = vector.load %arg7[%444, %c0_149] : memref<64x512xf32, #tpu.memory_space<vmem>>, vector<8x512xf32>
    %c1_150 = arith.constant 1 : index
    %c0_151 = arith.constant 0 : index
    %c0_152 = arith.constant 0 : index
    %446 = vector.load %arg3[%c1_150, %c0_151, %c0_152] : memref<2x128x512xf32, #tpu.memory_space<vmem>>, vector<1x128x512xf32>
    %447 = vector.shape_cast %446 : vector<1x128x512xf32> to vector<128x512xf32>
    %cst_153 = arith.constant dense<0.000000e+00> : vector<8x512xf32>
    %448 = tpu.matmul %439, %447, %cst_153 {dimension_numbers = #tpu.dot_dimension_numbers<[1], [0], [0], [1], [0, 0, 1, 1], [], []>} : vector<8x128xf32>, vector<128x512xf32>, vector<8x512xf32> -> vector<8x512xf32>
    %449 = arith.addf %445, %448 : vector<8x512xf32>
    %450 = vector.extract_strided_slice %449 {offsets = [0, 0], sizes = [8, 128], strides = [1, 1]} : vector<8x512xf32> to vector<8x128xf32>
    %451 = arith.negf %450 : vector<8x128xf32>
    %452 = math.exp %451 : vector<8x128xf32>
    %cst_154 = arith.constant 1.000000e+00 : f32
    %453 = vector.broadcast %cst_154 : f32 to vector<8x128xf32>
    %454 = arith.addf %453, %452 : vector<8x128xf32>
    %455 = arith.divf %453, %454 : vector<8x128xf32>
    %456 = vector.extract_strided_slice %449 {offsets = [0, 128], sizes = [8, 128], strides = [1, 1]} : vector<8x512xf32> to vector<8x128xf32>
    %457 = arith.negf %456 : vector<8x128xf32>
    %458 = math.exp %457 : vector<8x128xf32>
    %cst_155 = arith.constant 1.000000e+00 : f32
    %459 = vector.broadcast %cst_155 : f32 to vector<8x128xf32>
    %460 = arith.addf %459, %458 : vector<8x128xf32>
    %461 = arith.divf %459, %460 : vector<8x128xf32>
    %462 = vector.extract_strided_slice %449 {offsets = [0, 256], sizes = [8, 128], strides = [1, 1]} : vector<8x512xf32> to vector<8x128xf32>
    %463 = math.tanh %462 : vector<8x128xf32>
    %464 = vector.extract_strided_slice %449 {offsets = [0, 384], sizes = [8, 128], strides = [1, 1]} : vector<8x512xf32> to vector<8x128xf32>
    %465 = arith.negf %464 : vector<8x128xf32>
    %466 = math.exp %465 : vector<8x128xf32>
    %cst_156 = arith.constant 1.000000e+00 : f32
    %467 = vector.broadcast %cst_156 : f32 to vector<8x128xf32>
    %468 = arith.addf %467, %466 : vector<8x128xf32>
    %469 = arith.divf %467, %468 : vector<8x128xf32>
    %470 = arith.mulf %461, %437 : vector<8x128xf32>
    %471 = arith.mulf %455, %463 : vector<8x128xf32>
    %472 = arith.addf %470, %471 : vector<8x128xf32>
    %473 = math.tanh %472 : vector<8x128xf32>
    %474 = arith.mulf %469, %473 : vector<8x128xf32>
    %475 = arith.index_cast %443 : i32 to index
    %c0_157 = arith.constant 0 : index
    %476 = vector.load %arg5[%475, %c0_157] : memref<64x128xf32, #tpu.memory_space<vmem>>, vector<8x128xf32>
    tpu.vector_store %arg5[%475, %c0_157], %474 {strides = array<i32>} : memref<64x128xf32, #tpu.memory_space<vmem>>, vector<8x128xf32>,
    %c5_i32_158 = arith.constant 5 : i32
    %c8_i32_159 = arith.constant 8 : i32
    %477 = arith.muli %c5_i32_158, %c8_i32_159 : i32
    %478 = tpu.assume_multiple %477, 8 : i32
    %479 = arith.index_cast %478 : i32 to index
    %c0_160 = arith.constant 0 : index
    %480 = vector.load %arg7[%479, %c0_160] : memref<64x512xf32, #tpu.memory_space<vmem>>, vector<8x512xf32>
    %c1_161 = arith.constant 1 : index
    %c0_162 = arith.constant 0 : index
    %c0_163 = arith.constant 0 : index
    %481 = vector.load %arg3[%c1_161, %c0_162, %c0_163] : memref<2x128x512xf32, #tpu.memory_space<vmem>>, vector<1x128x512xf32>
    %482 = vector.shape_cast %481 : vector<1x128x512xf32> to vector<128x512xf32>
    %cst_164 = arith.constant dense<0.000000e+00> : vector<8x512xf32>
    %483 = tpu.matmul %474, %482, %cst_164 {dimension_numbers = #tpu.dot_dimension_numbers<[1], [0], [0], [1], [0, 0, 1, 1], [], []>} : vector<8x128xf32>, vector<128x512xf32>, vector<8x512xf32> -> vector<8x512xf32>
    %484 = arith.addf %480, %483 : vector<8x512xf32>
    %485 = vector.extract_strided_slice %484 {offsets = [0, 0], sizes = [8, 128], strides = [1, 1]} : vector<8x512xf32> to vector<8x128xf32>
    %486 = arith.negf %485 : vector<8x128xf32>
    %487 = math.exp %486 : vector<8x128xf32>
    %cst_165 = arith.constant 1.000000e+00 : f32
    %488 = vector.broadcast %cst_165 : f32 to vector<8x128xf32>
    %489 = arith.addf %488, %487 : vector<8x128xf32>
    %490 = arith.divf %488, %489 : vector<8x128xf32>
    %491 = vector.extract_strided_slice %484 {offsets = [0, 128], sizes = [8, 128], strides = [1, 1]} : vector<8x512xf32> to vector<8x128xf32>
    %492 = arith.negf %491 : vector<8x128xf32>
    %493 = math.exp %492 : vector<8x128xf32>
    %cst_166 = arith.constant 1.000000e+00 : f32
    %494 = vector.broadcast %cst_166 : f32 to vector<8x128xf32>
    %495 = arith.addf %494, %493 : vector<8x128xf32>
    %496 = arith.divf %494, %495 : vector<8x128xf32>
    %497 = vector.extract_strided_slice %484 {offsets = [0, 256], sizes = [8, 128], strides = [1, 1]} : vector<8x512xf32> to vector<8x128xf32>
    %498 = math.tanh %497 : vector<8x128xf32>
    %499 = vector.extract_strided_slice %484 {offsets = [0, 384], sizes = [8, 128], strides = [1, 1]} : vector<8x512xf32> to vector<8x128xf32>
    %500 = arith.negf %499 : vector<8x128xf32>
    %501 = math.exp %500 : vector<8x128xf32>
    %cst_167 = arith.constant 1.000000e+00 : f32
    %502 = vector.broadcast %cst_167 : f32 to vector<8x128xf32>
    %503 = arith.addf %502, %501 : vector<8x128xf32>
    %504 = arith.divf %502, %503 : vector<8x128xf32>
    %505 = arith.mulf %496, %472 : vector<8x128xf32>
    %506 = arith.mulf %490, %498 : vector<8x128xf32>
    %507 = arith.addf %505, %506 : vector<8x128xf32>
    %508 = math.tanh %507 : vector<8x128xf32>
    %509 = arith.mulf %504, %508 : vector<8x128xf32>
    %510 = arith.index_cast %478 : i32 to index
    %c0_168 = arith.constant 0 : index
    %511 = vector.load %arg5[%510, %c0_168] : memref<64x128xf32, #tpu.memory_space<vmem>>, vector<8x128xf32>
    tpu.vector_store %arg5[%510, %c0_168], %509 {strides = array<i32>} : memref<64x128xf32, #tpu.memory_space<vmem>>, vector<8x128xf32>,
    %c6_i32_169 = arith.constant 6 : i32
    %c8_i32_170 = arith.constant 8 : i32
    %512 = arith.muli %c6_i32_169, %c8_i32_170 : i32
    %513 = tpu.assume_multiple %512, 8 : i32
    %514 = arith.index_cast %513 : i32 to index
    %c0_171 = arith.constant 0 : index
    %515 = vector.load %arg7[%514, %c0_171] : memref<64x512xf32, #tpu.memory_space<vmem>>, vector<8x512xf32>
    %c1_172 = arith.constant 1 : index
    %c0_173 = arith.constant 0 : index
    %c0_174 = arith.constant 0 : index
    %516 = vector.load %arg3[%c1_172, %c0_173, %c0_174] : memref<2x128x512xf32, #tpu.memory_space<vmem>>, vector<1x128x512xf32>
    %517 = vector.shape_cast %516 : vector<1x128x512xf32> to vector<128x512xf32>
    %cst_175 = arith.constant dense<0.000000e+00> : vector<8x512xf32>
    %518 = tpu.matmul %509, %517, %cst_175 {dimension_numbers = #tpu.dot_dimension_numbers<[1], [0], [0], [1], [0, 0, 1, 1], [], []>} : vector<8x128xf32>, vector<128x512xf32>, vector<8x512xf32> -> vector<8x512xf32>
    %519 = arith.addf %515, %518 : vector<8x512xf32>
    %520 = vector.extract_strided_slice %519 {offsets = [0, 0], sizes = [8, 128], strides = [1, 1]} : vector<8x512xf32> to vector<8x128xf32>
    %521 = arith.negf %520 : vector<8x128xf32>
    %522 = math.exp %521 : vector<8x128xf32>
    %cst_176 = arith.constant 1.000000e+00 : f32
    %523 = vector.broadcast %cst_176 : f32 to vector<8x128xf32>
    %524 = arith.addf %523, %522 : vector<8x128xf32>
    %525 = arith.divf %523, %524 : vector<8x128xf32>
    %526 = vector.extract_strided_slice %519 {offsets = [0, 128], sizes = [8, 128], strides = [1, 1]} : vector<8x512xf32> to vector<8x128xf32>
    %527 = arith.negf %526 : vector<8x128xf32>
    %528 = math.exp %527 : vector<8x128xf32>
    %cst_177 = arith.constant 1.000000e+00 : f32
    %529 = vector.broadcast %cst_177 : f32 to vector<8x128xf32>
    %530 = arith.addf %529, %528 : vector<8x128xf32>
    %531 = arith.divf %529, %530 : vector<8x128xf32>
    %532 = vector.extract_strided_slice %519 {offsets = [0, 256], sizes = [8, 128], strides = [1, 1]} : vector<8x512xf32> to vector<8x128xf32>
    %533 = math.tanh %532 : vector<8x128xf32>
    %534 = vector.extract_strided_slice %519 {offsets = [0, 384], sizes = [8, 128], strides = [1, 1]} : vector<8x512xf32> to vector<8x128xf32>
    %535 = arith.negf %534 : vector<8x128xf32>
    %536 = math.exp %535 : vector<8x128xf32>
    %cst_178 = arith.constant 1.000000e+00 : f32
    %537 = vector.broadcast %cst_178 : f32 to vector<8x128xf32>
    %538 = arith.addf %537, %536 : vector<8x128xf32>
    %539 = arith.divf %537, %538 : vector<8x128xf32>
    %540 = arith.mulf %531, %507 : vector<8x128xf32>
    %541 = arith.mulf %525, %533 : vector<8x128xf32>
    %542 = arith.addf %540, %541 : vector<8x128xf32>
    %543 = math.tanh %542 : vector<8x128xf32>
    %544 = arith.mulf %539, %543 : vector<8x128xf32>
    %545 = arith.index_cast %513 : i32 to index
    %c0_179 = arith.constant 0 : index
    %546 = vector.load %arg5[%545, %c0_179] : memref<64x128xf32, #tpu.memory_space<vmem>>, vector<8x128xf32>
    tpu.vector_store %arg5[%545, %c0_179], %544 {strides = array<i32>} : memref<64x128xf32, #tpu.memory_space<vmem>>, vector<8x128xf32>,
    %c7_i32_180 = arith.constant 7 : i32
    %c8_i32_181 = arith.constant 8 : i32
    %547 = arith.muli %c7_i32_180, %c8_i32_181 : i32
    %548 = tpu.assume_multiple %547, 8 : i32
    %549 = arith.index_cast %548 : i32 to index
    %c0_182 = arith.constant 0 : index
    %550 = vector.load %arg7[%549, %c0_182] : memref<64x512xf32, #tpu.memory_space<vmem>>, vector<8x512xf32>
    %c1_183 = arith.constant 1 : index
    %c0_184 = arith.constant 0 : index
    %c0_185 = arith.constant 0 : index
    %551 = vector.load %arg3[%c1_183, %c0_184, %c0_185] : memref<2x128x512xf32, #tpu.memory_space<vmem>>, vector<1x128x512xf32>
    %552 = vector.shape_cast %551 : vector<1x128x512xf32> to vector<128x512xf32>
    %cst_186 = arith.constant dense<0.000000e+00> : vector<8x512xf32>
    %553 = tpu.matmul %544, %552, %cst_186 {dimension_numbers = #tpu.dot_dimension_numbers<[1], [0], [0], [1], [0, 0, 1, 1], [], []>} : vector<8x128xf32>, vector<128x512xf32>, vector<8x512xf32> -> vector<8x512xf32>
    %554 = arith.addf %550, %553 : vector<8x512xf32>
    %555 = vector.extract_strided_slice %554 {offsets = [0, 0], sizes = [8, 128], strides = [1, 1]} : vector<8x512xf32> to vector<8x128xf32>
    %556 = arith.negf %555 : vector<8x128xf32>
    %557 = math.exp %556 : vector<8x128xf32>
    %cst_187 = arith.constant 1.000000e+00 : f32
    %558 = vector.broadcast %cst_187 : f32 to vector<8x128xf32>
    %559 = arith.addf %558, %557 : vector<8x128xf32>
    %560 = arith.divf %558, %559 : vector<8x128xf32>
    %561 = vector.extract_strided_slice %554 {offsets = [0, 128], sizes = [8, 128], strides = [1, 1]} : vector<8x512xf32> to vector<8x128xf32>
    %562 = arith.negf %561 : vector<8x128xf32>
    %563 = math.exp %562 : vector<8x128xf32>
    %cst_188 = arith.constant 1.000000e+00 : f32
    %564 = vector.broadcast %cst_188 : f32 to vector<8x128xf32>
    %565 = arith.addf %564, %563 : vector<8x128xf32>
    %566 = arith.divf %564, %565 : vector<8x128xf32>
    %567 = vector.extract_strided_slice %554 {offsets = [0, 256], sizes = [8, 128], strides = [1, 1]} : vector<8x512xf32> to vector<8x128xf32>
    %568 = math.tanh %567 : vector<8x128xf32>
    %569 = vector.extract_strided_slice %554 {offsets = [0, 384], sizes = [8, 128], strides = [1, 1]} : vector<8x512xf32> to vector<8x128xf32>
    %570 = arith.negf %569 : vector<8x128xf32>
    %571 = math.exp %570 : vector<8x128xf32>
    %cst_189 = arith.constant 1.000000e+00 : f32
    %572 = vector.broadcast %cst_189 : f32 to vector<8x128xf32>
    %573 = arith.addf %572, %571 : vector<8x128xf32>
    %574 = arith.divf %572, %573 : vector<8x128xf32>
    %575 = arith.mulf %566, %542 : vector<8x128xf32>
    %576 = arith.mulf %560, %568 : vector<8x128xf32>
    %577 = arith.addf %575, %576 : vector<8x128xf32>
    %578 = math.tanh %577 : vector<8x128xf32>
    %579 = arith.mulf %574, %578 : vector<8x128xf32>
    %580 = arith.index_cast %548 : i32 to index
    %c0_190 = arith.constant 0 : index
    %581 = vector.load %arg5[%580, %c0_190] : memref<64x128xf32, #tpu.memory_space<vmem>>, vector<8x128xf32>
    tpu.vector_store %arg5[%580, %c0_190], %579 {strides = array<i32>} : memref<64x128xf32, #tpu.memory_space<vmem>>, vector<8x128xf32>,
    %c8_i32_191 = arith.constant 8 : i32
    return
  }
  func.func @transform_0(%arg0: i32) -> (i32, i32) {
    %c0_i32 = arith.constant 0 : i32
    %c0_i32_0 = arith.constant 0 : i32
    %c0_i32_1 = arith.constant 0 : i32
    return %c0_i32, %c0_i32_0 : i32, i32
  }
  func.func @transform_1(%arg0: i32) -> (i32, i32, i32) {
    %c0_i32 = arith.constant 0 : i32
    %c0_i32_0 = arith.constant 0 : i32
    %c0_i32_1 = arith.constant 0 : i32
    %c0_i32_2 = arith.constant 0 : i32
    return %c0_i32, %c0_i32_0, %c0_i32_1 : i32, i32, i32
  }
  func.func @transform_2(%arg0: i32) -> (i32, i32, i32) {
    %c0_i32 = arith.constant 0 : i32
    %c0_i32_0 = arith.constant 0 : i32
    %c0_i32_1 = arith.constant 0 : i32
    %c0_i32_2 = arith.constant 0 : i32
    return %c0_i32, %c0_i32_0, %c0_i32_1 : i32, i32, i32
  }
  func.func @transform_3(%arg0: i32) -> (i32, i32, i32) {
    %c0_i32 = arith.constant 0 : i32
    %c0_i32_0 = arith.constant 0 : i32
    %c0_i32_1 = arith.constant 0 : i32
    %c0_i32_2 = arith.constant 0 : i32
    return %c0_i32, %c0_i32_0, %c0_i32_1 : i32, i32, i32
  }
  func.func @transform_4(%arg0: i32) -> (i32, i32) {
    %c0_i32 = arith.constant 0 : i32
    %c0_i32_0 = arith.constant 0 : i32
    %c0_i32_1 = arith.constant 0 : i32
    return %c0_i32, %c0_i32_0 : i32, i32
  }
}

</mosaic_0001>

<llo_original>
// kernel: _encoder_forward_impl.1
$region0: #{_encoder_forward_impl.1}
  #allocation0 [shape = 'u32[]', space=smem, size = 0x4, offset = 0x4, fixed_abs, tag = 'smem constant byte address 0x4 - core index']
  #allocation1 [shape = 'u32[144,128]{1,0:T(1,128)}', space=vmem, size = 0x12000, scoped, tag = 'internal scratch']
  #allocation2 [shape = 'f32[64,128]{1,0:T(8,128)}', space=vmem, size = 0x8000, scoped, tag = 'scratch operand']
  #allocation3 [shape = 'f32[64,512]{1,0:T(8,128)}', space=vmem, size = 0x20000, scoped, tag = 'scratch operand']
  %s0 = inlined_call_operand.vmem [shape: f32[64,128], index: 0, kind: input, shape index: {}]
  %s1 = inlined_call_operand.hbm [shape: f32[2,128,512], index: 1, kind: input, shape index: {}]
  %s2 = inlined_call_operand.hbm [shape: f32[2,128,512], index: 2, kind: input, shape index: {}]
  %s3 = inlined_call_operand.vmem [shape: f32[2,1,512], index: 3, kind: input, shape index: {}]
  %s4 = inlined_call_operand.vmem [shape: f32[64,128], index: 4, kind: output, shape index: {}]
  %s5 = sld [smem:[#allocation0]]
  $region34: #{_encoder_forward_impl.1} parent=0
    _
  %s7 = ssub.s32 1, %s5
  %s8 = scalar_select 0, %s7, %s5
  $region1: #{_encoder_forward_impl.1} parent=0
    #allocation4 [shape = 'u8[524288]{0}', space=vmem, size = 0x80000, scoped, tag = 'input window, operand 1, single buffered']
    #allocation5 [shape = 's32[1]{0}', space=sflag, size = 0x4, scoped, tag = 'scoped memory for _encoder_forward_impl.1']
    #allocation6 [shape = 'u8[524288]{0}', space=vmem, size = 0x80000, scoped, tag = 'input window, operand 2, single buffered']
    #allocation7 [shape = 's32[1]{0}', space=sflag, size = 0x4, scoped, tag = 'scoped memory for _encoder_forward_impl.1']
    %9 = vsyncpa [#allocation5], 0
    %10 = vsyncpa [#allocation7], 0
    // Predicated region
    $region2: #{_encoder_forward_impl.1} parent=1 // pred_check
      _
    $region3: #{_encoder_forward_impl.1} parent=1 // pred_check_branch
      %12 = sbr.rel (0) target = $region5
    $region4: #{_encoder_forward_impl.1} parent=1 // pred_region
      _
    $region5: #{_encoder_forward_impl.1} parent=1 // pred_fallthru
      _
    // Predicated region
    $region6: #{_encoder_forward_impl.1} parent=1 // pred_check
      _
    $region7: #{_encoder_forward_impl.1} parent=1 // pred_check_branch
      %14 = sbr.rel (0) target = $region9
    $region8: #{_encoder_forward_impl.1} parent=1 // pred_region
      %s16 = ssub.s32 16384, 16384
      %17 = vsyncadd [#allocation5], %s16
      %s18 = sshll.u32 [#allocation4], 4
      %s19 = int_to_ptr.vmem [resolvable:$true] %s18
      %24 = dma.hbm_to_vmem [thread:$0]  %s1, 16384, %s19, [#allocation5], 512, 512, 32
    $region9: #{_encoder_forward_impl.1} parent=1 // pred_fallthru
      _
    // Predicated region
    $region10: #{_encoder_forward_impl.1} parent=1 // pred_check
      _
    $region11: #{_encoder_forward_impl.1} parent=1 // pred_check_branch
      %26 = sbr.rel (0) target = $region13
    $region12: #{_encoder_forward_impl.1} parent=1 // pred_region
      %s28 = ssub.s32 16384, 16384
      %29 = vsyncadd [#allocation7], %s28
      %s30 = sshll.u32 [#allocation6], 4
      %s31 = int_to_ptr.vmem [resolvable:$true] %s30
      %36 = dma.hbm_to_vmem [thread:$0]  %s2, 16384, %s31, [#allocation7], 512, 512, 32
    $region13: #{_encoder_forward_impl.1} parent=1 // pred_fallthru
      _
    // Predicated region
    $region14: #{_encoder_forward_impl.1} parent=1 // pred_check
      _
    $region15: #{_encoder_forward_impl.1} parent=1 // pred_check_branch
      %38 = sbr.rel (0) target = $region17
    $region16: #{_encoder_forward_impl.1} parent=1 // pred_region
      _
    $region17: #{_encoder_forward_impl.1} parent=1 // pred_fallthru
      _
    // Predicated region
    $region18: #{_encoder_forward_impl.1} parent=1 // pred_check
      _
    $region19: #{_encoder_forward_impl.1} parent=1 // pred_check_branch
      %40 = sbr.rel (0) target = $region21
    $region20: #{_encoder_forward_impl.1} parent=1 // pred_region
      %41 = dma.done [#allocation5], 16384
    $region21: #{_encoder_forward_impl.1} parent=1 // pred_fallthru
      _
    // Predicated region
    $region22: #{_encoder_forward_impl.1} parent=1 // pred_check
      _
    $region23: #{_encoder_forward_impl.1} parent=1 // pred_check_branch
      %43 = sbr.rel (0) target = $region25
    $region24: #{_encoder_forward_impl.1} parent=1 // pred_region
      %44 = dma.done [#allocation7], 16384
    $region25: #{_encoder_forward_impl.1} parent=1 // pred_fallthru
      _
    %v45 = vld [vmem:[%s0] sm:$0xff]
    %v46 = vld [vmem:[%s0 + $0x8] sm:$0xff]
    %v47 = vld [vmem:[%s0 + $0x10] sm:$0xff]
    %v48 = vld [vmem:[%s0 + $0x18] sm:$0xff]
    %v49 = vld [vmem:[%s0 + $0x20] sm:$0xff]
    %v50 = vld [vmem:[%s0 + $0x28] sm:$0xff]
    %v51 = vld [vmem:[%s0 + $0x30] sm:$0xff]
    %v52 = vld [vmem:[%s0 + $0x38] sm:$0xff]
    %v53 = vld [vmem:[#allocation4] sm:$0xff]
    %v54 = vld [vmem:[#allocation4 + $0x8] sm:$0xff]
    %v55 = vld [vmem:[#allocation4 + $0x10] sm:$0xff]
    %v56 = vld [vmem:[#allocation4 + $0x18] sm:$0xff]
    %v57 = vld [vmem:[#allocation4 + $0x20] sm:$0xff]
    %v58 = vld [vmem:[#allocation4 + $0x28] sm:$0xff]
    %v59 = vld [vmem:[#allocation4 + $0x30] sm:$0xff]
    %v60 = vld [vmem:[#allocation4 + $0x38] sm:$0xff]
    %v61 = vld [vmem:[#allocation4 + $0x40] sm:$0xff]
    %v62 = vld [vmem:[#allocation4 + $0x48] sm:$0xff]
    %v63 = vld [vmem:[#allocation4 + $0x50] sm:$0xff]
    %v64 = vld [vmem:[#allocation4 + $0x58] sm:$0xff]
    %v65 = vld [vmem:[#allocation4 + $0x60] sm:$0xff]
    %v66 = vld [vmem:[#allocation4 + $0x68] sm:$0xff]
    %v67 = vld [vmem:[#allocation4 + $0x70] sm:$0xff]
    %v68 = vld [vmem:[#allocation4 + $0x78] sm:$0xff]
    %v69 = vld [vmem:[#allocation4 + $0x80] sm:$0xff]
    %v70 = vld [vmem:[#allocation4 + $0x88] sm:$0xff]
    %v71 = vld [vmem:[#allocation4 + $0x90] sm:$0xff]
    %v72 = vld [vmem:[#allocation4 + $0x98] sm:$0xff]
    %v73 = vld [vmem:[#allocation4 + $0xa0] sm:$0xff]
    %v74 = vld [vmem:[#allocation4 + $0xa8] sm:$0xff]
    %v75 = vld [vmem:[#allocation4 + $0xb0] sm:$0xff]
    %v76 = vld [vmem:[#allocation4 + $0xb8] sm:$0xff]
    %v77 = vld [vmem:[#allocation4 + $0xc0] sm:$0xff]
    %v78 = vld [vmem:[#allocation4 + $0xc8] sm:$0xff]
    %v79 = vld [vmem:[#allocation4 + $0xd0] sm:$0xff]
    %v80 = vld [vmem:[#allocation4 + $0xd8] sm:$0xff]
    %v81 = vld [vmem:[#allocation4 + $0xe0] sm:$0xff]
    %v82 = vld [vmem:[#allocation4 + $0xe8] sm:$0xff]
    %v83 = vld [vmem:[#allocation4 + $0xf0] sm:$0xff]
    %v84 = vld [vmem:[#allocation4 + $0xf8] sm:$0xff]
    %v85 = vld [vmem:[#allocation4 + $0x100] sm:$0xff]
    %v86 = vld [vmem:[#allocation4 + $0x108] sm:$0xff]
    %v87 = vld [vmem:[#allocation4 + $0x110] sm:$0xff]
    %v88 = vld [vmem:[#allocation4 + $0x118] sm:$0xff]
    %v89 = vld [vmem:[#allocation4 + $0x120] sm:$0xff]
    %v90 = vld [vmem:[#allocation4 + $0x128] sm:$0xff]
    %v91 = vld [vmem:[#allocation4 + $0x130] sm:$0xff]
    %v92 = vld [vmem:[#allocation4 + $0x138] sm:$0xff]
    %v93 = vld [vmem:[#allocation4 + $0x140] sm:$0xff]
    %v94 = vld [vmem:[#allocation4 + $0x148] sm:$0xff]
    %v95 = vld [vmem:[#allocation4 + $0x150] sm:$0xff]
    %v96 = vld [vmem:[#allocation4 + $0x158] sm:$0xff]
    %v97 = vld [vmem:[#allocation4 + $0x160] sm:$0xff]
    %v98 = vld [vmem:[#allocation4 + $0x168] sm:$0xff]
    %v99 = vld [vmem:[#allocation4 + $0x170] sm:$0xff]
    %v100 = vld [vmem:[#allocation4 + $0x178] sm:$0xff]
    %v101 = vld [vmem:[#allocation4 + $0x180] sm:$0xff]
    %v102 = vld [vmem:[#allocation4 + $0x188] sm:$0xff]
    %v103 = vld [vmem:[#allocation4 + $0x190] sm:$0xff]
    %v104 = vld [vmem:[#allocation4 + $0x198] sm:$0xff]
    %v105 = vld [vmem:[#allocation4 + $0x1a0] sm:$0xff]
    %v106 = vld [vmem:[#allocation4 + $0x1a8] sm:$0xff]
    %v107 = vld [vmem:[#allocation4 + $0x1b0] sm:$0xff]
    %v108 = vld [vmem:[#allocation4 + $0x1b8] sm:$0xff]
    %v109 = vld [vmem:[#allocation4 + $0x1c0] sm:$0xff]
    %v110 = vld [vmem:[#allocation4 + $0x1c8] sm:$0xff]
    %v111 = vld [vmem:[#allocation4 + $0x1d0] sm:$0xff]
    %v112 = vld [vmem:[#allocation4 + $0x1d8] sm:$0xff]
    %v113 = vld [vmem:[#allocation4 + $0x1e0] sm:$0xff]
    %v114 = vld [vmem:[#allocation4 + $0x1e8] sm:$0xff]
    %v115 = vld [vmem:[#allocation4 + $0x1f0] sm:$0xff]
    %v116 = vld [vmem:[#allocation4 + $0x1f8] sm:$0xff]
    %v117 = vld [vmem:[%s3] sm:$0xf]
    %v119 = vlaneseq
    %v120 = vshrl.u32 %v119, 7
    %v121 = vsub.s32 0, %v120
    %v122 = vrot.slane %v117, %v121
    %v123 = vlaneseq
    %v124 = vshrl.u32 %v123, 7
    %v125 = vsub.s32 1, %v124
    %v126 = vrot.slane %v117, %v125
    %v127 = vlaneseq
    %v128 = vshrl.u32 %v127, 7
    %v129 = vsub.s32 2, %v128
    %v130 = vrot.slane %v117, %v129
    %v131 = vlaneseq
    %v132 = vshrl.u32 %v131, 7
    %v133 = vsub.s32 3, %v132
    %v134 = vrot.slane %v117, %v133
    %139 = vmatprep.subr.mxu0 %v54
    %140 = vmatpush1.msra.mxu0 %v53
    %141 = vmatprep.subr.mxu0 %v58
    %142 = vmatpush1.msra.mxu0 %v57
    %143 = vmatprep.subr.mxu0 %v62
    %144 = vmatpush1.msra.mxu0 %v61
    %145 = vmatprep.subr.mxu0 %v66
    %146 = vmatpush1.msra.mxu0 %v65
    %147 = vmatprep.subr.mxu0 %v70
    %148 = vmatpush1.msra.mxu0 %v69
    %149 = vmatprep.subr.mxu0 %v74
    %150 = vmatpush1.msra.mxu0 %v73
    %151 = vmatprep.subr.mxu0 %v78
    %152 = vmatpush1.msra.mxu0 %v77
    %153 = vmatprep.subr.mxu0 %v82
    %154 = vmatpush1.msra.mxu0 %v81
    %155 = vmatprep.subr.mxu0 %v86
    %156 = vmatpush1.msra.mxu0 %v85
    %157 = vmatprep.subr.mxu0 %v90
    %158 = vmatpush1.msra.mxu0 %v89
    %159 = vmatprep.subr.mxu0 %v94
    %160 = vmatpush1.msra.mxu0 %v93
    %161 = vmatprep.subr.mxu0 %v98
    %162 = vmatpush1.msra.mxu0 %v97
    %163 = vmatprep.subr.mxu0 %v102
    %164 = vmatpush1.msra.mxu0 %v101
    %165 = vmatprep.subr.mxu0 %v106
    %166 = vmatpush1.msra.mxu0 %v105
    %167 = vmatprep.subr.mxu0 %v110
    %168 = vmatpush1.msra.mxu0 %v109
    %169 = vmatprep.subr.mxu0 %v114
    %170 = vmatpush1.msra.mxu0 %v113
    %171 = vmatprep.subr.mxu0 0.0
    %172 = vmatpush1.msra.mxu0 0.0
    %173 = vmatprep.subr.mxu0 0.0
    %174 = vmatpush1.msra.mxu0 0.0
    %175 = vmatprep.subr.mxu0 0.0
    %176 = vmatpush1.msra.mxu0 0.0
    %177 = vmatprep.subr.mxu0 0.0
    %178 = vmatpush1.msra.mxu0 0.0
    %179 = vmatprep.subr.mxu0 0.0
    %180 = vmatpush1.msra.mxu0 0.0
    %181 = vmatprep.subr.mxu0 0.0
    %182 = vmatpush1.msra.mxu0 0.0
    %183 = vmatprep.subr.mxu0 0.0
    %184 = vmatpush1.msra.mxu0 0.0
    %185 = vmatprep.subr.mxu0 0.0
    %186 = vmatpush1.msra.mxu0 0.0
    %187 = vmatprep.subr.mxu0 0.0
    %188 = vmatpush1.msra.mxu0 0.0
    %189 = vmatprep.subr.mxu0 0.0
    %190 = vmatpush1.msra.mxu0 0.0
    %191 = vmatprep.subr.mxu0 0.0
    %192 = vmatpush1.msra.mxu0 0.0
    %193 = vmatprep.subr.mxu0 0.0
    %194 = vmatpush1.msra.mxu0 0.0
    %195 = vmatprep.subr.mxu0 0.0
    %196 = vmatpush1.msra.mxu0 0.0
    %197 = vmatprep.subr.mxu0 0.0
    %198 = vmatpush1.msra.mxu0 0.0
    %199 = vmatprep.subr.mxu0 0.0
    %200 = vmatpush1.msra.mxu0 0.0
    %201 = vmatprep.subr.mxu0 0.0
    %202 = vmatpush1.msra.mxu0 0.0
    %203 = vmatprep.mubr.f32.mxu0 0.0
    %204 = vmatmul.mubr.f32.gmra.mrb[0].mxu0 %v45
    %v205 = vpop.f32.mrb[0].mxu0
    %v206 = vadd.f32 %v122, %v205
    %v207 = vpop.f32.mrb[0].mxu0
    %v208 = vadd.f32 %v126, %v207
    %209 = vmatprep.mubr.f32.mxu0 0.0
    %210 = vmatmul.mubr.f32.gmra.mrb[0].mxu0 %v46
    %v211 = vpop.f32.mrb[0].mxu0
    %v212 = vadd.f32 %v122, %v211
    %v213 = vpop.f32.mrb[0].mxu0
    %v214 = vadd.f32 %v126, %v213
    %215 = vmatprep.mubr.f32.mxu0 0.0
    %216 = vmatmul.mubr.f32.gmra.mrb[0].mxu0 %v47
    %v217 = vpop.f32.mrb[0].mxu0
    %v218 = vadd.f32 %v122, %v217
    %v219 = vpop.f32.mrb[0].mxu0
    %v220 = vadd.f32 %v126, %v219
    %221 = vmatprep.mubr.f32.mxu0 0.0
    %222 = vmatmul.mubr.f32.gmra.mrb[0].mxu0 %v48
    %v223 = vpop.f32.mrb[0].mxu0
    %v224 = vadd.f32 %v122, %v223
    %v225 = vpop.f32.mrb[0].mxu0
    %v226 = vadd.f32 %v126, %v225
    %227 = vmatprep.mubr.f32.mxu0 0.0
    %228 = vmatmul.mubr.f32.gmra.mrb[0].mxu0 %v49
    %v229 = vpop.f32.mrb[0].mxu0
    %v230 = vadd.f32 %v122, %v229
    %v231 = vpop.f32.mrb[0].mxu0
    %v232 = vadd.f32 %v126, %v231
    %233 = vmatprep.mubr.f32.mxu0 0.0
    %234 = vmatmul.mubr.f32.gmra.mrb[0].mxu0 %v50
    %v235 = vpop.f32.mrb[0].mxu0
    %v236 = vadd.f32 %v122, %v235
    %v237 = vpop.f32.mrb[0].mxu0
    %v238 = vadd.f32 %v126, %v237
    %239 = vmatprep.mubr.f32.mxu0 0.0
    %240 = vmatmul.mubr.f32.gmra.mrb[0].mxu0 %v51
    %v241 = vpop.f32.mrb[0].mxu0
    %v242 = vadd.f32 %v122, %v241
    %v243 = vpop.f32.mrb[0].mxu0
    %v244 = vadd.f32 %v126, %v243
    %245 = vmatprep.mubr.f32.mxu0 0.0
    %246 = vmatmul.mubr.f32.gmra.mrb[0].mxu0 %v52
    %v247 = vpop.f32.mrb[0].mxu0
    %v248 = vadd.f32 %v122, %v247
    %v249 = vpop.f32.mrb[0].mxu0
    %v250 = vadd.f32 %v126, %v249
    %251 = vdwg.mxu0
    %252 = vmatprep.subr.mxu0 %v56
    %253 = vmatpush1.msra.mxu0 %v55
    %254 = vmatprep.subr.mxu0 %v60
    %255 = vmatpush1.msra.mxu0 %v59
    %256 = vmatprep.subr.mxu0 %v64
    %257 = vmatpush1.msra.mxu0 %v63
    %258 = vmatprep.subr.mxu0 %v68
    %259 = vmatpush1.msra.mxu0 %v67
    %260 = vmatprep.subr.mxu0 %v72
    %261 = vmatpush1.msra.mxu0 %v71
    %262 = vmatprep.subr.mxu0 %v76
    %263 = vmatpush1.msra.mxu0 %v75
    %264 = vmatprep.subr.mxu0 %v80
    %265 = vmatpush1.msra.mxu0 %v79
    %266 = vmatprep.subr.mxu0 %v84
    %267 = vmatpush1.msra.mxu0 %v83
    %268 = vmatprep.subr.mxu0 %v88
    %269 = vmatpush1.msra.mxu0 %v87
    %270 = vmatprep.subr.mxu0 %v92
    %271 = vmatpush1.msra.mxu0 %v91
    %272 = vmatprep.subr.mxu0 %v96
    %273 = vmatpush1.msra.mxu0 %v95
    %274 = vmatprep.subr.mxu0 %v100
    %275 = vmatpush1.msra.mxu0 %v99
    %276 = vmatprep.subr.mxu0 %v104
    %277 = vmatpush1.msra.mxu0 %v103
    %278 = vmatprep.subr.mxu0 %v108
    %279 = vmatpush1.msra.mxu0 %v107
    %280 = vmatprep.subr.mxu0 %v112
    %281 = vmatpush1.msra.mxu0 %v111
    %282 = vmatprep.subr.mxu0 %v116
    %283 = vmatpush1.msra.mxu0 %v115
    %284 = vmatprep.subr.mxu0 0.0
    %285 = vmatpush1.msra.mxu0 0.0
    %286 = vmatprep.subr.mxu0 0.0
    %287 = vmatpush1.msra.mxu0 0.0
    %288 = vmatprep.subr.mxu0 0.0
    %289 = vmatpush1.msra.mxu0 0.0
    %290 = vmatprep.subr.mxu0 0.0
    %291 = vmatpush1.msra.mxu0 0.0
    %292 = vmatprep.subr.mxu0 0.0
    %293 = vmatpush1.msra.mxu0 0.0
    %294 = vmatprep.subr.mxu0 0.0
    %295 = vmatpush1.msra.mxu0 0.0
    %296 = vmatprep.subr.mxu0 0.0
    %297 = vmatpush1.msra.mxu0 0.0
    %298 = vmatprep.subr.mxu0 0.0
    %299 = vmatpush1.msra.mxu0 0.0
    %300 = vmatprep.subr.mxu0 0.0
    %301 = vmatpush1.msra.mxu0 0.0
    %302 = vmatprep.subr.mxu0 0.0
    %303 = vmatpush1.msra.mxu0 0.0
    %304 = vmatprep.subr.mxu0 0.0
    %305 = vmatpush1.msra.mxu0 0.0
    %306 = vmatprep.subr.mxu0 0.0
    %307 = vmatpush1.msra.mxu0 0.0
    %308 = vmatprep.subr.mxu0 0.0
    %309 = vmatpush1.msra.mxu0 0.0
    %310 = vmatprep.subr.mxu0 0.0
    %311 = vmatpush1.msra.mxu0 0.0
    %312 = vmatprep.subr.mxu0 0.0
    %313 = vmatpush1.msra.mxu0 0.0
    %314 = vmatprep.subr.mxu0 0.0
    %315 = vmatpush1.msra.mxu0 0.0
    %316 = vmatprep.mubr.f32.mxu0 0.0
    %317 = vmatmul.mubr.f32.gmra.mrb[0].mxu0 %v45
    %v318 = vpop.f32.mrb[0].mxu0
    %v319 = vadd.f32 %v130, %v318
    %v320 = vpop.f32.mrb[0].mxu0
    %v321 = vadd.f32 %v134, %v320
    %322 = vmatprep.mubr.f32.mxu0 0.0
    %323 = vmatmul.mubr.f32.gmra.mrb[0].mxu0 %v46
    %v324 = vpop.f32.mrb[0].mxu0
    %v325 = vadd.f32 %v130, %v324
    %v326 = vpop.f32.mrb[0].mxu0
    %v327 = vadd.f32 %v134, %v326
    %328 = vmatprep.mubr.f32.mxu0 0.0
    %329 = vmatmul.mubr.f32.gmra.mrb[0].mxu0 %v47
    %v330 = vpop.f32.mrb[0].mxu0
    %v331 = vadd.f32 %v130, %v330
    %v332 = vpop.f32.mrb[0].mxu0
    %v333 = vadd.f32 %v134, %v332
    %334 = vmatprep.mubr.f32.mxu0 0.0
    %335 = vmatmul.mubr.f32.gmra.mrb[0].mxu0 %v48
    %v336 = vpop.f32.mrb[0].mxu0
    %v337 = vadd.f32 %v130, %v336
    %v338 = vpop.f32.mrb[0].mxu0
    %v339 = vadd.f32 %v134, %v338
    %340 = vmatprep.mubr.f32.mxu0 0.0
    %341 = vmatmul.mubr.f32.gmra.mrb[0].mxu0 %v49
    %v342 = vpop.f32.mrb[0].mxu0
    %v343 = vadd.f32 %v130, %v342
    %v344 = vpop.f32.mrb[0].mxu0
    %v345 = vadd.f32 %v134, %v344
    %346 = vmatprep.mubr.f32.mxu0 0.0
    %347 = vmatmul.mubr.f32.gmra.mrb[0].mxu0 %v50
    %v348 = vpop.f32.mrb[0].mxu0
    %v349 = vadd.f32 %v130, %v348
    %v350 = vpop.f32.mrb[0].mxu0
    %v351 = vadd.f32 %v134, %v350
    %352 = vmatprep.mubr.f32.mxu0 0.0
    %353 = vmatmul.mubr.f32.gmra.mrb[0].mxu0 %v51
    %v354 = vpop.f32.mrb[0].mxu0
    %v355 = vadd.f32 %v130, %v354
    %v356 = vpop.f32.mrb[0].mxu0
    %v357 = vadd.f32 %v134, %v356
    %358 = vmatprep.mubr.f32.mxu0 0.0
    %359 = vmatmul.mubr.f32.gmra.mrb[0].mxu0 %v52
    %v360 = vpop.f32.mrb[0].mxu0
    %v361 = vadd.f32 %v130, %v360
    %v362 = vpop.f32.mrb[0].mxu0
    %v363 = vadd.f32 %v134, %v362
    %364 = vdwg.mxu0
    %365 = vst [vmem:[#allocation3] sm:$0xff] %v206
    %366 = vst [vmem:[#allocation3 + $0x8] sm:$0xff] %v208
    %367 = vst [vmem:[#allocation3 + $0x10] sm:$0xff] %v319
    %368 = vst [vmem:[#allocation3 + $0x18] sm:$0xff] %v321
    %369 = vst [vmem:[#allocation3 + $0x20] sm:$0xff] %v212
    %370 = vst [vmem:[#allocation3 + $0x28] sm:$0xff] %v214
    %371 = vst [vmem:[#allocation3 + $0x30] sm:$0xff] %v325
    %372 = vst [vmem:[#allocation3 + $0x38] sm:$0xff] %v327
    %373 = vst [vmem:[#allocation3 + $0x40] sm:$0xff] %v218
    %374 = vst [vmem:[#allocation3 + $0x48] sm:$0xff] %v220
    %375 = vst [vmem:[#allocation3 + $0x50] sm:$0xff] %v331
    %376 = vst [vmem:[#allocation3 + $0x58] sm:$0xff] %v333
    %377 = vst [vmem:[#allocation3 + $0x60] sm:$0xff] %v224
    %378 = vst [vmem:[#allocation3 + $0x68] sm:$0xff] %v226
    %379 = vst [vmem:[#allocation3 + $0x70] sm:$0xff] %v337
    %380 = vst [vmem:[#allocation3 + $0x78] sm:$0xff] %v339
    %381 = vst [vmem:[#allocation3 + $0x80] sm:$0xff] %v230
    %382 = vst [vmem:[#allocation3 + $0x88] sm:$0xff] %v232
    %383 = vst [vmem:[#allocation3 + $0x90] sm:$0xff] %v343
    %384 = vst [vmem:[#allocation3 + $0x98] sm:$0xff] %v345
    %385 = vst [vmem:[#allocation3 + $0xa0] sm:$0xff] %v236
    %386 = vst [vmem:[#allocation3 + $0xa8] sm:$0xff] %v238
    %387 = vst [vmem:[#allocation3 + $0xb0] sm:$0xff] %v349
    %388 = vst [vmem:[#allocation3 + $0xb8] sm:$0xff] %v351
    %389 = vst [vmem:[#allocation3 + $0xc0] sm:$0xff] %v242
    %390 = vst [vmem:[#allocation3 + $0xc8] sm:$0xff] %v244
    %391 = vst [vmem:[#allocation3 + $0xd0] sm:$0xff] %v355
    %392 = vst [vmem:[#allocation3 + $0xd8] sm:$0xff] %v357
    %393 = vst [vmem:[#allocation3 + $0xe0] sm:$0xff] %v248
    %394 = vst [vmem:[#allocation3 + $0xe8] sm:$0xff] %v250
    %395 = vst [vmem:[#allocation3 + $0xf0] sm:$0xff] %v361
    %396 = vst [vmem:[#allocation3 + $0xf8] sm:$0xff] %v363
    %s397 = smul.u32 0, 4
    %s398 = smul.addr %s397, 8
    %s399 = scalar_lea.vmem [#allocation3], %s398
    %v400 = vld [vmem:[%s399] sm:$0xff]
    %v401 = vld [vmem:[%s399 + $0x8] sm:$0xff]
    %v402 = vld [vmem:[%s399 + $0x10] sm:$0xff]
    %v403 = vld [vmem:[%s399 + $0x18] sm:$0xff]
    %v404 = vld [vmem:[#allocation6] sm:$0xff]
    %v405 = vld [vmem:[#allocation6 + $0x8] sm:$0xff]
    %v406 = vld [vmem:[#allocation6 + $0x10] sm:$0xff]
    %v407 = vld [vmem:[#allocation6 + $0x18] sm:$0xff]
    %v408 = vld [vmem:[#allocation6 + $0x20] sm:$0xff]
    %v409 = vld [vmem:[#allocation6 + $0x28] sm:$0xff]
    %v410 = vld [vmem:[#allocation6 + $0x30] sm:$0xff]
    %v411 = vld [vmem:[#allocation6 + $0x38] sm:$0xff]
    %v412 = vld [vmem:[#allocation6 + $0x40] sm:$0xff]
    %v413 = vld [vmem:[#allocation6 + $0x48] sm:$0xff]
    %v414 = vld [vmem:[#allocation6 + $0x50] sm:$0xff]
    %v415 = vld [vmem:[#allocation6 + $0x58] sm:$0xff]
    %v416 = vld [vmem:[#allocation6 + $0x60] sm:$0xff]
    %v417 = vld [vmem:[#allocation6 + $0x68] sm:$0xff]
    %v418 = vld [vmem:[#allocation6 + $0x70] sm:$0xff]
    %v419 = vld [vmem:[#allocation6 + $0x78] sm:$0xff]
    %v420 = vld [vmem:[#allocation6 + $0x80] sm:$0xff]
    %v421 = vld [vmem:[#allocation6 + $0x88] sm:$0xff]
    %v422 = vld [vmem:[#allocation6 + $0x90] sm:$0xff]
    %v423 = vld [vmem:[#allocation6 + $0x98] sm:$0xff]
    %v424 = vld [vmem:[#allocation6 + $0xa0] sm:$0xff]
    %v425 = vld [vmem:[#allocation6 + $0xa8] sm:$0xff]
    %v426 = vld [vmem:[#allocation6 + $0xb0] sm:$0xff]
    %v427 = vld [vmem:[#allocation6 + $0xb8] sm:$0xff]
    %v428 = vld [vmem:[#allocation6 + $0xc0] sm:$0xff]
    %v429 = vld [vmem:[#allocation6 + $0xc8] sm:$0xff]
    %v430 = vld [vmem:[#allocation6 + $0xd0] sm:$0xff]
    %v431 = vld [vmem:[#allocation6 + $0xd8] sm:$0xff]
    %v432 = vld [vmem:[#allocation6 + $0xe0] sm:$0xff]
    %v433 = vld [vmem:[#allocation6 + $0xe8] sm:$0xff]
    %v434 = vld [vmem:[#allocation6 + $0xf0] sm:$0xff]
    %v435 = vld [vmem:[#allocation6 + $0xf8] sm:$0xff]
    %v436 = vld [vmem:[#allocation6 + $0x100] sm:$0xff]
    %v437 = vld [vmem:[#allocation6 + $0x108] sm:$0xff]
    %v438 = vld [vmem:[#allocation6 + $0x110] sm:$0xff]
    %v439 = vld [vmem:[#allocation6 + $0x118] sm:$0xff]
    %v440 = vld [vmem:[#allocation6 + $0x120] sm:$0xff]
    %v441 = vld [vmem:[#allocation6 + $0x128] sm:$0xff]
    %v442 = vld [vmem:[#allocation6 + $0x130] sm:$0xff]
    %v443 = vld [vmem:[#allocation6 + $0x138] sm:$0xff]
    %v444 = vld [vmem:[#allocation6 + $0x140] sm:$0xff]
    %v445 = vld [vmem:[#allocation6 + $0x148] sm:$0xff]
    %v446 = vld [vmem:[#allocation6 + $0x150] sm:$0xff]
    %v447 = vld [vmem:[#allocation6 + $0x158] sm:$0xff]
    %v448 = vld [vmem:[#allocation6 + $0x160] sm:$0xff]
    %v449 = vld [vmem:[#allocation6 + $0x168] sm:$0xff]
    %v450 = vld [vmem:[#allocation6 + $0x170] sm:$0xff]
    %v451 = vld [vmem:[#allocation6 + $0x178] sm:$0xff]
    %v452 = vld [vmem:[#allocation6 + $0x180] sm:$0xff]
    %v453 = vld [vmem:[#allocation6 + $0x188] sm:$0xff]
    %v454 = vld [vmem:[#allocation6 + $0x190] sm:$0xff]
    %v455 = vld [vmem:[#allocation6 + $0x198] sm:$0xff]
    %v456 = vld [vmem:[#allocation6 + $0x1a0] sm:$0xff]
    %v457 = vld [vmem:[#allocation6 + $0x1a8] sm:$0xff]
    %v458 = vld [vmem:[#allocation6 + $0x1b0] sm:$0xff]
    %v459 = vld [vmem:[#allocation6 + $0x1b8] sm:$0xff]
    %v460 = vld [vmem:[#allocation6 + $0x1c0] sm:$0xff]
    %v461 = vld [vmem:[#allocation6 + $0x1c8] sm:$0xff]
    %v462 = vld [vmem:[#allocation6 + $0x1d0] sm:$0xff]
    %v463 = vld [vmem:[#allocation6 + $0x1d8] sm:$0xff]
    %v464 = vld [vmem:[#allocation6 + $0x1e0] sm:$0xff]
    %v465 = vld [vmem:[#allocation6 + $0x1e8] sm:$0xff]
    %v466 = vld [vmem:[#allocation6 + $0x1f0] sm:$0xff]
    %v467 = vld [vmem:[#allocation6 + $0x1f8] sm:$0xff]
    %468 = vmatprep.subr.mxu0 %v405
    %469 = vmatpush1.msra.mxu0 %v404
    %470 = vmatprep.subr.mxu0 %v409
    %471 = vmatpush1.msra.mxu0 %v408
    %472 = vmatprep.subr.mxu0 %v413
    %473 = vmatpush1.msra.mxu0 %v412
    %474 = vmatprep.subr.mxu0 %v417
    %475 = vmatpush1.msra.mxu0 %v416
    %476 = vmatprep.subr.mxu0 %v421
    %477 = vmatpush1.msra.mxu0 %v420
    %478 = vmatprep.subr.mxu0 %v425
    %479 = vmatpush1.msra.mxu0 %v424
    %480 = vmatprep.subr.mxu0 %v429
    %481 = vmatpush1.msra.mxu0 %v428
    %482 = vmatprep.subr.mxu0 %v433
    %483 = vmatpush1.msra.mxu0 %v432
    %484 = vmatprep.subr.mxu0 %v437
    %485 = vmatpush1.msra.mxu0 %v436
    %486 = vmatprep.subr.mxu0 %v441
    %487 = vmatpush1.msra.mxu0 %v440
    %488 = vmatprep.subr.mxu0 %v445
    %489 = vmatpush1.msra.mxu0 %v444
    %490 = vmatprep.subr.mxu0 %v449
    %491 = vmatpush1.msra.mxu0 %v448
    %492 = vmatprep.subr.mxu0 %v453
    %493 = vmatpush1.msra.mxu0 %v452
    %494 = vmatprep.subr.mxu0 %v457
    %495 = vmatpush1.msra.mxu0 %v456
    %496 = vmatprep.subr.mxu0 %v461
    %497 = vmatpush1.msra.mxu0 %v460
    %498 = vmatprep.subr.mxu0 %v465
    %499 = vmatpush1.msra.mxu0 %v464
    %500 = vmatprep.subr.mxu0 0.0
    %501 = vmatpush1.msra.mxu0 0.0
    %502 = vmatprep.subr.mxu0 0.0
    %503 = vmatpush1.msra.mxu0 0.0
    %504 = vmatprep.subr.mxu0 0.0
    %505 = vmatpush1.msra.mxu0 0.0
    %506 = vmatprep.subr.mxu0 0.0
    %507 = vmatpush1.msra.mxu0 0.0
    %508 = vmatprep.subr.mxu0 0.0
    %509 = vmatpush1.msra.mxu0 0.0
    %510 = vmatprep.subr.mxu0 0.0
    %511 = vmatpush1.msra.mxu0 0.0
    %512 = vmatprep.subr.mxu0 0.0
    %513 = vmatpush1.msra.mxu0 0.0
    %514 = vmatprep.subr.mxu0 0.0
    %515 = vmatpush1.msra.mxu0 0.0
    %516 = vmatprep.subr.mxu0 0.0
    %517 = vmatpush1.msra.mxu0 0.0
    %518 = vmatprep.subr.mxu0 0.0
    %519 = vmatpush1.msra.mxu0 0.0
    %520 = vmatprep.subr.mxu0 0.0
    %521 = vmatpush1.msra.mxu0 0.0
    %522 = vmatprep.subr.mxu0 0.0
    %523 = vmatpush1.msra.mxu0 0.0
    %524 = vmatprep.subr.mxu0 0.0
    %525 = vmatpush1.msra.mxu0 0.0
    %526 = vmatprep.subr.mxu0 0.0
    %527 = vmatpush1.msra.mxu0 0.0
    %528 = vmatprep.subr.mxu0 0.0
    %529 = vmatpush1.msra.mxu0 0.0
    %530 = vmatprep.subr.mxu0 0.0
    %531 = vmatpush1.msra.mxu0 0.0
    %532 = vmatprep.mubr.f32.mxu0 0.0
    %533 = vmatmul.mubr.f32.gmra.mrb[0].mxu0 0.0
    %v534 = vpop.f32.mrb[0].mxu0
    %v535 = vadd.f32 0.0, %v534
    %v536 = vpop.f32.mrb[0].mxu0
    %v537 = vadd.f32 0.0, %v536
    %538 = vdwg.mxu0
    %539 = vmatprep.subr.mxu0 %v407
    %540 = vmatpush1.msra.mxu0 %v406
    %541 = vmatprep.subr.mxu0 %v411
    %542 = vmatpush1.msra.mxu0 %v410
    %543 = vmatprep.subr.mxu0 %v415
    %544 = vmatpush1.msra.mxu0 %v414
    %545 = vmatprep.subr.mxu0 %v419
    %546 = vmatpush1.msra.mxu0 %v418
    %547 = vmatprep.subr.mxu0 %v423
    %548 = vmatpush1.msra.mxu0 %v422
    %549 = vmatprep.subr.mxu0 %v427
    %550 = vmatpush1.msra.mxu0 %v426
    %551 = vmatprep.subr.mxu0 %v431
    %552 = vmatpush1.msra.mxu0 %v430
    %553 = vmatprep.subr.mxu0 %v435
    %554 = vmatpush1.msra.mxu0 %v434
    %555 = vmatprep.subr.mxu0 %v439
    %556 = vmatpush1.msra.mxu0 %v438
    %557 = vmatprep.subr.mxu0 %v443
    %558 = vmatpush1.msra.mxu0 %v442
    %559 = vmatprep.subr.mxu0 %v447
    %560 = vmatpush1.msra.mxu0 %v446
    %561 = vmatprep.subr.mxu0 %v451
    %562 = vmatpush1.msra.mxu0 %v450
    %563 = vmatprep.subr.mxu0 %v455
    %564 = vmatpush1.msra.mxu0 %v454
    %565 = vmatprep.subr.mxu0 %v459
    %566 = vmatpush1.msra.mxu0 %v458
    %567 = vmatprep.subr.mxu0 %v463
    %568 = vmatpush1.msra.mxu0 %v462
    %569 = vmatprep.subr.mxu0 %v467
    %570 = vmatpush1.msra.mxu0 %v466
    %571 = vmatprep.subr.mxu0 0.0
    %572 = vmatpush1.msra.mxu0 0.0
    %573 = vmatprep.subr.mxu0 0.0
    %574 = vmatpush1.msra.mxu0 0.0
    %575 = vmatprep.subr.mxu0 0.0
    %576 = vmatpush1.msra.mxu0 0.0
    %577 = vmatprep.subr.mxu0 0.0
    %578 = vmatpush1.msra.mxu0 0.0
    %579 = vmatprep.subr.mxu0 0.0
    %580 = vmatpush1.msra.mxu0 0.0
    %581 = vmatprep.subr.mxu0 0.0
    %582 = vmatpush1.msra.mxu0 0.0
    %583 = vmatprep.subr.mxu0 0.0
    %584 = vmatpush1.msra.mxu0 0.0
    %585 = vmatprep.subr.mxu0 0.0
    %586 = vmatpush1.msra.mxu0 0.0
    %587 = vmatprep.subr.mxu0 0.0
    %588 = vmatpush1.msra.mxu0 0.0
    %589 = vmatprep.subr.mxu0 0.0
    %590 = vmatpush1.msra.mxu0 0.0
    %591 = vmatprep.subr.mxu0 0.0
    %592 = vmatpush1.msra.mxu0 0.0
    %593 = vmatprep.subr.mxu0 0.0
    %594 = vmatpush1.msra.mxu0 0.0
    %595 = vmatprep.subr.mxu0 0.0
    %596 = vmatpush1.msra.mxu0 0.0
    %597 = vmatprep.subr.mxu0 0.0
    %598 = vmatpush1.msra.mxu0 0.0
    %599 = vmatprep.subr.mxu0 0.0
    %600 = vmatpush1.msra.mxu0 0.0
    %601 = vmatprep.subr.mxu0 0.0
    %602 = vmatpush1.msra.mxu0 0.0
    %603 = vmatprep.mubr.f32.mxu0 0.0
    %604 = vmatmul.mubr.f32.gmra.mrb[0].mxu0 0.0
    %v605 = vpop.f32.mrb[0].mxu0
    %v606 = vadd.f32 0.0, %v605
    %v607 = vpop.f32.mrb[0].mxu0
    %v608 = vadd.f32 0.0, %v607
    %609 = vdwg.mxu0
    %v610 = vadd.f32 %v400, %v535
    %v611 = vadd.f32 %v401, %v537
    %v612 = vadd.f32 %v402, %v606
    %v613 = vadd.f32 %v403, %v608
    %v614 = vxor.u32 %v610, 2147483648
    %v615 = vmul.f32 %v614, 1.442695
    %v616 = vpow.pop %v615
    %v617 = vadd.f32 %v616, 1.0
    %v618 = vrcp.pop %v617
    %v619 = vmul.f32 1.0, %v618
    %v620 = vxor.u32 %v611, 2147483648
    %v621 = vmul.f32 %v620, 1.442695
    %v622 = vpow.pop %v621
    %v623 = vadd.f32 %v622, 1.0
    %v624 = vrcp.pop %v623
    %v625 = vmul.f32 1.0, %v624
    %v626 = vtanh.pop %v612
    %v627 = vxor.u32 %v613, 2147483648
    %v628 = vmul.f32 %v627, 1.442695
    %v629 = vpow.pop %v628
    %v630 = vadd.f32 %v629, 1.0
    %v631 = vrcp.pop %v630
    %v632 = vmul.f32 1.0, %v631
    %v633 = vmul.f32 %v625, 0.0
    %v634 = vmul.f32 %v619, %v626
    %v635 = vadd.f32 %v633, %v634
    %v636 = vtanh.pop %v635
    %v637 = vmul.f32 %v632, %v636
    %638 = vst [vmem:[#allocation2] sm:$0xff] %v637
    %s639 = smul.u32 1, 4
    %s640 = smul.addr %s639, 8
    %s641 = scalar_lea.vmem [#allocation3], %s640
    %v642 = vld [vmem:[%s641] sm:$0xff]
    %v643 = vld [vmem:[%s641 + $0x8] sm:$0xff]
    %v644 = vld [vmem:[%s641 + $0x10] sm:$0xff]
    %v645 = vld [vmem:[%s641 + $0x18] sm:$0xff]
    %v646 = vld [vmem:[#allocation6] sm:$0xff]
    %v647 = vld [vmem:[#allocation6 + $0x8] sm:$0xff]
    %v648 = vld [vmem:[#allocation6 + $0x10] sm:$0xff]
    %v649 = vld [vmem:[#allocation6 + $0x18] sm:$0xff]
    %v650 = vld [vmem:[#allocation6 + $0x20] sm:$0xff]
    %v651 = vld [vmem:[#allocation6 + $0x28] sm:$0xff]
    %v652 = vld [vmem:[#allocation6 + $0x30] sm:$0xff]
    %v653 = vld [vmem:[#allocation6 + $0x38] sm:$0xff]
    %v654 = vld [vmem:[#allocation6 + $0x40] sm:$0xff]
    %v655 = vld [vmem:[#allocation6 + $0x48] sm:$0xff]
    %v656 = vld [vmem:[#allocation6 + $0x50] sm:$0xff]
    %v657 = vld [vmem:[#allocation6 + $0x58] sm:$0xff]
    %v658 = vld [vmem:[#allocation6 + $0x60] sm:$0xff]
    %v659 = vld [vmem:[#allocation6 + $0x68] sm:$0xff]
    %v660 = vld [vmem:[#allocation6 + $0x70] sm:$0xff]
    %v661 = vld [vmem:[#allocation6 + $0x78] sm:$0xff]
    %v662 = vld [vmem:[#allocation6 + $0x80] sm:$0xff]
    %v663 = vld [vmem:[#allocation6 + $0x88] sm:$0xff]
    %v664 = vld [vmem:[#allocation6 + $0x90] sm:$0xff]
    %v665 = vld [vmem:[#allocation6 + $0x98] sm:$0xff]
    %v666 = vld [vmem:[#allocation6 + $0xa0] sm:$0xff]
    %v667 = vld [vmem:[#allocation6 + $0xa8] sm:$0xff]
    %v668 = vld [vmem:[#allocation6 + $0xb0] sm:$0xff]
    %v669 = vld [vmem:[#allocation6 + $0xb8] sm:$0xff]
    %v670 = vld [vmem:[#allocation6 + $0xc0] sm:$0xff]
    %v671 = vld [vmem:[#allocation6 + $0xc8] sm:$0xff]
    %v672 = vld [vmem:[#allocation6 + $0xd0] sm:$0xff]
    %v673 = vld [vmem:[#allocation6 + $0xd8] sm:$0xff]
    %v674 = vld [vmem:[#allocation6 + $0xe0] sm:$0xff]
    %v675 = vld [vmem:[#allocation6 + $0xe8] sm:$0xff]
    %v676 = vld [vmem:[#allocation6 + $0xf0] sm:$0xff]
    %v677 = vld [vmem:[#allocation6 + $0xf8] sm:$0xff]
    %v678 = vld [vmem:[#allocation6 + $0x100] sm:$0xff]
    %v679 = vld [vmem:[#allocation6 + $0x108] sm:$0xff]
    %v680 = vld [vmem:[#allocation6 + $0x110] sm:$0xff]
    %v681 = vld [vmem:[#allocation6 + $0x118] sm:$0xff]
    %v682 = vld [vmem:[#allocation6 + $0x120] sm:$0xff]
    %v683 = vld [vmem:[#allocation6 + $0x128] sm:$0xff]
    %v684 = vld [vmem:[#allocation6 + $0x130] sm:$0xff]
    %v685 = vld [vmem:[#allocation6 + $0x138] sm:$0xff]
    %v686 = vld [vmem:[#allocation6 + $0x140] sm:$0xff]
    %v687 = vld [vmem:[#allocation6 + $0x148] sm:$0xff]
    %v688 = vld [vmem:[#allocation6 + $0x150] sm:$0xff]
    %v689 = vld [vmem:[#allocation6 + $0x158] sm:$0xff]
    %v690 = vld [vmem:[#allocation6 + $0x160] sm:$0xff]
    %v691 = vld [vmem:[#allocation6 + $0x168] sm:$0xff]
    %v692 = vld [vmem:[#allocation6 + $0x170] sm:$0xff]
    %v693 = vld [vmem:[#allocation6 + $0x178] sm:$0xff]
    %v694 = vld [vmem:[#allocation6 + $0x180] sm:$0xff]
    %v695 = vld [vmem:[#allocation6 + $0x188] sm:$0xff]
    %v696 = vld [vmem:[#allocation6 + $0x190] sm:$0xff]
    %v697 = vld [vmem:[#allocation6 + $0x198] sm:$0xff]
    %v698 = vld [vmem:[#allocation6 + $0x1a0] sm:$0xff]
    %v699 = vld [vmem:[#allocation6 + $0x1a8] sm:$0xff]
    %v700 = vld [vmem:[#allocation6 + $0x1b0] sm:$0xff]
    %v701 = vld [vmem:[#allocation6 + $0x1b8] sm:$0xff]
    %v702 = vld [vmem:[#allocation6 + $0x1c0] sm:$0xff]
    %v703 = vld [vmem:[#allocation6 + $0x1c8] sm:$0xff]
    %v704 = vld [vmem:[#allocation6 + $0x1d0] sm:$0xff]
    %v705 = vld [vmem:[#allocation6 + $0x1d8] sm:$0xff]
    %v706 = vld [vmem:[#allocation6 + $0x1e0] sm:$0xff]
    %v707 = vld [vmem:[#allocation6 + $0x1e8] sm:$0xff]
    %v708 = vld [vmem:[#allocation6 + $0x1f0] sm:$0xff]
    %v709 = vld [vmem:[#allocation6 + $0x1f8] sm:$0xff]
    %710 = vmatprep.subr.mxu0 %v647
    %711 = vmatpush1.msra.mxu0 %v646
    %712 = vmatprep.subr.mxu0 %v651
    %713 = vmatpush1.msra.mxu0 %v650
    %714 = vmatprep.subr.mxu0 %v655
    %715 = vmatpush1.msra.mxu0 %v654
    %716 = vmatprep.subr.mxu0 %v659
    %717 = vmatpush1.msra.mxu0 %v658
    %718 = vmatprep.subr.mxu0 %v663
    %719 = vmatpush1.msra.mxu0 %v662
    %720 = vmatprep.subr.mxu0 %v667
    %721 = vmatpush1.msra.mxu0 %v666
    %722 = vmatprep.subr.mxu0 %v671
    %723 = vmatpush1.msra.mxu0 %v670
    %724 = vmatprep.subr.mxu0 %v675
    %725 = vmatpush1.msra.mxu0 %v674
    %726 = vmatprep.subr.mxu0 %v679
    %727 = vmatpush1.msra.mxu0 %v678
    %728 = vmatprep.subr.mxu0 %v683
    %729 = vmatpush1.msra.mxu0 %v682
    %730 = vmatprep.subr.mxu0 %v687
    %731 = vmatpush1.msra.mxu0 %v686
    %732 = vmatprep.subr.mxu0 %v691
    %733 = vmatpush1.msra.mxu0 %v690
    %734 = vmatprep.subr.mxu0 %v695
    %735 = vmatpush1.msra.mxu0 %v694
    %736 = vmatprep.subr.mxu0 %v699
    %737 = vmatpush1.msra.mxu0 %v698
    %738 = vmatprep.subr.mxu0 %v703
    %739 = vmatpush1.msra.mxu0 %v702
    %740 = vmatprep.subr.mxu0 %v707
    %741 = vmatpush1.msra.mxu0 %v706
    %742 = vmatprep.subr.mxu0 0.0
    %743 = vmatpush1.msra.mxu0 0.0
    %744 = vmatprep.subr.mxu0 0.0
    %745 = vmatpush1.msra.mxu0 0.0
    %746 = vmatprep.subr.mxu0 0.0
    %747 = vmatpush1.msra.mxu0 0.0
    %748 = vmatprep.subr.mxu0 0.0
    %749 = vmatpush1.msra.mxu0 0.0
    %750 = vmatprep.subr.mxu0 0.0
    %751 = vmatpush1.msra.mxu0 0.0
    %752 = vmatprep.subr.mxu0 0.0
    %753 = vmatpush1.msra.mxu0 0.0
    %754 = vmatprep.subr.mxu0 0.0
    %755 = vmatpush1.msra.mxu0 0.0
    %756 = vmatprep.subr.mxu0 0.0
    %757 = vmatpush1.msra.mxu0 0.0
    %758 = vmatprep.subr.mxu0 0.0
    %759 = vmatpush1.msra.mxu0 0.0
    %760 = vmatprep.subr.mxu0 0.0
    %761 = vmatpush1.msra.mxu0 0.0
    %762 = vmatprep.subr.mxu0 0.0
    %763 = vmatpush1.msra.mxu0 0.0
    %764 = vmatprep.subr.mxu0 0.0
    %765 = vmatpush1.msra.mxu0 0.0
    %766 = vmatprep.subr.mxu0 0.0
    %767 = vmatpush1.msra.mxu0 0.0
    %768 = vmatprep.subr.mxu0 0.0
    %769 = vmatpush1.msra.mxu0 0.0
    %770 = vmatprep.subr.mxu0 0.0
    %771 = vmatpush1.msra.mxu0 0.0
    %772 = vmatprep.subr.mxu0 0.0
    %773 = vmatpush1.msra.mxu0 0.0
    %774 = vmatprep.mubr.f32.mxu0 0.0
    %775 = vmatmul.mubr.f32.gmra.mrb[0].mxu0 %v637
    %v776 = vpop.f32.mrb[0].mxu0
    %v777 = vadd.f32 0.0, %v776
    %v778 = vpop.f32.mrb[0].mxu0
    %v779 = vadd.f32 0.0, %v778
    %780 = vdwg.mxu0
    %781 = vmatprep.subr.mxu0 %v649
    %782 = vmatpush1.msra.mxu0 %v648
    %783 = vmatprep.subr.mxu0 %v653
    %784 = vmatpush1.msra.mxu0 %v652
    %785 = vmatprep.subr.mxu0 %v657
    %786 = vmatpush1.msra.mxu0 %v656
    %787 = vmatprep.subr.mxu0 %v661
    %788 = vmatpush1.msra.mxu0 %v660
    %789 = vmatprep.subr.mxu0 %v665
    %790 = vmatpush1.msra.mxu0 %v664
    %791 = vmatprep.subr.mxu0 %v669
    %792 = vmatpush1.msra.mxu0 %v668
    %793 = vmatprep.subr.mxu0 %v673
    %794 = vmatpush1.msra.mxu0 %v672
    %795 = vmatprep.subr.mxu0 %v677
    %796 = vmatpush1.msra.mxu0 %v676
    %797 = vmatprep.subr.mxu0 %v681
    %798 = vmatpush1.msra.mxu0 %v680
    %799 = vmatprep.subr.mxu0 %v685
    %800 = vmatpush1.msra.mxu0 %v684
    %801 = vmatprep.subr.mxu0 %v689
    %802 = vmatpush1.msra.mxu0 %v688
    %803 = vmatprep.subr.mxu0 %v693
    %804 = vmatpush1.msra.mxu0 %v692
    %805 = vmatprep.subr.mxu0 %v697
    %806 = vmatpush1.msra.mxu0 %v696
    %807 = vmatprep.subr.mxu0 %v701
    %808 = vmatpush1.msra.mxu0 %v700
    %809 = vmatprep.subr.mxu0 %v705
    %810 = vmatpush1.msra.mxu0 %v704
    %811 = vmatprep.subr.mxu0 %v709
    %812 = vmatpush1.msra.mxu0 %v708
    %813 = vmatprep.subr.mxu0 0.0
    %814 = vmatpush1.msra.mxu0 0.0
    %815 = vmatprep.subr.mxu0 0.0
    %816 = vmatpush1.msra.mxu0 0.0
    %817 = vmatprep.subr.mxu0 0.0
    %818 = vmatpush1.msra.mxu0 0.0
    %819 = vmatprep.subr.mxu0 0.0
    %820 = vmatpush1.msra.mxu0 0.0
    %821 = vmatprep.subr.mxu0 0.0
    %822 = vmatpush1.msra.mxu0 0.0
    %823 = vmatprep.subr.mxu0 0.0
    %824 = vmatpush1.msra.mxu0 0.0
    %825 = vmatprep.subr.mxu0 0.0
    %826 = vmatpush1.msra.mxu0 0.0
    %827 = vmatprep.subr.mxu0 0.0
    %828 = vmatpush1.msra.mxu0 0.0
    %829 = vmatprep.subr.mxu0 0.0
    %830 = vmatpush1.msra.mxu0 0.0
    %831 = vmatprep.subr.mxu0 0.0
    %832 = vmatpush1.msra.mxu0 0.0
    %833 = vmatprep.subr.mxu0 0.0
    %834 = vmatpush1.msra.mxu0 0.0
    %835 = vmatprep.subr.mxu0 0.0
    %836 = vmatpush1.msra.mxu0 0.0
    %837 = vmatprep.subr.mxu0 0.0
    %838 = vmatpush1.msra.mxu0 0.0
    %839 = vmatprep.subr.mxu0 0.0
    %840 = vmatpush1.msra.mxu0 0.0
    %841 = vmatprep.subr.mxu0 0.0
    %842 = vmatpush1.msra.mxu0 0.0
    %843 = vmatprep.subr.mxu0 0.0
    %844 = vmatpush1.msra.mxu0 0.0
    %845 = vmatprep.mubr.f32.mxu0 0.0
    %846 = vmatmul.mubr.f32.gmra.mrb[0].mxu0 %v637
    %v847 = vpop.f32.mrb[0].mxu0
    %v848 = vadd.f32 0.0, %v847
    %v849 = vpop.f32.mrb[0].mxu0
    %v850 = vadd.f32 0.0, %v849
    %851 = vdwg.mxu0
    %v852 = vadd.f32 %v642, %v777
    %v853 = vadd.f32 %v643, %v779
    %v854 = vadd.f32 %v644, %v848
    %v855 = vadd.f32 %v645, %v850
    %v856 = vxor.u32 %v852, 2147483648
    %v857 = vmul.f32 %v856, 1.442695
    %v858 = vpow.pop %v857
    %v859 = vadd.f32 %v858, 1.0
    %v860 = vrcp.pop %v859
    %v861 = vmul.f32 1.0, %v860
    %v862 = vxor.u32 %v853, 2147483648
    %v863 = vmul.f32 %v862, 1.442695
    %v864 = vpow.pop %v863
    %v865 = vadd.f32 %v864, 1.0
    %v866 = vrcp.pop %v865
    %v867 = vmul.f32 1.0, %v866
    %v868 = vtanh.pop %v854
    %v869 = vxor.u32 %v855, 2147483648
    %v870 = vmul.f32 %v869, 1.442695
    %v871 = vpow.pop %v870
    %v872 = vadd.f32 %v871, 1.0
    %v873 = vrcp.pop %v872
    %v874 = vmul.f32 1.0, %v873
    %v875 = vmul.f32 %v867, %v635
    %v876 = vmul.f32 %v861, %v868
    %v877 = vadd.f32 %v875, %v876
    %v878 = vtanh.pop %v877
    %v879 = vmul.f32 %v874, %v878
    %s880 = scalar_lea.vmem [#allocation2], 8
    %881 = vst [vmem:[%s880] sm:$0xff] %v879
    %s882 = smul.u32 2, 4
    %s883 = smul.addr %s882, 8
    %s884 = scalar_lea.vmem [#allocation3], %s883
    %v885 = vld [vmem:[%s884] sm:$0xff]
    %v886 = vld [vmem:[%s884 + $0x8] sm:$0xff]
    %v887 = vld [vmem:[%s884 + $0x10] sm:$0xff]
    %v888 = vld [vmem:[%s884 + $0x18] sm:$0xff]
    %v889 = vld [vmem:[#allocation6] sm:$0xff]
    %v890 = vld [vmem:[#allocation6 + $0x8] sm:$0xff]
    %v891 = vld [vmem:[#allocation6 + $0x10] sm:$0xff]
    %v892 = vld [vmem:[#allocation6 + $0x18] sm:$0xff]
    %v893 = vld [vmem:[#allocation6 + $0x20] sm:$0xff]
    %v894 = vld [vmem:[#allocation6 + $0x28] sm:$0xff]
    %v895 = vld [vmem:[#allocation6 + $0x30] sm:$0xff]
    %v896 = vld [vmem:[#allocation6 + $0x38] sm:$0xff]
    %v897 = vld [vmem:[#allocation6 + $0x40] sm:$0xff]
    %v898 = vld [vmem:[#allocation6 + $0x48] sm:$0xff]
    %v899 = vld [vmem:[#allocation6 + $0x50] sm:$0xff]
    %v900 = vld [vmem:[#allocation6 + $0x58] sm:$0xff]
    %v901 = vld [vmem:[#allocation6 + $0x60] sm:$0xff]
    %v902 = vld [vmem:[#allocation6 + $0x68] sm:$0xff]
    %v903 = vld [vmem:[#allocation6 + $0x70] sm:$0xff]
    %v904 = vld [vmem:[#allocation6 + $0x78] sm:$0xff]
    %v905 = vld [vmem:[#allocation6 + $0x80] sm:$0xff]
    %v906 = vld [vmem:[#allocation6 + $0x88] sm:$0xff]
    %v907 = vld [vmem:[#allocation6 + $0x90] sm:$0xff]
    %v908 = vld [vmem:[#allocation6 + $0x98] sm:$0xff]
    %v909 = vld [vmem:[#allocation6 + $0xa0] sm:$0xff]
    %v910 = vld [vmem:[#allocation6 + $0xa8] sm:$0xff]
    %v911 = vld [vmem:[#allocation6 + $0xb0] sm:$0xff]
    %v912 = vld [vmem:[#allocation6 + $0xb8] sm:$0xff]
    %v913 = vld [vmem:[#allocation6 + $0xc0] sm:$0xff]
    %v914 = vld [vmem:[#allocation6 + $0xc8] sm:$0xff]
    %v915 = vld [vmem:[#allocation6 + $0xd0] sm:$0xff]
    %v916 = vld [vmem:[#allocation6 + $0xd8] sm:$0xff]
    %v917 = vld [vmem:[#allocation6 + $0xe0] sm:$0xff]
    %v918 = vld [vmem:[#allocation6 + $0xe8] sm:$0xff]
    %v919 = vld [vmem:[#allocation6 + $0xf0] sm:$0xff]
    %v920 = vld [vmem:[#allocation6 + $0xf8] sm:$0xff]
    %v921 = vld [vmem:[#allocation6 + $0x100] sm:$0xff]
    %v922 = vld [vmem:[#allocation6 + $0x108] sm:$0xff]
    %v923 = vld [vmem:[#allocation6 + $0x110] sm:$0xff]
    %v924 = vld [vmem:[#allocation6 + $0x118] sm:$0xff]
    %v925 = vld [vmem:[#allocation6 + $0x120] sm:$0xff]
    %v926 = vld [vmem:[#allocation6 + $0x128] sm:$0xff]
    %v927 = vld [vmem:[#allocation6 + $0x130] sm:$0xff]
    %v928 = vld [vmem:[#allocation6 + $0x138] sm:$0xff]
    %v929 = vld [vmem:[#allocation6 + $0x140] sm:$0xff]
    %v930 = vld [vmem:[#allocation6 + $0x148] sm:$0xff]
    %v931 = vld [vmem:[#allocation6 + $0x150] sm:$0xff]
    %v932 = vld [vmem:[#allocation6 + $0x158] sm:$0xff]
    %v933 = vld [vmem:[#allocation6 + $0x160] sm:$0xff]
    %v934 = vld [vmem:[#allocation6 + $0x168] sm:$0xff]
    %v935 = vld [vmem:[#allocation6 + $0x170] sm:$0xff]
    %v936 = vld [vmem:[#allocation6 + $0x178] sm:$0xff]
    %v937 = vld [vmem:[#allocation6 + $0x180] sm:$0xff]
    %v938 = vld [vmem:[#allocation6 + $0x188] sm:$0xff]
    %v939 = vld [vmem:[#allocation6 + $0x190] sm:$0xff]
    %v940 = vld [vmem:[#allocation6 + $0x198] sm:$0xff]
    %v941 = vld [vmem:[#allocation6 + $0x1a0] sm:$0xff]
    %v942 = vld [vmem:[#allocation6 + $0x1a8] sm:$0xff]
    %v943 = vld [vmem:[#allocation6 + $0x1b0] sm:$0xff]
    %v944 = vld [vmem:[#allocation6 + $0x1b8] sm:$0xff]
    %v945 = vld [vmem:[#allocation6 + $0x1c0] sm:$0xff]
    %v946 = vld [vmem:[#allocation6 + $0x1c8] sm:$0xff]
    %v947 = vld [vmem:[#allocation6 + $0x1d0] sm:$0xff]
    %v948 = vld [vmem:[#allocation6 + $0x1d8] sm:$0xff]
    %v949 = vld [vmem:[#allocation6 + $0x1e0] sm:$0xff]
    %v950 = vld [vmem:[#allocation6 + $0x1e8] sm:$0xff]
    %v951 = vld [vmem:[#allocation6 + $0x1f0] sm:$0xff]
    %v952 = vld [vmem:[#allocation6 + $0x1f8] sm:$0xff]
    %953 = vmatprep.subr.mxu0 %v890
    %954 = vmatpush1.msra.mxu0 %v889
    %955 = vmatprep.subr.mxu0 %v894
    %956 = vmatpush1.msra.mxu0 %v893
    %957 = vmatprep.subr.mxu0 %v898
    %958 = vmatpush1.msra.mxu0 %v897
    %959 = vmatprep.subr.mxu0 %v902
    %960 = vmatpush1.msra.mxu0 %v901
    %961 = vmatprep.subr.mxu0 %v906
    %962 = vmatpush1.msra.mxu0 %v905
    %963 = vmatprep.subr.mxu0 %v910
    %964 = vmatpush1.msra.mxu0 %v909
    %965 = vmatprep.subr.mxu0 %v914
    %966 = vmatpush1.msra.mxu0 %v913
    %967 = vmatprep.subr.mxu0 %v918
    %968 = vmatpush1.msra.mxu0 %v917
    %969 = vmatprep.subr.mxu0 %v922
    %970 = vmatpush1.msra.mxu0 %v921
    %971 = vmatprep.subr.mxu0 %v926
    %972 = vmatpush1.msra.mxu0 %v925
    %973 = vmatprep.subr.mxu0 %v930
    %974 = vmatpush1.msra.mxu0 %v929
    %975 = vmatprep.subr.mxu0 %v934
    %976 = vmatpush1.msra.mxu0 %v933
    %977 = vmatprep.subr.mxu0 %v938
    %978 = vmatpush1.msra.mxu0 %v937
    %979 = vmatprep.subr.mxu0 %v942
    %980 = vmatpush1.msra.mxu0 %v941
    %981 = vmatprep.subr.mxu0 %v946
    %982 = vmatpush1.msra.mxu0 %v945
    %983 = vmatprep.subr.mxu0 %v950
    %984 = vmatpush1.msra.mxu0 %v949
    %985 = vmatprep.subr.mxu0 0.0
    %986 = vmatpush1.msra.mxu0 0.0
    %987 = vmatprep.subr.mxu0 0.0
    %988 = vmatpush1.msra.mxu0 0.0
    %989 = vmatprep.subr.mxu0 0.0
    %990 = vmatpush1.msra.mxu0 0.0
    %991 = vmatprep.subr.mxu0 0.0
    %992 = vmatpush1.msra.mxu0 0.0
    %993 = vmatprep.subr.mxu0 0.0
    %994 = vmatpush1.msra.mxu0 0.0
    %995 = vmatprep.subr.mxu0 0.0
    %996 = vmatpush1.msra.mxu0 0.0
    %997 = vmatprep.subr.mxu0 0.0
    %998 = vmatpush1.msra.mxu0 0.0
    %999 = vmatprep.subr.mxu0 0.0
    %1000 = vmatpush1.msra.mxu0 0.0
    %1001 = vmatprep.subr.mxu0 0.0
    %1002 = vmatpush1.msra.mxu0 0.0
    %1003 = vmatprep.subr.mxu0 0.0
    %1004 = vmatpush1.msra.mxu0 0.0
    %1005 = vmatprep.subr.mxu0 0.0
    %1006 = vmatpush1.msra.mxu0 0.0
    %1007 = vmatprep.subr.mxu0 0.0
    %1008 = vmatpush1.msra.mxu0 0.0
    %1009 = vmatprep.subr.mxu0 0.0
    %1010 = vmatpush1.msra.mxu0 0.0
    %1011 = vmatprep.subr.mxu0 0.0
    %1012 = vmatpush1.msra.mxu0 0.0
    %1013 = vmatprep.subr.mxu0 0.0
    %1014 = vmatpush1.msra.mxu0 0.0
    %1015 = vmatprep.subr.mxu0 0.0
    %1016 = vmatpush1.msra.mxu0 0.0
    %1017 = vmatprep.mubr.f32.mxu0 0.0
    %1018 = vmatmul.mubr.f32.gmra.mrb[0].mxu0 %v879
    %v1019 = vpop.f32.mrb[0].mxu0
    %v1020 = vadd.f32 0.0, %v1019
    %v1021 = vpop.f32.mrb[0].mxu0
    %v1022 = vadd.f32 0.0, %v1021
    %1023 = vdwg.mxu0
    %1024 = vmatprep.subr.mxu0 %v892
    %1025 = vmatpush1.msra.mxu0 %v891
    %1026 = vmatprep.subr.mxu0 %v896
    %1027 = vmatpush1.msra.mxu0 %v895
    %1028 = vmatprep.subr.mxu0 %v900
    %1029 = vmatpush1.msra.mxu0 %v899
    %1030 = vmatprep.subr.mxu0 %v904
    %1031 = vmatpush1.msra.mxu0 %v903
    %1032 = vmatprep.subr.mxu0 %v908
    %1033 = vmatpush1.msra.mxu0 %v907
    %1034 = vmatprep.subr.mxu0 %v912
    %1035 = vmatpush1.msra.mxu0 %v911
    %1036 = vmatprep.subr.mxu0 %v916
    %1037 = vmatpush1.msra.mxu0 %v915
    %1038 = vmatprep.subr.mxu0 %v920
    %1039 = vmatpush1.msra.mxu0 %v919
    %1040 = vmatprep.subr.mxu0 %v924
    %1041 = vmatpush1.msra.mxu0 %v923
    %1042 = vmatprep.subr.mxu0 %v928
    %1043 = vmatpush1.msra.mxu0 %v927
    %1044 = vmatprep.subr.mxu0 %v932
    %1045 = vmatpush1.msra.mxu0 %v931
    %1046 = vmatprep.subr.mxu0 %v936
    %1047 = vmatpush1.msra.mxu0 %v935
    %1048 = vmatprep.subr.mxu0 %v940
    %1049 = vmatpush1.msra.mxu0 %v939
    %1050 = vmatprep.subr.mxu0 %v944
    %1051 = vmatpush1.msra.mxu0 %v943
    %1052 = vmatprep.subr.mxu0 %v948
    %1053 = vmatpush1.msra.mxu0 %v947
    %1054 = vmatprep.subr.mxu0 %v952
    %1055 = vmatpush1.msra.mxu0 %v951
    %1056 = vmatprep.subr.mxu0 0.0
    %1057 = vmatpush1.msra.mxu0 0.0
    %1058 = vmatprep.subr.mxu0 0.0
    %1059 = vmatpush1.msra.mxu0 0.0
    %1060 = vmatprep.subr.mxu0 0.0
    %1061 = vmatpush1.msra.mxu0 0.0
    %1062 = vmatprep.subr.mxu0 0.0
    %1063 = vmatpush1.msra.mxu0 0.0
    %1064 = vmatprep.subr.mxu0 0.0
    %1065 = vmatpush1.msra.mxu0 0.0
    %1066 = vmatprep.subr.mxu0 0.0
    %1067 = vmatpush1.msra.mxu0 0.0
    %1068 = vmatprep.subr.mxu0 0.0
    %1069 = vmatpush1.msra.mxu0 0.0
    %1070 = vmatprep.subr.mxu0 0.0
    %1071 = vmatpush1.msra.mxu0 0.0
    %1072 = vmatprep.subr.mxu0 0.0
    %1073 = vmatpush1.msra.mxu0 0.0
    %1074 = vmatprep.subr.mxu0 0.0
    %1075 = vmatpush1.msra.mxu0 0.0
    %1076 = vmatprep.subr.mxu0 0.0
    %1077 = vmatpush1.msra.mxu0 0.0
    %1078 = vmatprep.subr.mxu0 0.0
    %1079 = vmatpush1.msra.mxu0 0.0
    %1080 = vmatprep.subr.mxu0 0.0
    %1081 = vmatpush1.msra.mxu0 0.0
    %1082 = vmatprep.subr.mxu0 0.0
    %1083 = vmatpush1.msra.mxu0 0.0
    %1084 = vmatprep.subr.mxu0 0.0
    %1085 = vmatpush1.msra.mxu0 0.0
    %1086 = vmatprep.subr.mxu0 0.0
    %1087 = vmatpush1.msra.mxu0 0.0
    %1088 = vmatprep.mubr.f32.mxu0 0.0
    %1089 = vmatmul.mubr.f32.gmra.mrb[0].mxu0 %v879
    %v1090 = vpop.f32.mrb[0].mxu0
    %v1091 = vadd.f32 0.0, %v1090
    %v1092 = vpop.f32.mrb[0].mxu0
    %v1093 = vadd.f32 0.0, %v1092
    %1094 = vdwg.mxu0
    %v1095 = vadd.f32 %v885, %v1020
    %v1096 = vadd.f32 %v886, %v1022
    %v1097 = vadd.f32 %v887, %v1091
    %v1098 = vadd.f32 %v888, %v1093
    %v1099 = vxor.u32 %v1095, 2147483648
    %v1100 = vmul.f32 %v1099, 1.442695
    %v1101 = vpow.pop %v1100
    %v1102 = vadd.f32 %v1101, 1.0
    %v1103 = vrcp.pop %v1102
    %v1104 = vmul.f32 1.0, %v1103
    %v1105 = vxor.u32 %v1096, 2147483648
    %v1106 = vmul.f32 %v1105, 1.442695
    %v1107 = vpow.pop %v1106
    %v1108 = vadd.f32 %v1107, 1.0
    %v1109 = vrcp.pop %v1108
    %v1110 = vmul.f32 1.0, %v1109
    %v1111 = vtanh.pop %v1097
    %v1112 = vxor.u32 %v1098, 2147483648
    %v1113 = vmul.f32 %v1112, 1.442695
    %v1114 = vpow.pop %v1113
    %v1115 = vadd.f32 %v1114, 1.0
    %v1116 = vrcp.pop %v1115
    %v1117 = vmul.f32 1.0, %v1116
    %v1118 = vmul.f32 %v1110, %v877
    %v1119 = vmul.f32 %v1104, %v1111
    %v1120 = vadd.f32 %v1118, %v1119
    %v1121 = vtanh.pop %v1120
    %v1122 = vmul.f32 %v1117, %v1121
    %s1123 = scalar_lea.vmem [#allocation2], 16
    %1124 = vst [vmem:[%s1123] sm:$0xff] %v1122
    %s1125 = smul.u32 3, 4
    %s1126 = smul.addr %s1125, 8
    %s1127 = scalar_lea.vmem [#allocation3], %s1126
    %v1128 = vld [vmem:[%s1127] sm:$0xff]
    %v1129 = vld [vmem:[%s1127 + $0x8] sm:$0xff]
    %v1130 = vld [vmem:[%s1127 + $0x10] sm:$0xff]
    %v1131 = vld [vmem:[%s1127 + $0x18] sm:$0xff]
    %v1132 = vld [vmem:[#allocation6] sm:$0xff]
    %v1133 = vld [vmem:[#allocation6 + $0x8] sm:$0xff]
    %v1134 = vld [vmem:[#allocation6 + $0x10] sm:$0xff]
    %v1135 = vld [vmem:[#allocation6 + $0x18] sm:$0xff]
    %v1136 = vld [vmem:[#allocation6 + $0x20] sm:$0xff]
    %v1137 = vld [vmem:[#allocation6 + $0x28] sm:$0xff]
    %v1138 = vld [vmem:[#allocation6 + $0x30] sm:$0xff]
    %v1139 = vld [vmem:[#allocation6 + $0x38] sm:$0xff]
    %v1140 = vld [vmem:[#allocation6 + $0x40] sm:$0xff]
    %v1141 = vld [vmem:[#allocation6 + $0x48] sm:$0xff]
    %v1142 = vld [vmem:[#allocation6 + $0x50] sm:$0xff]
    %v1143 = vld [vmem:[#allocation6 + $0x58] sm:$0xff]
    %v1144 = vld [vmem:[#allocation6 + $0x60] sm:$0xff]
    %v1145 = vld [vmem:[#allocation6 + $0x68] sm:$0xff]
    %v1146 = vld [vmem:[#allocation6 + $0x70] sm:$0xff]
    %v1147 = vld [vmem:[#allocation6 + $0x78] sm:$0xff]
    %v1148 = vld [vmem:[#allocation6 + $0x80] sm:$0xff]
    %v1149 = vld [vmem:[#allocation6 + $0x88] sm:$0xff]
    %v1150 = vld [vmem:[#allocation6 + $0x90] sm:$0xff]
    %v1151 = vld [vmem:[#allocation6 + $0x98] sm:$0xff]
    %v1152 = vld [vmem:[#allocation6 + $0xa0] sm:$0xff]
    %v1153 = vld [vmem:[#allocation6 + $0xa8] sm:$0xff]
    %v1154 = vld [vmem:[#allocation6 + $0xb0] sm:$0xff]
    %v1155 = vld [vmem:[#allocation6 + $0xb8] sm:$0xff]
    %v1156 = vld [vmem:[#allocation6 + $0xc0] sm:$0xff]
    %v1157 = vld [vmem:[#allocation6 + $0xc8] sm:$0xff]
    %v1158 = vld [vmem:[#allocation6 + $0xd0] sm:$0xff]
    %v1159 = vld [vmem:[#allocation6 + $0xd8] sm:$0xff]
    %v1160 = vld [vmem:[#allocation6 + $0xe0] sm:$0xff]
    %v1161 = vld [vmem:[#allocation6 + $0xe8] sm:$0xff]
    %v1162 = vld [vmem:[#allocation6 + $0xf0] sm:$0xff]
    %v1163 = vld [vmem:[#allocation6 + $0xf8] sm:$0xff]
    %v1164 = vld [vmem:[#allocation6 + $0x100] sm:$0xff]
    %v1165 = vld [vmem:[#allocation6 + $0x108] sm:$0xff]
    %v1166 = vld [vmem:[#allocation6 + $0x110] sm:$0xff]
    %v1167 = vld [vmem:[#allocation6 + $0x118] sm:$0xff]
    %v1168 = vld [vmem:[#allocation6 + $0x120] sm:$0xff]
    %v1169 = vld [vmem:[#allocation6 + $0x128] sm:$0xff]
    %v1170 = vld [vmem:[#allocation6 + $0x130] sm:$0xff]
    %v1171 = vld [vmem:[#allocation6 + $0x138] sm:$0xff]
    %v1172 = vld [vmem:[#allocation6 + $0x140] sm:$0xff]
    %v1173 = vld [vmem:[#allocation6 + $0x148] sm:$0xff]
    %v1174 = vld [vmem:[#allocation6 + $0x150] sm:$0xff]
    %v1175 = vld [vmem:[#allocation6 + $0x158] sm:$0xff]
    %v1176 = vld [vmem:[#allocation6 + $0x160] sm:$0xff]
    %v1177 = vld [vmem:[#allocation6 + $0x168] sm:$0xff]
    %v1178 = vld [vmem:[#allocation6 + $0x170] sm:$0xff]
    %v1179 = vld [vmem:[#allocation6 + $0x178] sm:$0xff]
    %v1180 = vld [vmem:[#allocation6 + $0x180] sm:$0xff]
    %v1181 = vld [vmem:[#allocation6 + $0x188] sm:$0xff]
    %v1182 = vld [vmem:[#allocation6 + $0x190] sm:$0xff]
    %v1183 = vld [vmem:[#allocation6 + $0x198] sm:$0xff]
    %v1184 = vld [vmem:[#allocation6 + $0x1a0] sm:$0xff]
    %v1185 = vld [vmem:[#allocation6 + $0x1a8] sm:$0xff]
    %v1186 = vld [vmem:[#allocation6 + $0x1b0] sm:$0xff]
    %v1187 = vld [vmem:[#allocation6 + $0x1b8] sm:$0xff]
    %v1188 = vld [vmem:[#allocation6 + $0x1c0] sm:$0xff]
    %v1189 = vld [vmem:[#allocation6 + $0x1c8] sm:$0xff]
    %v1190 = vld [vmem:[#allocation6 + $0x1d0] sm:$0xff]
    %v1191 = vld [vmem:[#allocation6 + $0x1d8] sm:$0xff]
    %v1192 = vld [vmem:[#allocation6 + $0x1e0] sm:$0xff]
    %v1193 = vld [vmem:[#allocation6 + $0x1e8] sm:$0xff]
    %v1194 = vld [vmem:[#allocation6 + $0x1f0] sm:$0xff]
    %v1195 = vld [vmem:[#allocation6 + $0x1f8] sm:$0xff]
    %1196 = vmatprep.subr.mxu0 %v1133
    %1197 = vmatpush1.msra.mxu0 %v1132
    %1198 = vmatprep.subr.mxu0 %v1137
    %1199 = vmatpush1.msra.mxu0 %v1136
    %1200 = vmatprep.subr.mxu0 %v1141
    %1201 = vmatpush1.msra.mxu0 %v1140
    %1202 = vmatprep.subr.mxu0 %v1145
    %1203 = vmatpush1.msra.mxu0 %v1144
    %1204 = vmatprep.subr.mxu0 %v1149
    %1205 = vmatpush1.msra.mxu0 %v1148
    %1206 = vmatprep.subr.mxu0 %v1153
    %1207 = vmatpush1.msra.mxu0 %v1152
    %1208 = vmatprep.subr.mxu0 %v1157
    %1209 = vmatpush1.msra.mxu0 %v1156
    %1210 = vmatprep.subr.mxu0 %v1161
    %1211 = vmatpush1.msra.mxu0 %v1160
    %1212 = vmatprep.subr.mxu0 %v1165
    %1213 = vmatpush1.msra.mxu0 %v1164
    %1214 = vmatprep.subr.mxu0 %v1169
    %1215 = vmatpush1.msra.mxu0 %v1168
    %1216 = vmatprep.subr.mxu0 %v1173
    %1217 = vmatpush1.msra.mxu0 %v1172
    %1218 = vmatprep.subr.mxu0 %v1177
    %1219 = vmatpush1.msra.mxu0 %v1176
    %1220 = vmatprep.subr.mxu0 %v1181
    %1221 = vmatpush1.msra.mxu0 %v1180
    %1222 = vmatprep.subr.mxu0 %v1185
    %1223 = vmatpush1.msra.mxu0 %v1184
    %1224 = vmatprep.subr.mxu0 %v1189
    %1225 = vmatpush1.msra.mxu0 %v1188
    %1226 = vmatprep.subr.mxu0 %v1193
    %1227 = vmatpush1.msra.mxu0 %v1192
    %1228 = vmatprep.subr.mxu0 0.0
    %1229 = vmatpush1.msra.mxu0 0.0
    %1230 = vmatprep.subr.mxu0 0.0
    %1231 = vmatpush1.msra.mxu0 0.0
    %1232 = vmatprep.subr.mxu0 0.0
    %1233 = vmatpush1.msra.mxu0 0.0
    %1234 = vmatprep.subr.mxu0 0.0
    %1235 = vmatpush1.msra.mxu0 0.0
    %1236 = vmatprep.subr.mxu0 0.0
    %1237 = vmatpush1.msra.mxu0 0.0
    %1238 = vmatprep.subr.mxu0 0.0
    %1239 = vmatpush1.msra.mxu0 0.0
    %1240 = vmatprep.subr.mxu0 0.0
    %1241 = vmatpush1.msra.mxu0 0.0
    %1242 = vmatprep.subr.mxu0 0.0
    %1243 = vmatpush1.msra.mxu0 0.0
    %1244 = vmatprep.subr.mxu0 0.0
    %1245 = vmatpush1.msra.mxu0 0.0
    %1246 = vmatprep.subr.mxu0 0.0
    %1247 = vmatpush1.msra.mxu0 0.0
    %1248 = vmatprep.subr.mxu0 0.0
    %1249 = vmatpush1.msra.mxu0 0.0
    %1250 = vmatprep.subr.mxu0 0.0
    %1251 = vmatpush1.msra.mxu0 0.0
    %1252 = vmatprep.subr.mxu0 0.0
    %1253 = vmatpush1.msra.mxu0 0.0
    %1254 = vmatprep.subr.mxu0 0.0
    %1255 = vmatpush1.msra.mxu0 0.0
    %1256 = vmatprep.subr.mxu0 0.0
    %1257 = vmatpush1.msra.mxu0 0.0
    %1258 = vmatprep.subr.mxu0 0.0
    %1259 = vmatpush1.msra.mxu0 0.0
    %1260 = vmatprep.mubr.f32.mxu0 0.0
    %1261 = vmatmul.mubr.f32.gmra.mrb[0].mxu0 %v1122
    %v1262 = vpop.f32.mrb[0].mxu0
    %v1263 = vadd.f32 0.0, %v1262
    %v1264 = vpop.f32.mrb[0].mxu0
    %v1265 = vadd.f32 0.0, %v1264
    %1266 = vdwg.mxu0
    %1267 = vmatprep.subr.mxu0 %v1135
    %1268 = vmatpush1.msra.mxu0 %v1134
    %1269 = vmatprep.subr.mxu0 %v1139
    %1270 = vmatpush1.msra.mxu0 %v1138
    %1271 = vmatprep.subr.mxu0 %v1143
    %1272 = vmatpush1.msra.mxu0 %v1142
    %1273 = vmatprep.subr.mxu0 %v1147
    %1274 = vmatpush1.msra.mxu0 %v1146
    %1275 = vmatprep.subr.mxu0 %v1151
    %1276 = vmatpush1.msra.mxu0 %v1150
    %1277 = vmatprep.subr.mxu0 %v1155
    %1278 = vmatpush1.msra.mxu0 %v1154
    %1279 = vmatprep.subr.mxu0 %v1159
    %1280 = vmatpush1.msra.mxu0 %v1158
    %1281 = vmatprep.subr.mxu0 %v1163
    %1282 = vmatpush1.msra.mxu0 %v1162
    %1283 = vmatprep.subr.mxu0 %v1167
    %1284 = vmatpush1.msra.mxu0 %v1166
    %1285 = vmatprep.subr.mxu0 %v1171
    %1286 = vmatpush1.msra.mxu0 %v1170
    %1287 = vmatprep.subr.mxu0 %v1175
    %1288 = vmatpush1.msra.mxu0 %v1174
    %1289 = vmatprep.subr.mxu0 %v1179
    %1290 = vmatpush1.msra.mxu0 %v1178
    %1291 = vmatprep.subr.mxu0 %v1183
    %1292 = vmatpush1.msra.mxu0 %v1182
    %1293 = vmatprep.subr.mxu0 %v1187
    %1294 = vmatpush1.msra.mxu0 %v1186
    %1295 = vmatprep.subr.mxu0 %v1191
    %1296 = vmatpush1.msra.mxu0 %v1190
    %1297 = vmatprep.subr.mxu0 %v1195
    %1298 = vmatpush1.msra.mxu0 %v1194
    %1299 = vmatprep.subr.mxu0 0.0
    %1300 = vmatpush1.msra.mxu0 0.0
    %1301 = vmatprep.subr.mxu0 0.0
    %1302 = vmatpush1.msra.mxu0 0.0
    %1303 = vmatprep.subr.mxu0 0.0
    %1304 = vmatpush1.msra.mxu0 0.0
    %1305 = vmatprep.subr.mxu0 0.0
    %1306 = vmatpush1.msra.mxu0 0.0
    %1307 = vmatprep.subr.mxu0 0.0
    %1308 = vmatpush1.msra.mxu0 0.0
    %1309 = vmatprep.subr.mxu0 0.0
    %1310 = vmatpush1.msra.mxu0 0.0
    %1311 = vmatprep.subr.mxu0 0.0
    %1312 = vmatpush1.msra.mxu0 0.0
    %1313 = vmatprep.subr.mxu0 0.0
    %1314 = vmatpush1.msra.mxu0 0.0
    %1315 = vmatprep.subr.mxu0 0.0
    %1316 = vmatpush1.msra.mxu0 0.0
    %1317 = vmatprep.subr.mxu0 0.0
    %1318 = vmatpush1.msra.mxu0 0.0
    %1319 = vmatprep.subr.mxu0 0.0
    %1320 = vmatpush1.msra.mxu0 0.0
    %1321 = vmatprep.subr.mxu0 0.0
    %1322 = vmatpush1.msra.mxu0 0.0
    %1323 = vmatprep.subr.mxu0 0.0
    %1324 = vmatpush1.msra.mxu0 0.0
    %1325 = vmatprep.subr.mxu0 0.0
    %1326 = vmatpush1.msra.mxu0 0.0
    %1327 = vmatprep.subr.mxu0 0.0
    %1328 = vmatpush1.msra.mxu0 0.0
    %1329 = vmatprep.subr.mxu0 0.0
    %1330 = vmatpush1.msra.mxu0 0.0
    %1331 = vmatprep.mubr.f32.mxu0 0.0
    %1332 = vmatmul.mubr.f32.gmra.mrb[0].mxu0 %v1122
    %v1333 = vpop.f32.mrb[0].mxu0
    %v1334 = vadd.f32 0.0, %v1333
    %v1335 = vpop.f32.mrb[0].mxu0
    %v1336 = vadd.f32 0.0, %v1335
    %1337 = vdwg.mxu0
    %v1338 = vadd.f32 %v1128, %v1263
    %v1339 = vadd.f32 %v1129, %v1265
    %v1340 = vadd.f32 %v1130, %v1334
    %v1341 = vadd.f32 %v1131, %v1336
    %v1342 = vxor.u32 %v1338, 2147483648
    %v1343 = vmul.f32 %v1342, 1.442695
    %v1344 = vpow.pop %v1343
    %v1345 = vadd.f32 %v1344, 1.0
    %v1346 = vrcp.pop %v1345
    %v1347 = vmul.f32 1.0, %v1346
    %v1348 = vxor.u32 %v1339, 2147483648
    %v1349 = vmul.f32 %v1348, 1.442695
    %v1350 = vpow.pop %v1349
    %v1351 = vadd.f32 %v1350, 1.0
    %v1352 = vrcp.pop %v1351
    %v1353 = vmul.f32 1.0, %v1352
    %v1354 = vtanh.pop %v1340
    %v1355 = vxor.u32 %v1341, 2147483648
    %v1356 = vmul.f32 %v1355, 1.442695
    %v1357 = vpow.pop %v1356
    %v1358 = vadd.f32 %v1357, 1.0
    %v1359 = vrcp.pop %v1358
    %v1360 = vmul.f32 1.0, %v1359
    %v1361 = vmul.f32 %v1353, %v1120
    %v1362 = vmul.f32 %v1347, %v1354
    %v1363 = vadd.f32 %v1361, %v1362
    %v1364 = vtanh.pop %v1363
    %v1365 = vmul.f32 %v1360, %v1364
    %s1366 = scalar_lea.vmem [#allocation2], 24
    %1367 = vst [vmem:[%s1366] sm:$0xff] %v1365
    %s1368 = smul.u32 4, 4
    %s1369 = smul.addr %s1368, 8
    %s1370 = scalar_lea.vmem [#allocation3], %s1369
    %v1371 = vld [vmem:[%s1370] sm:$0xff]
    %v1372 = vld [vmem:[%s1370 + $0x8] sm:$0xff]
    %v1373 = vld [vmem:[%s1370 + $0x10] sm:$0xff]
    %v1374 = vld [vmem:[%s1370 + $0x18] sm:$0xff]
    %v1375 = vld [vmem:[#allocation6] sm:$0xff]
    %v1376 = vld [vmem:[#allocation6 + $0x8] sm:$0xff]
    %v1377 = vld [vmem:[#allocation6 + $0x10] sm:$0xff]
    %v1378 = vld [vmem:[#allocation6 + $0x18] sm:$0xff]
    %v1379 = vld [vmem:[#allocation6 + $0x20] sm:$0xff]
    %v1380 = vld [vmem:[#allocation6 + $0x28] sm:$0xff]
    %v1381 = vld [vmem:[#allocation6 + $0x30] sm:$0xff]
    %v1382 = vld [vmem:[#allocation6 + $0x38] sm:$0xff]
    %v1383 = vld [vmem:[#allocation6 + $0x40] sm:$0xff]
    %v1384 = vld [vmem:[#allocation6 + $0x48] sm:$0xff]
    %v1385 = vld [vmem:[#allocation6 + $0x50] sm:$0xff]
    %v1386 = vld [vmem:[#allocation6 + $0x58] sm:$0xff]
    %v1387 = vld [vmem:[#allocation6 + $0x60] sm:$0xff]
    %v1388 = vld [vmem:[#allocation6 + $0x68] sm:$0xff]
    %v1389 = vld [vmem:[#allocation6 + $0x70] sm:$0xff]
    %v1390 = vld [vmem:[#allocation6 + $0x78] sm:$0xff]
    %v1391 = vld [vmem:[#allocation6 + $0x80] sm:$0xff]
    %v1392 = vld [vmem:[#allocation6 + $0x88] sm:$0xff]
    %v1393 = vld [vmem:[#allocation6 + $0x90] sm:$0xff]
    %v1394 = vld [vmem:[#allocation6 + $0x98] sm:$0xff]
    %v1395 = vld [vmem:[#allocation6 + $0xa0] sm:$0xff]
    %v1396 = vld [vmem:[#allocation6 + $0xa8] sm:$0xff]
    %v1397 = vld [vmem:[#allocation6 + $0xb0] sm:$0xff]
    %v1398 = vld [vmem:[#allocation6 + $0xb8] sm:$0xff]
    %v1399 = vld [vmem:[#allocation6 + $0xc0] sm:$0xff]
    %v1400 = vld [vmem:[#allocation6 + $0xc8] sm:$0xff]
    %v1401 = vld [vmem:[#allocation6 + $0xd0] sm:$0xff]
    %v1402 = vld [vmem:[#allocation6 + $0xd8] sm:$0xff]
    %v1403 = vld [vmem:[#allocation6 + $0xe0] sm:$0xff]
    %v1404 = vld [vmem:[#allocation6 + $0xe8] sm:$0xff]
    %v1405 = vld [vmem:[#allocation6 + $0xf0] sm:$0xff]
    %v1406 = vld [vmem:[#allocation6 + $0xf8] sm:$0xff]
    %v1407 = vld [vmem:[#allocation6 + $0x100] sm:$0xff]
    %v1408 = vld [vmem:[#allocation6 + $0x108] sm:$0xff]
    %v1409 = vld [vmem:[#allocation6 + $0x110] sm:$0xff]
    %v1410 = vld [vmem:[#allocation6 + $0x118] sm:$0xff]
    %v1411 = vld [vmem:[#allocation6 + $0x120] sm:$0xff]
    %v1412 = vld [vmem:[#allocation6 + $0x128] sm:$0xff]
    %v1413 = vld [vmem:[#allocation6 + $0x130] sm:$0xff]
    %v1414 = vld [vmem:[#allocation6 + $0x138] sm:$0xff]
    %v1415 = vld [vmem:[#allocation6 + $0x140] sm:$0xff]
    %v1416 = vld [vmem:[#allocation6 + $0x148] sm:$0xff]
    %v1417 = vld [vmem:[#allocation6 + $0x150] sm:$0xff]
    %v1418 = vld [vmem:[#allocation6 + $0x158] sm:$0xff]
    %v1419 = vld [vmem:[#allocation6 + $0x160] sm:$0xff]
    %v1420 = vld [vmem:[#allocation6 + $0x168] sm:$0xff]
    %v1421 = vld [vmem:[#allocation6 + $0x170] sm:$0xff]
    %v1422 = vld [vmem:[#allocation6 + $0x178] sm:$0xff]
    %v1423 = vld [vmem:[#allocation6 + $0x180] sm:$0xff]
    %v1424 = vld [vmem:[#allocation6 + $0x188] sm:$0xff]
    %v1425 = vld [vmem:[#allocation6 + $0x190] sm:$0xff]
    %v1426 = vld [vmem:[#allocation6 + $0x198] sm:$0xff]
    %v1427 = vld [vmem:[#allocation6 + $0x1a0] sm:$0xff]
    %v1428 = vld [vmem:[#allocation6 + $0x1a8] sm:$0xff]
    %v1429 = vld [vmem:[#allocation6 + $0x1b0] sm:$0xff]
    %v1430 = vld [vmem:[#allocation6 + $0x1b8] sm:$0xff]
    %v1431 = vld [vmem:[#allocation6 + $0x1c0] sm:$0xff]
    %v1432 = vld [vmem:[#allocation6 + $0x1c8] sm:$0xff]
    %v1433 = vld [vmem:[#allocation6 + $0x1d0] sm:$0xff]
    %v1434 = vld [vmem:[#allocation6 + $0x1d8] sm:$0xff]
    %v1435 = vld [vmem:[#allocation6 + $0x1e0] sm:$0xff]
    %v1436 = vld [vmem:[#allocation6 + $0x1e8] sm:$0xff]
    %v1437 = vld [vmem:[#allocation6 + $0x1f0] sm:$0xff]
    %v1438 = vld [vmem:[#allocation6 + $0x1f8] sm:$0xff]
    %1439 = vmatprep.subr.mxu0 %v1376
    %1440 = vmatpush1.msra.mxu0 %v1375
    %1441 = vmatprep.subr.mxu0 %v1380
    %1442 = vmatpush1.msra.mxu0 %v1379
    %1443 = vmatprep.subr.mxu0 %v1384
    %1444 = vmatpush1.msra.mxu0 %v1383
    %1445 = vmatprep.subr.mxu0 %v1388
    %1446 = vmatpush1.msra.mxu0 %v1387
    %1447 = vmatprep.subr.mxu0 %v1392
    %1448 = vmatpush1.msra.mxu0 %v1391
    %1449 = vmatprep.subr.mxu0 %v1396
    %1450 = vmatpush1.msra.mxu0 %v1395
    %1451 = vmatprep.subr.mxu0 %v1400
    %1452 = vmatpush1.msra.mxu0 %v1399
    %1453 = vmatprep.subr.mxu0 %v1404
    %1454 = vmatpush1.msra.mxu0 %v1403
    %1455 = vmatprep.subr.mxu0 %v1408
    %1456 = vmatpush1.msra.mxu0 %v1407
    %1457 = vmatprep.subr.mxu0 %v1412
    %1458 = vmatpush1.msra.mxu0 %v1411
    %1459 = vmatprep.subr.mxu0 %v1416
    %1460 = vmatpush1.msra.mxu0 %v1415
    %1461 = vmatprep.subr.mxu0 %v1420
    %1462 = vmatpush1.msra.mxu0 %v1419
    %1463 = vmatprep.subr.mxu0 %v1424
    %1464 = vmatpush1.msra.mxu0 %v1423
    %1465 = vmatprep.subr.mxu0 %v1428
    %1466 = vmatpush1.msra.mxu0 %v1427
    %1467 = vmatprep.subr.mxu0 %v1432
    %1468 = vmatpush1.msra.mxu0 %v1431
    %1469 = vmatprep.subr.mxu0 %v1436
    %1470 = vmatpush1.msra.mxu0 %v1435
    %1471 = vmatprep.subr.mxu0 0.0
    %1472 = vmatpush1.msra.mxu0 0.0
    %1473 = vmatprep.subr.mxu0 0.0
    %1474 = vmatpush1.msra.mxu0 0.0
    %1475 = vmatprep.subr.mxu0 0.0
    %1476 = vmatpush1.msra.mxu0 0.0
    %1477 = vmatprep.subr.mxu0 0.0
    %1478 = vmatpush1.msra.mxu0 0.0
    %1479 = vmatprep.subr.mxu0 0.0
    %1480 = vmatpush1.msra.mxu0 0.0
    %1481 = vmatprep.subr.mxu0 0.0
    %1482 = vmatpush1.msra.mxu0 0.0
    %1483 = vmatprep.subr.mxu0 0.0
    %1484 = vmatpush1.msra.mxu0 0.0
    %1485 = vmatprep.subr.mxu0 0.0
    %1486 = vmatpush1.msra.mxu0 0.0
    %1487 = vmatprep.subr.mxu0 0.0
    %1488 = vmatpush1.msra.mxu0 0.0
    %1489 = vmatprep.subr.mxu0 0.0
    %1490 = vmatpush1.msra.mxu0 0.0
    %1491 = vmatprep.subr.mxu0 0.0
    %1492 = vmatpush1.msra.mxu0 0.0
    %1493 = vmatprep.subr.mxu0 0.0
    %1494 = vmatpush1.msra.mxu0 0.0
    %1495 = vmatprep.subr.mxu0 0.0
    %1496 = vmatpush1.msra.mxu0 0.0
    %1497 = vmatprep.subr.mxu0 0.0
    %1498 = vmatpush1.msra.mxu0 0.0
    %1499 = vmatprep.subr.mxu0 0.0
    %1500 = vmatpush1.msra.mxu0 0.0
    %1501 = vmatprep.subr.mxu0 0.0
    %1502 = vmatpush1.msra.mxu0 0.0
    %1503 = vmatprep.mubr.f32.mxu0 0.0
    %1504 = vmatmul.mubr.f32.gmra.mrb[0].mxu0 %v1365
    %v1505 = vpop.f32.mrb[0].mxu0
    %v1506 = vadd.f32 0.0, %v1505
    %v1507 = vpop.f32.mrb[0].mxu0
    %v1508 = vadd.f32 0.0, %v1507
    %1509 = vdwg.mxu0
    %1510 = vmatprep.subr.mxu0 %v1378
    %1511 = vmatpush1.msra.mxu0 %v1377
    %1512 = vmatprep.subr.mxu0 %v1382
    %1513 = vmatpush1.msra.mxu0 %v1381
    %1514 = vmatprep.subr.mxu0 %v1386
    %1515 = vmatpush1.msra.mxu0 %v1385
    %1516 = vmatprep.subr.mxu0 %v1390
    %1517 = vmatpush1.msra.mxu0 %v1389
    %1518 = vmatprep.subr.mxu0 %v1394
    %1519 = vmatpush1.msra.mxu0 %v1393
    %1520 = vmatprep.subr.mxu0 %v1398
    %1521 = vmatpush1.msra.mxu0 %v1397
    %1522 = vmatprep.subr.mxu0 %v1402
    %1523 = vmatpush1.msra.mxu0 %v1401
    %1524 = vmatprep.subr.mxu0 %v1406
    %1525 = vmatpush1.msra.mxu0 %v1405
    %1526 = vmatprep.subr.mxu0 %v1410
    %1527 = vmatpush1.msra.mxu0 %v1409
    %1528 = vmatprep.subr.mxu0 %v1414
    %1529 = vmatpush1.msra.mxu0 %v1413
    %1530 = vmatprep.subr.mxu0 %v1418
    %1531 = vmatpush1.msra.mxu0 %v1417
    %1532 = vmatprep.subr.mxu0 %v1422
    %1533 = vmatpush1.msra.mxu0 %v1421
    %1534 = vmatprep.subr.mxu0 %v1426
    %1535 = vmatpush1.msra.mxu0 %v1425
    %1536 = vmatprep.subr.mxu0 %v1430
    %1537 = vmatpush1.msra.mxu0 %v1429
    %1538 = vmatprep.subr.mxu0 %v1434
    %1539 = vmatpush1.msra.mxu0 %v1433
    %1540 = vmatprep.subr.mxu0 %v1438
    %1541 = vmatpush1.msra.mxu0 %v1437
    %1542 = vmatprep.subr.mxu0 0.0
    %1543 = vmatpush1.msra.mxu0 0.0
    %1544 = vmatprep.subr.mxu0 0.0
    %1545 = vmatpush1.msra.mxu0 0.0
    %1546 = vmatprep.subr.mxu0 0.0
    %1547 = vmatpush1.msra.mxu0 0.0
    %1548 = vmatprep.subr.mxu0 0.0
    %1549 = vmatpush1.msra.mxu0 0.0
    %1550 = vmatprep.subr.mxu0 0.0
    %1551 = vmatpush1.msra.mxu0 0.0
    %1552 = vmatprep.subr.mxu0 0.0
    %1553 = vmatpush1.msra.mxu0 0.0
    %1554 = vmatprep.subr.mxu0 0.0
    %1555 = vmatpush1.msra.mxu0 0.0
    %1556 = vmatprep.subr.mxu0 0.0
    %1557 = vmatpush1.msra.mxu0 0.0
    %1558 = vmatprep.subr.mxu0 0.0
    %1559 = vmatpush1.msra.mxu0 0.0
    %1560 = vmatprep.subr.mxu0 0.0
    %1561 = vmatpush1.msra.mxu0 0.0
    %1562 = vmatprep.subr.mxu0 0.0
    %1563 = vmatpush1.msra.mxu0 0.0
    %1564 = vmatprep.subr.mxu0 0.0
    %1565 = vmatpush1.msra.mxu0 0.0
    %1566 = vmatprep.subr.mxu0 0.0
    %1567 = vmatpush1.msra.mxu0 0.0
    %1568 = vmatprep.subr.mxu0 0.0
    %1569 = vmatpush1.msra.mxu0 0.0
    %1570 = vmatprep.subr.mxu0 0.0
    %1571 = vmatpush1.msra.mxu0 0.0
    %1572 = vmatprep.subr.mxu0 0.0
    %1573 = vmatpush1.msra.mxu0 0.0
    %1574 = vmatprep.mubr.f32.mxu0 0.0
    %1575 = vmatmul.mubr.f32.gmra.mrb[0].mxu0 %v1365
    %v1576 = vpop.f32.mrb[0].mxu0
    %v1577 = vadd.f32 0.0, %v1576
    %v1578 = vpop.f32.mrb[0].mxu0
    %v1579 = vadd.f32 0.0, %v1578
    %1580 = vdwg.mxu0
    %v1581 = vadd.f32 %v1371, %v1506
    %v1582 = vadd.f32 %v1372, %v1508
    %v1583 = vadd.f32 %v1373, %v1577
    %v1584 = vadd.f32 %v1374, %v1579
    %v1585 = vxor.u32 %v1581, 2147483648
    %v1586 = vmul.f32 %v1585, 1.442695
    %v1587 = vpow.pop %v1586
    %v1588 = vadd.f32 %v1587, 1.0
    %v1589 = vrcp.pop %v1588
    %v1590 = vmul.f32 1.0, %v1589
    %v1591 = vxor.u32 %v1582, 2147483648
    %v1592 = vmul.f32 %v1591, 1.442695
    %v1593 = vpow.pop %v1592
    %v1594 = vadd.f32 %v1593, 1.0
    %v1595 = vrcp.pop %v1594
    %v1596 = vmul.f32 1.0, %v1595
    %v1597 = vtanh.pop %v1583
    %v1598 = vxor.u32 %v1584, 2147483648
    %v1599 = vmul.f32 %v1598, 1.442695
    %v1600 = vpow.pop %v1599
    %v1601 = vadd.f32 %v1600, 1.0
    %v1602 = vrcp.pop %v1601
    %v1603 = vmul.f32 1.0, %v1602
    %v1604 = vmul.f32 %v1596, %v1363
    %v1605 = vmul.f32 %v1590, %v1597
    %v1606 = vadd.f32 %v1604, %v1605
    %v1607 = vtanh.pop %v1606
    %v1608 = vmul.f32 %v1603, %v1607
    %s1609 = scalar_lea.vmem [#allocation2], 32
    %1610 = vst [vmem:[%s1609] sm:$0xff] %v1608
    %s1611 = smul.u32 5, 4
    %s1612 = smul.addr %s1611, 8
    %s1613 = scalar_lea.vmem [#allocation3], %s1612
    %v1614 = vld [vmem:[%s1613] sm:$0xff]
    %v1615 = vld [vmem:[%s1613 + $0x8] sm:$0xff]
    %v1616 = vld [vmem:[%s1613 + $0x10] sm:$0xff]
    %v1617 = vld [vmem:[%s1613 + $0x18] sm:$0xff]
    %v1618 = vld [vmem:[#allocation6] sm:$0xff]
    %v1619 = vld [vmem:[#allocation6 + $0x8] sm:$0xff]
    %v1620 = vld [vmem:[#allocation6 + $0x10] sm:$0xff]
    %v1621 = vld [vmem:[#allocation6 + $0x18] sm:$0xff]
    %v1622 = vld [vmem:[#allocation6 + $0x20] sm:$0xff]
    %v1623 = vld [vmem:[#allocation6 + $0x28] sm:$0xff]
    %v1624 = vld [vmem:[#allocation6 + $0x30] sm:$0xff]
    %v1625 = vld [vmem:[#allocation6 + $0x38] sm:$0xff]
    %v1626 = vld [vmem:[#allocation6 + $0x40] sm:$0xff]
    %v1627 = vld [vmem:[#allocation6 + $0x48] sm:$0xff]
    %v1628 = vld [vmem:[#allocation6 + $0x50] sm:$0xff]
    %v1629 = vld [vmem:[#allocation6 + $0x58] sm:$0xff]
    %v1630 = vld [vmem:[#allocation6 + $0x60] sm:$0xff]
    %v1631 = vld [vmem:[#allocation6 + $0x68] sm:$0xff]
    %v1632 = vld [vmem:[#allocation6 + $0x70] sm:$0xff]
    %v1633 = vld [vmem:[#allocation6 + $0x78] sm:$0xff]
    %v1634 = vld [vmem:[#allocation6 + $0x80] sm:$0xff]
    %v1635 = vld [vmem:[#allocation6 + $0x88] sm:$0xff]
    %v1636 = vld [vmem:[#allocation6 + $0x90] sm:$0xff]
    %v1637 = vld [vmem:[#allocation6 + $0x98] sm:$0xff]
    %v1638 = vld [vmem:[#allocation6 + $0xa0] sm:$0xff]
    %v1639 = vld [vmem:[#allocation6 + $0xa8] sm:$0xff]
    %v1640 = vld [vmem:[#allocation6 + $0xb0] sm:$0xff]
    %v1641 = vld [vmem:[#allocation6 + $0xb8] sm:$0xff]
    %v1642 = vld [vmem:[#allocation6 + $0xc0] sm:$0xff]
    %v1643 = vld [vmem:[#allocation6 + $0xc8] sm:$0xff]
    %v1644 = vld [vmem:[#allocation6 + $0xd0] sm:$0xff]
    %v1645 = vld [vmem:[#allocation6 + $0xd8] sm:$0xff]
    %v1646 = vld [vmem:[#allocation6 + $0xe0] sm:$0xff]
    %v1647 = vld [vmem:[#allocation6 + $0xe8] sm:$0xff]
    %v1648 = vld [vmem:[#allocation6 + $0xf0] sm:$0xff]
    %v1649 = vld [vmem:[#allocation6 + $0xf8] sm:$0xff]
    %v1650 = vld [vmem:[#allocation6 + $0x100] sm:$0xff]
    %v1651 = vld [vmem:[#allocation6 + $0x108] sm:$0xff]
    %v1652 = vld [vmem:[#allocation6 + $0x110] sm:$0xff]
    %v1653 = vld [vmem:[#allocation6 + $0x118] sm:$0xff]
    %v1654 = vld [vmem:[#allocation6 + $0x120] sm:$0xff]
    %v1655 = vld [vmem:[#allocation6 + $0x128] sm:$0xff]
    %v1656 = vld [vmem:[#allocation6 + $0x130] sm:$0xff]
    %v1657 = vld [vmem:[#allocation6 + $0x138] sm:$0xff]
    %v1658 = vld [vmem:[#allocation6 + $0x140] sm:$0xff]
    %v1659 = vld [vmem:[#allocation6 + $0x148] sm:$0xff]
    %v1660 = vld [vmem:[#allocation6 + $0x150] sm:$0xff]
    %v1661 = vld [vmem:[#allocation6 + $0x158] sm:$0xff]
    %v1662 = vld [vmem:[#allocation6 + $0x160] sm:$0xff]
    %v1663 = vld [vmem:[#allocation6 + $0x168] sm:$0xff]
    %v1664 = vld [vmem:[#allocation6 + $0x170] sm:$0xff]
    %v1665 = vld [vmem:[#allocation6 + $0x178] sm:$0xff]
    %v1666 = vld [vmem:[#allocation6 + $0x180] sm:$0xff]
    %v1667 = vld [vmem:[#allocation6 + $0x188] sm:$0xff]
    %v1668 = vld [vmem:[#allocation6 + $0x190] sm:$0xff]
    %v1669 = vld [vmem:[#allocation6 + $0x198] sm:$0xff]
    %v1670 = vld [vmem:[#allocation6 + $0x1a0] sm:$0xff]
    %v1671 = vld [vmem:[#allocation6 + $0x1a8] sm:$0xff]
    %v1672 = vld [vmem:[#allocation6 + $0x1b0] sm:$0xff]
    %v1673 = vld [vmem:[#allocation6 + $0x1b8] sm:$0xff]
    %v1674 = vld [vmem:[#allocation6 + $0x1c0] sm:$0xff]
    %v1675 = vld [vmem:[#allocation6 + $0x1c8] sm:$0xff]
    %v1676 = vld [vmem:[#allocation6 + $0x1d0] sm:$0xff]
    %v1677 = vld [vmem:[#allocation6 + $0x1d8] sm:$0xff]
    %v1678 = vld [vmem:[#allocation6 + $0x1e0] sm:$0xff]
    %v1679 = vld [vmem:[#allocation6 + $0x1e8] sm:$0xff]
    %v1680 = vld [vmem:[#allocation6 + $0x1f0] sm:$0xff]
    %v1681 = vld [vmem:[#allocation6 + $0x1f8] sm:$0xff]
    %1682 = vmatprep.subr.mxu0 %v1619
    %1683 = vmatpush1.msra.mxu0 %v1618
    %1684 = vmatprep.subr.mxu0 %v1623
    %1685 = vmatpush1.msra.mxu0 %v1622
    %1686 = vmatprep.subr.mxu0 %v1627
    %1687 = vmatpush1.msra.mxu0 %v1626
    %1688 = vmatprep.subr.mxu0 %v1631
    %1689 = vmatpush1.msra.mxu0 %v1630
    %1690 = vmatprep.subr.mxu0 %v1635
    %1691 = vmatpush1.msra.mxu0 %v1634
    %1692 = vmatprep.subr.mxu0 %v1639
    %1693 = vmatpush1.msra.mxu0 %v1638
    %1694 = vmatprep.subr.mxu0 %v1643
    %1695 = vmatpush1.msra.mxu0 %v1642
    %1696 = vmatprep.subr.mxu0 %v1647
    %1697 = vmatpush1.msra.mxu0 %v1646
    %1698 = vmatprep.subr.mxu0 %v1651
    %1699 = vmatpush1.msra.mxu0 %v1650
    %1700 = vmatprep.subr.mxu0 %v1655
    %1701 = vmatpush1.msra.mxu0 %v1654
    %1702 = vmatprep.subr.mxu0 %v1659
    %1703 = vmatpush1.msra.mxu0 %v1658
    %1704 = vmatprep.subr.mxu0 %v1663
    %1705 = vmatpush1.msra.mxu0 %v1662
    %1706 = vmatprep.subr.mxu0 %v1667
    %1707 = vmatpush1.msra.mxu0 %v1666
    %1708 = vmatprep.subr.mxu0 %v1671
    %1709 = vmatpush1.msra.mxu0 %v1670
    %1710 = vmatprep.subr.mxu0 %v1675
    %1711 = vmatpush1.msra.mxu0 %v1674
    %1712 = vmatprep.subr.mxu0 %v1679
    %1713 = vmatpush1.msra.mxu0 %v1678
    %1714 = vmatprep.subr.mxu0 0.0
    %1715 = vmatpush1.msra.mxu0 0.0
    %1716 = vmatprep.subr.mxu0 0.0
    %1717 = vmatpush1.msra.mxu0 0.0
    %1718 = vmatprep.subr.mxu0 0.0
    %1719 = vmatpush1.msra.mxu0 0.0
    %1720 = vmatprep.subr.mxu0 0.0
    %1721 = vmatpush1.msra.mxu0 0.0
    %1722 = vmatprep.subr.mxu0 0.0
    %1723 = vmatpush1.msra.mxu0 0.0
    %1724 = vmatprep.subr.mxu0 0.0
    %1725 = vmatpush1.msra.mxu0 0.0
    %1726 = vmatprep.subr.mxu0 0.0
    %1727 = vmatpush1.msra.mxu0 0.0
    %1728 = vmatprep.subr.mxu0 0.0
    %1729 = vmatpush1.msra.mxu0 0.0
    %1730 = vmatprep.subr.mxu0 0.0
    %1731 = vmatpush1.msra.mxu0 0.0
    %1732 = vmatprep.subr.mxu0 0.0
    %1733 = vmatpush1.msra.mxu0 0.0
    %1734 = vmatprep.subr.mxu0 0.0
    %1735 = vmatpush1.msra.mxu0 0.0
    %1736 = vmatprep.subr.mxu0 0.0
    %1737 = vmatpush1.msra.mxu0 0.0
    %1738 = vmatprep.subr.mxu0 0.0
    %1739 = vmatpush1.msra.mxu0 0.0
    %1740 = vmatprep.subr.mxu0 0.0
    %1741 = vmatpush1.msra.mxu0 0.0
    %1742 = vmatprep.subr.mxu0 0.0
    %1743 = vmatpush1.msra.mxu0 0.0
    %1744 = vmatprep.subr.mxu0 0.0
    %1745 = vmatpush1.msra.mxu0 0.0
    %1746 = vmatprep.mubr.f32.mxu0 0.0
    %1747 = vmatmul.mubr.f32.gmra.mrb[0].mxu0 %v1608
    %v1748 = vpop.f32.mrb[0].mxu0
    %v1749 = vadd.f32 0.0, %v1748
    %v1750 = vpop.f32.mrb[0].mxu0
    %v1751 = vadd.f32 0.0, %v1750
    %1752 = vdwg.mxu0
    %1753 = vmatprep.subr.mxu0 %v1621
    %1754 = vmatpush1.msra.mxu0 %v1620
    %1755 = vmatprep.subr.mxu0 %v1625
    %1756 = vmatpush1.msra.mxu0 %v1624
    %1757 = vmatprep.subr.mxu0 %v1629
    %1758 = vmatpush1.msra.mxu0 %v1628
    %1759 = vmatprep.subr.mxu0 %v1633
    %1760 = vmatpush1.msra.mxu0 %v1632
    %1761 = vmatprep.subr.mxu0 %v1637
    %1762 = vmatpush1.msra.mxu0 %v1636
    %1763 = vmatprep.subr.mxu0 %v1641
    %1764 = vmatpush1.msra.mxu0 %v1640
    %1765 = vmatprep.subr.mxu0 %v1645
    %1766 = vmatpush1.msra.mxu0 %v1644
    %1767 = vmatprep.subr.mxu0 %v1649
    %1768 = vmatpush1.msra.mxu0 %v1648
    %1769 = vmatprep.subr.mxu0 %v1653
    %1770 = vmatpush1.msra.mxu0 %v1652
    %1771 = vmatprep.subr.mxu0 %v1657
    %1772 = vmatpush1.msra.mxu0 %v1656
    %1773 = vmatprep.subr.mxu0 %v1661
    %1774 = vmatpush1.msra.mxu0 %v1660
    %1775 = vmatprep.subr.mxu0 %v1665
    %1776 = vmatpush1.msra.mxu0 %v1664
    %1777 = vmatprep.subr.mxu0 %v1669
    %1778 = vmatpush1.msra.mxu0 %v1668
    %1779 = vmatprep.subr.mxu0 %v1673
    %1780 = vmatpush1.msra.mxu0 %v1672
    %1781 = vmatprep.subr.mxu0 %v1677
    %1782 = vmatpush1.msra.mxu0 %v1676
    %1783 = vmatprep.subr.mxu0 %v1681
    %1784 = vmatpush1.msra.mxu0 %v1680
    %1785 = vmatprep.subr.mxu0 0.0
    %1786 = vmatpush1.msra.mxu0 0.0
    %1787 = vmatprep.subr.mxu0 0.0
    %1788 = vmatpush1.msra.mxu0 0.0
    %1789 = vmatprep.subr.mxu0 0.0
    %1790 = vmatpush1.msra.mxu0 0.0
    %1791 = vmatprep.subr.mxu0 0.0
    %1792 = vmatpush1.msra.mxu0 0.0
    %1793 = vmatprep.subr.mxu0 0.0
    %1794 = vmatpush1.msra.mxu0 0.0
    %1795 = vmatprep.subr.mxu0 0.0
    %1796 = vmatpush1.msra.mxu0 0.0
    %1797 = vmatprep.subr.mxu0 0.0
    %1798 = vmatpush1.msra.mxu0 0.0
    %1799 = vmatprep.subr.mxu0 0.0
    %1800 = vmatpush1.msra.mxu0 0.0
    %1801 = vmatprep.subr.mxu0 0.0
    %1802 = vmatpush1.msra.mxu0 0.0
    %1803 = vmatprep.subr.mxu0 0.0
    %1804 = vmatpush1.msra.mxu0 0.0
    %1805 = vmatprep.subr.mxu0 0.0
    %1806 = vmatpush1.msra.mxu0 0.0
    %1807 = vmatprep.subr.mxu0 0.0
    %1808 = vmatpush1.msra.mxu0 0.0
    %1809 = vmatprep.subr.mxu0 0.0
    %1810 = vmatpush1.msra.mxu0 0.0
    %1811 = vmatprep.subr.mxu0 0.0
    %1812 = vmatpush1.msra.mxu0 0.0
    %1813 = vmatprep.subr.mxu0 0.0
    %1814 = vmatpush1.msra.mxu0 0.0
    %1815 = vmatprep.subr.mxu0 0.0
    %1816 = vmatpush1.msra.mxu0 0.0
    %1817 = vmatprep.mubr.f32.mxu0 0.0
    %1818 = vmatmul.mubr.f32.gmra.mrb[0].mxu0 %v1608
    %v1819 = vpop.f32.mrb[0].mxu0
    %v1820 = vadd.f32 0.0, %v1819
    %v1821 = vpop.f32.mrb[0].mxu0
    %v1822 = vadd.f32 0.0, %v1821
    %1823 = vdwg.mxu0
    %v1824 = vadd.f32 %v1614, %v1749
    %v1825 = vadd.f32 %v1615, %v1751
    %v1826 = vadd.f32 %v1616, %v1820
    %v1827 = vadd.f32 %v1617, %v1822
    %v1828 = vxor.u32 %v1824, 2147483648
    %v1829 = vmul.f32 %v1828, 1.442695
    %v1830 = vpow.pop %v1829
    %v1831 = vadd.f32 %v1830, 1.0
    %v1832 = vrcp.pop %v1831
    %v1833 = vmul.f32 1.0, %v1832
    %v1834 = vxor.u32 %v1825, 2147483648
    %v1835 = vmul.f32 %v1834, 1.442695
    %v1836 = vpow.pop %v1835
    %v1837 = vadd.f32 %v1836, 1.0
    %v1838 = vrcp.pop %v1837
    %v1839 = vmul.f32 1.0, %v1838
    %v1840 = vtanh.pop %v1826
    %v1841 = vxor.u32 %v1827, 2147483648
    %v1842 = vmul.f32 %v1841, 1.442695
    %v1843 = vpow.pop %v1842
    %v1844 = vadd.f32 %v1843, 1.0
    %v1845 = vrcp.pop %v1844
    %v1846 = vmul.f32 1.0, %v1845
    %v1847 = vmul.f32 %v1839, %v1606
    %v1848 = vmul.f32 %v1833, %v1840
    %v1849 = vadd.f32 %v1847, %v1848
    %v1850 = vtanh.pop %v1849
    %v1851 = vmul.f32 %v1846, %v1850
    %s1852 = scalar_lea.vmem [#allocation2], 40
    %1853 = vst [vmem:[%s1852] sm:$0xff] %v1851
    %s1854 = smul.u32 6, 4
    %s1855 = smul.addr %s1854, 8
    %s1856 = scalar_lea.vmem [#allocation3], %s1855
    %v1857 = vld [vmem:[%s1856] sm:$0xff]
    %v1858 = vld [vmem:[%s1856 + $0x8] sm:$0xff]
    %v1859 = vld [vmem:[%s1856 + $0x10] sm:$0xff]
    %v1860 = vld [vmem:[%s1856 + $0x18] sm:$0xff]
    %v1861 = vld [vmem:[#allocation6] sm:$0xff]
    %v1862 = vld [vmem:[#allocation6 + $0x8] sm:$0xff]
    %v1863 = vld [vmem:[#allocation6 + $0x10] sm:$0xff]
    %v1864 = vld [vmem:[#allocation6 + $0x18] sm:$0xff]
    %v1865 = vld [vmem:[#allocation6 + $0x20] sm:$0xff]
    %v1866 = vld [vmem:[#allocation6 + $0x28] sm:$0xff]
    %v1867 = vld [vmem:[#allocation6 + $0x30] sm:$0xff]
    %v1868 = vld [vmem:[#allocation6 + $0x38] sm:$0xff]
    %v1869 = vld [vmem:[#allocation6 + $0x40] sm:$0xff]
    %v1870 = vld [vmem:[#allocation6 + $0x48] sm:$0xff]
    %v1871 = vld [vmem:[#allocation6 + $0x50] sm:$0xff]
    %v1872 = vld [vmem:[#allocation6 + $0x58] sm:$0xff]
    %v1873 = vld [vmem:[#allocation6 + $0x60] sm:$0xff]
    %v1874 = vld [vmem:[#allocation6 + $0x68] sm:$0xff]
    %v1875 = vld [vmem:[#allocation6 + $0x70] sm:$0xff]
    %v1876 = vld [vmem:[#allocation6 + $0x78] sm:$0xff]
    %v1877 = vld [vmem:[#allocation6 + $0x80] sm:$0xff]
    %v1878 = vld [vmem:[#allocation6 + $0x88] sm:$0xff]
    %v1879 = vld [vmem:[#allocation6 + $0x90] sm:$0xff]
    %v1880 = vld [vmem:[#allocation6 + $0x98] sm:$0xff]
    %v1881 = vld [vmem:[#allocation6 + $0xa0] sm:$0xff]
    %v1882 = vld [vmem:[#allocation6 + $0xa8] sm:$0xff]
    %v1883 = vld [vmem:[#allocation6 + $0xb0] sm:$0xff]
    %v1884 = vld [vmem:[#allocation6 + $0xb8] sm:$0xff]
    %v1885 = vld [vmem:[#allocation6 + $0xc0] sm:$0xff]
    %v1886 = vld [vmem:[#allocation6 + $0xc8] sm:$0xff]
    %v1887 = vld [vmem:[#allocation6 + $0xd0] sm:$0xff]
    %v1888 = vld [vmem:[#allocation6 + $0xd8] sm:$0xff]
    %v1889 = vld [vmem:[#allocation6 + $0xe0] sm:$0xff]
    %v1890 = vld [vmem:[#allocation6 + $0xe8] sm:$0xff]
    %v1891 = vld [vmem:[#allocation6 + $0xf0] sm:$0xff]
    %v1892 = vld [vmem:[#allocation6 + $0xf8] sm:$0xff]
    %v1893 = vld [vmem:[#allocation6 + $0x100] sm:$0xff]
    %v1894 = vld [vmem:[#allocation6 + $0x108] sm:$0xff]
    %v1895 = vld [vmem:[#allocation6 + $0x110] sm:$0xff]
    %v1896 = vld [vmem:[#allocation6 + $0x118] sm:$0xff]
    %v1897 = vld [vmem:[#allocation6 + $0x120] sm:$0xff]
    %v1898 = vld [vmem:[#allocation6 + $0x128] sm:$0xff]
    %v1899 = vld [vmem:[#allocation6 + $0x130] sm:$0xff]
    %v1900 = vld [vmem:[#allocation6 + $0x138] sm:$0xff]
    %v1901 = vld [vmem:[#allocation6 + $0x140] sm:$0xff]
    %v1902 = vld [vmem:[#allocation6 + $0x148] sm:$0xff]
    %v1903 = vld [vmem:[#allocation6 + $0x150] sm:$0xff]
    %v1904 = vld [vmem:[#allocation6 + $0x158] sm:$0xff]
    %v1905 = vld [vmem:[#allocation6 + $0x160] sm:$0xff]
    %v1906 = vld [vmem:[#allocation6 + $0x168] sm:$0xff]
    %v1907 = vld [vmem:[#allocation6 + $0x170] sm:$0xff]
    %v1908 = vld [vmem:[#allocation6 + $0x178] sm:$0xff]
    %v1909 = vld [vmem:[#allocation6 + $0x180] sm:$0xff]
    %v1910 = vld [vmem:[#allocation6 + $0x188] sm:$0xff]
    %v1911 = vld [vmem:[#allocation6 + $0x190] sm:$0xff]
    %v1912 = vld [vmem:[#allocation6 + $0x198] sm:$0xff]
    %v1913 = vld [vmem:[#allocation6 + $0x1a0] sm:$0xff]
    %v1914 = vld [vmem:[#allocation6 + $0x1a8] sm:$0xff]
    %v1915 = vld [vmem:[#allocation6 + $0x1b0] sm:$0xff]
    %v1916 = vld [vmem:[#allocation6 + $0x1b8] sm:$0xff]
    %v1917 = vld [vmem:[#allocation6 + $0x1c0] sm:$0xff]
    %v1918 = vld [vmem:[#allocation6 + $0x1c8] sm:$0xff]
    %v1919 = vld [vmem:[#allocation6 + $0x1d0] sm:$0xff]
    %v1920 = vld [vmem:[#allocation6 + $0x1d8] sm:$0xff]
    %v1921 = vld [vmem:[#allocation6 + $0x1e0] sm:$0xff]
    %v1922 = vld [vmem:[#allocation6 + $0x1e8] sm:$0xff]
    %v1923 = vld [vmem:[#allocation6 + $0x1f0] sm:$0xff]
    %v1924 = vld [vmem:[#allocation6 + $0x1f8] sm:$0xff]
    %1925 = vmatprep.subr.mxu0 %v1862
    %1926 = vmatpush1.msra.mxu0 %v1861
    %1927 = vmatprep.subr.mxu0 %v1866
    %1928 = vmatpush1.msra.mxu0 %v1865
    %1929 = vmatprep.subr.mxu0 %v1870
    %1930 = vmatpush1.msra.mxu0 %v1869
    %1931 = vmatprep.subr.mxu0 %v1874
    %1932 = vmatpush1.msra.mxu0 %v1873
    %1933 = vmatprep.subr.mxu0 %v1878
    %1934 = vmatpush1.msra.mxu0 %v1877
    %1935 = vmatprep.subr.mxu0 %v1882
    %1936 = vmatpush1.msra.mxu0 %v1881
    %1937 = vmatprep.subr.mxu0 %v1886
    %1938 = vmatpush1.msra.mxu0 %v1885
    %1939 = vmatprep.subr.mxu0 %v1890
    %1940 = vmatpush1.msra.mxu0 %v1889
    %1941 = vmatprep.subr.mxu0 %v1894
    %1942 = vmatpush1.msra.mxu0 %v1893
    %1943 = vmatprep.subr.mxu0 %v1898
    %1944 = vmatpush1.msra.mxu0 %v1897
    %1945 = vmatprep.subr.mxu0 %v1902
    %1946 = vmatpush1.msra.mxu0 %v1901
    %1947 = vmatprep.subr.mxu0 %v1906
    %1948 = vmatpush1.msra.mxu0 %v1905
    %1949 = vmatprep.subr.mxu0 %v1910
    %1950 = vmatpush1.msra.mxu0 %v1909
    %1951 = vmatprep.subr.mxu0 %v1914
    %1952 = vmatpush1.msra.mxu0 %v1913
    %1953 = vmatprep.subr.mxu0 %v1918
    %1954 = vmatpush1.msra.mxu0 %v1917
    %1955 = vmatprep.subr.mxu0 %v1922
    %1956 = vmatpush1.msra.mxu0 %v1921
    %1957 = vmatprep.subr.mxu0 0.0
    %1958 = vmatpush1.msra.mxu0 0.0
    %1959 = vmatprep.subr.mxu0 0.0
    %1960 = vmatpush1.msra.mxu0 0.0
    %1961 = vmatprep.subr.mxu0 0.0
    %1962 = vmatpush1.msra.mxu0 0.0
    %1963 = vmatprep.subr.mxu0 0.0
    %1964 = vmatpush1.msra.mxu0 0.0
    %1965 = vmatprep.subr.mxu0 0.0
    %1966 = vmatpush1.msra.mxu0 0.0
    %1967 = vmatprep.subr.mxu0 0.0
    %1968 = vmatpush1.msra.mxu0 0.0
    %1969 = vmatprep.subr.mxu0 0.0
    %1970 = vmatpush1.msra.mxu0 0.0
    %1971 = vmatprep.subr.mxu0 0.0
    %1972 = vmatpush1.msra.mxu0 0.0
    %1973 = vmatprep.subr.mxu0 0.0
    %1974 = vmatpush1.msra.mxu0 0.0
    %1975 = vmatprep.subr.mxu0 0.0
    %1976 = vmatpush1.msra.mxu0 0.0
    %1977 = vmatprep.subr.mxu0 0.0
    %1978 = vmatpush1.msra.mxu0 0.0
    %1979 = vmatprep.subr.mxu0 0.0
    %1980 = vmatpush1.msra.mxu0 0.0
    %1981 = vmatprep.subr.mxu0 0.0
    %1982 = vmatpush1.msra.mxu0 0.0
    %1983 = vmatprep.subr.mxu0 0.0
    %1984 = vmatpush1.msra.mxu0 0.0
    %1985 = vmatprep.subr.mxu0 0.0
    %1986 = vmatpush1.msra.mxu0 0.0
    %1987 = vmatprep.subr.mxu0 0.0
    %1988 = vmatpush1.msra.mxu0 0.0
    %1989 = vmatprep.mubr.f32.mxu0 0.0
    %1990 = vmatmul.mubr.f32.gmra.mrb[0].mxu0 %v1851
    %v1991 = vpop.f32.mrb[0].mxu0
    %v1992 = vadd.f32 0.0, %v1991
    %v1993 = vpop.f32.mrb[0].mxu0
    %v1994 = vadd.f32 0.0, %v1993
    %1995 = vdwg.mxu0
    %1996 = vmatprep.subr.mxu0 %v1864
    %1997 = vmatpush1.msra.mxu0 %v1863
    %1998 = vmatprep.subr.mxu0 %v1868
    %1999 = vmatpush1.msra.mxu0 %v1867
    %2000 = vmatprep.subr.mxu0 %v1872
    %2001 = vmatpush1.msra.mxu0 %v1871
    %2002 = vmatprep.subr.mxu0 %v1876
    %2003 = vmatpush1.msra.mxu0 %v1875
    %2004 = vmatprep.subr.mxu0 %v1880
    %2005 = vmatpush1.msra.mxu0 %v1879
    %2006 = vmatprep.subr.mxu0 %v1884
    %2007 = vmatpush1.msra.mxu0 %v1883
    %2008 = vmatprep.subr.mxu0 %v1888
    %2009 = vmatpush1.msra.mxu0 %v1887
    %2010 = vmatprep.subr.mxu0 %v1892
    %2011 = vmatpush1.msra.mxu0 %v1891
    %2012 = vmatprep.subr.mxu0 %v1896
    %2013 = vmatpush1.msra.mxu0 %v1895
    %2014 = vmatprep.subr.mxu0 %v1900
    %2015 = vmatpush1.msra.mxu0 %v1899
    %2016 = vmatprep.subr.mxu0 %v1904
    %2017 = vmatpush1.msra.mxu0 %v1903
    %2018 = vmatprep.subr.mxu0 %v1908
    %2019 = vmatpush1.msra.mxu0 %v1907
    %2020 = vmatprep.subr.mxu0 %v1912
    %2021 = vmatpush1.msra.mxu0 %v1911
    %2022 = vmatprep.subr.mxu0 %v1916
    %2023 = vmatpush1.msra.mxu0 %v1915
    %2024 = vmatprep.subr.mxu0 %v1920
    %2025 = vmatpush1.msra.mxu0 %v1919
    %2026 = vmatprep.subr.mxu0 %v1924
    %2027 = vmatpush1.msra.mxu0 %v1923
    %2028 = vmatprep.subr.mxu0 0.0
    %2029 = vmatpush1.msra.mxu0 0.0
    %2030 = vmatprep.subr.mxu0 0.0
    %2031 = vmatpush1.msra.mxu0 0.0
    %2032 = vmatprep.subr.mxu0 0.0
    %2033 = vmatpush1.msra.mxu0 0.0
    %2034 = vmatprep.subr.mxu0 0.0
    %2035 = vmatpush1.msra.mxu0 0.0
    %2036 = vmatprep.subr.mxu0 0.0
    %2037 = vmatpush1.msra.mxu0 0.0
    %2038 = vmatprep.subr.mxu0 0.0
    %2039 = vmatpush1.msra.mxu0 0.0
    %2040 = vmatprep.subr.mxu0 0.0
    %2041 = vmatpush1.msra.mxu0 0.0
    %2042 = vmatprep.subr.mxu0 0.0
    %2043 = vmatpush1.msra.mxu0 0.0
    %2044 = vmatprep.subr.mxu0 0.0
    %2045 = vmatpush1.msra.mxu0 0.0
    %2046 = vmatprep.subr.mxu0 0.0
    %2047 = vmatpush1.msra.mxu0 0.0
    %2048 = vmatprep.subr.mxu0 0.0
    %2049 = vmatpush1.msra.mxu0 0.0
    %2050 = vmatprep.subr.mxu0 0.0
    %2051 = vmatpush1.msra.mxu0 0.0
    %2052 = vmatprep.subr.mxu0 0.0
    %2053 = vmatpush1.msra.mxu0 0.0
    %2054 = vmatprep.subr.mxu0 0.0
    %2055 = vmatpush1.msra.mxu0 0.0
    %2056 = vmatprep.subr.mxu0 0.0
    %2057 = vmatpush1.msra.mxu0 0.0
    %2058 = vmatprep.subr.mxu0 0.0
    %2059 = vmatpush1.msra.mxu0 0.0
    %2060 = vmatprep.mubr.f32.mxu0 0.0
    %2061 = vmatmul.mubr.f32.gmra.mrb[0].mxu0 %v1851
    %v2062 = vpop.f32.mrb[0].mxu0
    %v2063 = vadd.f32 0.0, %v2062
    %v2064 = vpop.f32.mrb[0].mxu0
    %v2065 = vadd.f32 0.0, %v2064
    %2066 = vdwg.mxu0
    %v2067 = vadd.f32 %v1857, %v1992
    %v2068 = vadd.f32 %v1858, %v1994
    %v2069 = vadd.f32 %v1859, %v2063
    %v2070 = vadd.f32 %v1860, %v2065
    %v2071 = vxor.u32 %v2067, 2147483648
    %v2072 = vmul.f32 %v2071, 1.442695
    %v2073 = vpow.pop %v2072
    %v2074 = vadd.f32 %v2073, 1.0
    %v2075 = vrcp.pop %v2074
    %v2076 = vmul.f32 1.0, %v2075
    %v2077 = vxor.u32 %v2068, 2147483648
    %v2078 = vmul.f32 %v2077, 1.442695
    %v2079 = vpow.pop %v2078
    %v2080 = vadd.f32 %v2079, 1.0
    %v2081 = vrcp.pop %v2080
    %v2082 = vmul.f32 1.0, %v2081
    %v2083 = vtanh.pop %v2069
    %v2084 = vxor.u32 %v2070, 2147483648
    %v2085 = vmul.f32 %v2084, 1.442695
    %v2086 = vpow.pop %v2085
    %v2087 = vadd.f32 %v2086, 1.0
    %v2088 = vrcp.pop %v2087
    %v2089 = vmul.f32 1.0, %v2088
    %v2090 = vmul.f32 %v2082, %v1849
    %v2091 = vmul.f32 %v2076, %v2083
    %v2092 = vadd.f32 %v2090, %v2091
    %v2093 = vtanh.pop %v2092
    %v2094 = vmul.f32 %v2089, %v2093
    %s2095 = scalar_lea.vmem [#allocation2], 48
    %2096 = vst [vmem:[%s2095] sm:$0xff] %v2094
    %s2097 = smul.u32 7, 4
    %s2098 = smul.addr %s2097, 8
    %s2099 = scalar_lea.vmem [#allocation3], %s2098
    %v2100 = vld [vmem:[%s2099] sm:$0xff]
    %v2101 = vld [vmem:[%s2099 + $0x8] sm:$0xff]
    %v2102 = vld [vmem:[%s2099 + $0x10] sm:$0xff]
    %v2103 = vld [vmem:[%s2099 + $0x18] sm:$0xff]
    %v2104 = vld [vmem:[#allocation6] sm:$0xff]
    %v2105 = vld [vmem:[#allocation6 + $0x8] sm:$0xff]
    %v2106 = vld [vmem:[#allocation6 + $0x10] sm:$0xff]
    %v2107 = vld [vmem:[#allocation6 + $0x18] sm:$0xff]
    %v2108 = vld [vmem:[#allocation6 + $0x20] sm:$0xff]
    %v2109 = vld [vmem:[#allocation6 + $0x28] sm:$0xff]
    %v2110 = vld [vmem:[#allocation6 + $0x30] sm:$0xff]
    %v2111 = vld [vmem:[#allocation6 + $0x38] sm:$0xff]
    %v2112 = vld [vmem:[#allocation6 + $0x40] sm:$0xff]
    %v2113 = vld [vmem:[#allocation6 + $0x48] sm:$0xff]
    %v2114 = vld [vmem:[#allocation6 + $0x50] sm:$0xff]
    %v2115 = vld [vmem:[#allocation6 + $0x58] sm:$0xff]
    %v2116 = vld [vmem:[#allocation6 + $0x60] sm:$0xff]
    %v2117 = vld [vmem:[#allocation6 + $0x68] sm:$0xff]
    %v2118 = vld [vmem:[#allocation6 + $0x70] sm:$0xff]
    %v2119 = vld [vmem:[#allocation6 + $0x78] sm:$0xff]
    %v2120 = vld [vmem:[#allocation6 + $0x80] sm:$0xff]
    %v2121 = vld [vmem:[#allocation6 + $0x88] sm:$0xff]
    %v2122 = vld [vmem:[#allocation6 + $0x90] sm:$0xff]
    %v2123 = vld [vmem:[#allocation6 + $0x98] sm:$0xff]
    %v2124 = vld [vmem:[#allocation6 + $0xa0] sm:$0xff]
    %v2125 = vld [vmem:[#allocation6 + $0xa8] sm:$0xff]
    %v2126 = vld [vmem:[#allocation6 + $0xb0] sm:$0xff]
    %v2127 = vld [vmem:[#allocation6 + $0xb8] sm:$0xff]
    %v2128 = vld [vmem:[#allocation6 + $0xc0] sm:$0xff]
    %v2129 = vld [vmem:[#allocation6 + $0xc8] sm:$0xff]
    %v2130 = vld [vmem:[#allocation6 + $0xd0] sm:$0xff]
    %v2131 = vld [vmem:[#allocation6 + $0xd8] sm:$0xff]
    %v2132 = vld [vmem:[#allocation6 + $0xe0] sm:$0xff]
    %v2133 = vld [vmem:[#allocation6 + $0xe8] sm:$0xff]
    %v2134 = vld [vmem:[#allocation6 + $0xf0] sm:$0xff]
    %v2135 = vld [vmem:[#allocation6 + $0xf8] sm:$0xff]
    %v2136 = vld [vmem:[#allocation6 + $0x100] sm:$0xff]
    %v2137 = vld [vmem:[#allocation6 + $0x108] sm:$0xff]
    %v2138 = vld [vmem:[#allocation6 + $0x110] sm:$0xff]
    %v2139 = vld [vmem:[#allocation6 + $0x118] sm:$0xff]
    %v2140 = vld [vmem:[#allocation6 + $0x120] sm:$0xff]
    %v2141 = vld [vmem:[#allocation6 + $0x128] sm:$0xff]
    %v2142 = vld [vmem:[#allocation6 + $0x130] sm:$0xff]
    %v2143 = vld [vmem:[#allocation6 + $0x138] sm:$0xff]
    %v2144 = vld [vmem:[#allocation6 + $0x140] sm:$0xff]
    %v2145 = vld [vmem:[#allocation6 + $0x148] sm:$0xff]
    %v2146 = vld [vmem:[#allocation6 + $0x150] sm:$0xff]
    %v2147 = vld [vmem:[#allocation6 + $0x158] sm:$0xff]
    %v2148 = vld [vmem:[#allocation6 + $0x160] sm:$0xff]
    %v2149 = vld [vmem:[#allocation6 + $0x168] sm:$0xff]
    %v2150 = vld [vmem:[#allocation6 + $0x170] sm:$0xff]
    %v2151 = vld [vmem:[#allocation6 + $0x178] sm:$0xff]
    %v2152 = vld [vmem:[#allocation6 + $0x180] sm:$0xff]
    %v2153 = vld [vmem:[#allocation6 + $0x188] sm:$0xff]
    %v2154 = vld [vmem:[#allocation6 + $0x190] sm:$0xff]
    %v2155 = vld [vmem:[#allocation6 + $0x198] sm:$0xff]
    %v2156 = vld [vmem:[#allocation6 + $0x1a0] sm:$0xff]
    %v2157 = vld [vmem:[#allocation6 + $0x1a8] sm:$0xff]
    %v2158 = vld [vmem:[#allocation6 + $0x1b0] sm:$0xff]
    %v2159 = vld [vmem:[#allocation6 + $0x1b8] sm:$0xff]
    %v2160 = vld [vmem:[#allocation6 + $0x1c0] sm:$0xff]
    %v2161 = vld [vmem:[#allocation6 + $0x1c8] sm:$0xff]
    %v2162 = vld [vmem:[#allocation6 + $0x1d0] sm:$0xff]
    %v2163 = vld [vmem:[#allocation6 + $0x1d8] sm:$0xff]
    %v2164 = vld [vmem:[#allocation6 + $0x1e0] sm:$0xff]
    %v2165 = vld [vmem:[#allocation6 + $0x1e8] sm:$0xff]
    %v2166 = vld [vmem:[#allocation6 + $0x1f0] sm:$0xff]
    %v2167 = vld [vmem:[#allocation6 + $0x1f8] sm:$0xff]
    %2168 = vmatprep.subr.mxu0 %v2105
    %2169 = vmatpush1.msra.mxu0 %v2104
    %2170 = vmatprep.subr.mxu0 %v2109
    %2171 = vmatpush1.msra.mxu0 %v2108
    %2172 = vmatprep.subr.mxu0 %v2113
    %2173 = vmatpush1.msra.mxu0 %v2112
    %2174 = vmatprep.subr.mxu0 %v2117
    %2175 = vmatpush1.msra.mxu0 %v2116
    %2176 = vmatprep.subr.mxu0 %v2121
    %2177 = vmatpush1.msra.mxu0 %v2120
    %2178 = vmatprep.subr.mxu0 %v2125
    %2179 = vmatpush1.msra.mxu0 %v2124
    %2180 = vmatprep.subr.mxu0 %v2129
    %2181 = vmatpush1.msra.mxu0 %v2128
    %2182 = vmatprep.subr.mxu0 %v2133
    %2183 = vmatpush1.msra.mxu0 %v2132
    %2184 = vmatprep.subr.mxu0 %v2137
    %2185 = vmatpush1.msra.mxu0 %v2136
    %2186 = vmatprep.subr.mxu0 %v2141
    %2187 = vmatpush1.msra.mxu0 %v2140
    %2188 = vmatprep.subr.mxu0 %v2145
    %2189 = vmatpush1.msra.mxu0 %v2144
    %2190 = vmatprep.subr.mxu0 %v2149
    %2191 = vmatpush1.msra.mxu0 %v2148
    %2192 = vmatprep.subr.mxu0 %v2153
    %2193 = vmatpush1.msra.mxu0 %v2152
    %2194 = vmatprep.subr.mxu0 %v2157
    %2195 = vmatpush1.msra.mxu0 %v2156
    %2196 = vmatprep.subr.mxu0 %v2161
    %2197 = vmatpush1.msra.mxu0 %v2160
    %2198 = vmatprep.subr.mxu0 %v2165
    %2199 = vmatpush1.msra.mxu0 %v2164
    %2200 = vmatprep.subr.mxu0 0.0
    %2201 = vmatpush1.msra.mxu0 0.0
    %2202 = vmatprep.subr.mxu0 0.0
    %2203 = vmatpush1.msra.mxu0 0.0
    %2204 = vmatprep.subr.mxu0 0.0
    %2205 = vmatpush1.msra.mxu0 0.0
    %2206 = vmatprep.subr.mxu0 0.0
    %2207 = vmatpush1.msra.mxu0 0.0
    %2208 = vmatprep.subr.mxu0 0.0
    %2209 = vmatpush1.msra.mxu0 0.0
    %2210 = vmatprep.subr.mxu0 0.0
    %2211 = vmatpush1.msra.mxu0 0.0
    %2212 = vmatprep.subr.mxu0 0.0
    %2213 = vmatpush1.msra.mxu0 0.0
    %2214 = vmatprep.subr.mxu0 0.0
    %2215 = vmatpush1.msra.mxu0 0.0
    %2216 = vmatprep.subr.mxu0 0.0
    %2217 = vmatpush1.msra.mxu0 0.0
    %2218 = vmatprep.subr.mxu0 0.0
    %2219 = vmatpush1.msra.mxu0 0.0
    %2220 = vmatprep.subr.mxu0 0.0
    %2221 = vmatpush1.msra.mxu0 0.0
    %2222 = vmatprep.subr.mxu0 0.0
    %2223 = vmatpush1.msra.mxu0 0.0
    %2224 = vmatprep.subr.mxu0 0.0
    %2225 = vmatpush1.msra.mxu0 0.0
    %2226 = vmatprep.subr.mxu0 0.0
    %2227 = vmatpush1.msra.mxu0 0.0
    %2228 = vmatprep.subr.mxu0 0.0
    %2229 = vmatpush1.msra.mxu0 0.0
    %2230 = vmatprep.subr.mxu0 0.0
    %2231 = vmatpush1.msra.mxu0 0.0
    %2232 = vmatprep.mubr.f32.mxu0 0.0
    %2233 = vmatmul.mubr.f32.gmra.mrb[0].mxu0 %v2094
    %v2234 = vpop.f32.mrb[0].mxu0
    %v2235 = vadd.f32 0.0, %v2234
    %v2236 = vpop.f32.mrb[0].mxu0
    %v2237 = vadd.f32 0.0, %v2236
    %2238 = vdwg.mxu0
    %2239 = vmatprep.subr.mxu0 %v2107
    %2240 = vmatpush1.msra.mxu0 %v2106
    %2241 = vmatprep.subr.mxu0 %v2111
    %2242 = vmatpush1.msra.mxu0 %v2110
    %2243 = vmatprep.subr.mxu0 %v2115
    %2244 = vmatpush1.msra.mxu0 %v2114
    %2245 = vmatprep.subr.mxu0 %v2119
    %2246 = vmatpush1.msra.mxu0 %v2118
    %2247 = vmatprep.subr.mxu0 %v2123
    %2248 = vmatpush1.msra.mxu0 %v2122
    %2249 = vmatprep.subr.mxu0 %v2127
    %2250 = vmatpush1.msra.mxu0 %v2126
    %2251 = vmatprep.subr.mxu0 %v2131
    %2252 = vmatpush1.msra.mxu0 %v2130
    %2253 = vmatprep.subr.mxu0 %v2135
    %2254 = vmatpush1.msra.mxu0 %v2134
    %2255 = vmatprep.subr.mxu0 %v2139
    %2256 = vmatpush1.msra.mxu0 %v2138
    %2257 = vmatprep.subr.mxu0 %v2143
    %2258 = vmatpush1.msra.mxu0 %v2142
    %2259 = vmatprep.subr.mxu0 %v2147
    %2260 = vmatpush1.msra.mxu0 %v2146
    %2261 = vmatprep.subr.mxu0 %v2151
    %2262 = vmatpush1.msra.mxu0 %v2150
    %2263 = vmatprep.subr.mxu0 %v2155
    %2264 = vmatpush1.msra.mxu0 %v2154
    %2265 = vmatprep.subr.mxu0 %v2159
    %2266 = vmatpush1.msra.mxu0 %v2158
    %2267 = vmatprep.subr.mxu0 %v2163
    %2268 = vmatpush1.msra.mxu0 %v2162
    %2269 = vmatprep.subr.mxu0 %v2167
    %2270 = vmatpush1.msra.mxu0 %v2166
    %2271 = vmatprep.subr.mxu0 0.0
    %2272 = vmatpush1.msra.mxu0 0.0
    %2273 = vmatprep.subr.mxu0 0.0
    %2274 = vmatpush1.msra.mxu0 0.0
    %2275 = vmatprep.subr.mxu0 0.0
    %2276 = vmatpush1.msra.mxu0 0.0
    %2277 = vmatprep.subr.mxu0 0.0
    %2278 = vmatpush1.msra.mxu0 0.0
    %2279 = vmatprep.subr.mxu0 0.0
    %2280 = vmatpush1.msra.mxu0 0.0
    %2281 = vmatprep.subr.mxu0 0.0
    %2282 = vmatpush1.msra.mxu0 0.0
    %2283 = vmatprep.subr.mxu0 0.0
    %2284 = vmatpush1.msra.mxu0 0.0
    %2285 = vmatprep.subr.mxu0 0.0
    %2286 = vmatpush1.msra.mxu0 0.0
    %2287 = vmatprep.subr.mxu0 0.0
    %2288 = vmatpush1.msra.mxu0 0.0
    %2289 = vmatprep.subr.mxu0 0.0
    %2290 = vmatpush1.msra.mxu0 0.0
    %2291 = vmatprep.subr.mxu0 0.0
    %2292 = vmatpush1.msra.mxu0 0.0
    %2293 = vmatprep.subr.mxu0 0.0
    %2294 = vmatpush1.msra.mxu0 0.0
    %2295 = vmatprep.subr.mxu0 0.0
    %2296 = vmatpush1.msra.mxu0 0.0
    %2297 = vmatprep.subr.mxu0 0.0
    %2298 = vmatpush1.msra.mxu0 0.0
    %2299 = vmatprep.subr.mxu0 0.0
    %2300 = vmatpush1.msra.mxu0 0.0
    %2301 = vmatprep.subr.mxu0 0.0
    %2302 = vmatpush1.msra.mxu0 0.0
    %2303 = vmatprep.mubr.f32.mxu0 0.0
    %2304 = vmatmul.mubr.f32.gmra.mrb[0].mxu0 %v2094
    %v2305 = vpop.f32.mrb[0].mxu0
    %v2306 = vadd.f32 0.0, %v2305
    %v2307 = vpop.f32.mrb[0].mxu0
    %v2308 = vadd.f32 0.0, %v2307
    %2309 = vdwg.mxu0
    %v2310 = vadd.f32 %v2100, %v2235
    %v2311 = vadd.f32 %v2101, %v2237
    %v2312 = vadd.f32 %v2102, %v2306
    %v2313 = vadd.f32 %v2103, %v2308
    %v2314 = vxor.u32 %v2310, 2147483648
    %v2315 = vmul.f32 %v2314, 1.442695
    %v2316 = vpow.pop %v2315
    %v2317 = vadd.f32 %v2316, 1.0
    %v2318 = vrcp.pop %v2317
    %v2319 = vmul.f32 1.0, %v2318
    %v2320 = vxor.u32 %v2311, 2147483648
    %v2321 = vmul.f32 %v2320, 1.442695
    %v2322 = vpow.pop %v2321
    %v2323 = vadd.f32 %v2322, 1.0
    %v2324 = vrcp.pop %v2323
    %v2325 = vmul.f32 1.0, %v2324
    %v2326 = vtanh.pop %v2312
    %v2327 = vxor.u32 %v2313, 2147483648
    %v2328 = vmul.f32 %v2327, 1.442695
    %v2329 = vpow.pop %v2328
    %v2330 = vadd.f32 %v2329, 1.0
    %v2331 = vrcp.pop %v2330
    %v2332 = vmul.f32 1.0, %v2331
    %v2333 = vmul.f32 %v2325, %v2092
    %v2334 = vmul.f32 %v2319, %v2326
    %v2335 = vadd.f32 %v2333, %v2334
    %v2336 = vtanh.pop %v2335
    %v2337 = vmul.f32 %v2332, %v2336
    %s2338 = scalar_lea.vmem [#allocation2], 56
    %2339 = vst [vmem:[%s2338] sm:$0xff] %v2337
    %v2340 = vld [vmem:[#allocation2] sm:$0xff]
    %v2341 = vld [vmem:[#allocation2 + $0x8] sm:$0xff]
    %v2342 = vld [vmem:[#allocation2 + $0x10] sm:$0xff]
    %v2343 = vld [vmem:[#allocation2 + $0x18] sm:$0xff]
    %v2344 = vld [vmem:[#allocation2 + $0x20] sm:$0xff]
    %v2345 = vld [vmem:[#allocation2 + $0x28] sm:$0xff]
    %v2346 = vld [vmem:[#allocation2 + $0x30] sm:$0xff]
    %v2347 = vld [vmem:[#allocation2 + $0x38] sm:$0xff]
    %s2348 = scalar_lea.vmem [#allocation4], 512
    %v2349 = vld [vmem:[%s2348] sm:$0xff]
    %v2350 = vld [vmem:[%s2348 + $0x8] sm:$0xff]
    %v2351 = vld [vmem:[%s2348 + $0x10] sm:$0xff]
    %v2352 = vld [vmem:[%s2348 + $0x18] sm:$0xff]
    %v2353 = vld [vmem:[%s2348 + $0x20] sm:$0xff]
    %v2354 = vld [vmem:[%s2348 + $0x28] sm:$0xff]
    %v2355 = vld [vmem:[%s2348 + $0x30] sm:$0xff]
    %v2356 = vld [vmem:[%s2348 + $0x38] sm:$0xff]
    %v2357 = vld [vmem:[%s2348 + $0x40] sm:$0xff]
    %v2358 = vld [vmem:[%s2348 + $0x48] sm:$0xff]
    %v2359 = vld [vmem:[%s2348 + $0x50] sm:$0xff]
    %v2360 = vld [vmem:[%s2348 + $0x58] sm:$0xff]
    %v2361 = vld [vmem:[%s2348 + $0x60] sm:$0xff]
    %v2362 = vld [vmem:[%s2348 + $0x68] sm:$0xff]
    %v2363 = vld [vmem:[%s2348 + $0x70] sm:$0xff]
    %v2364 = vld [vmem:[%s2348 + $0x78] sm:$0xff]
    %v2365 = vld [vmem:[%s2348 + $0x80] sm:$0xff]
    %v2366 = vld [vmem:[%s2348 + $0x88] sm:$0xff]
    %v2367 = vld [vmem:[%s2348 + $0x90] sm:$0xff]
    %v2368 = vld [vmem:[%s2348 + $0x98] sm:$0xff]
    %v2369 = vld [vmem:[%s2348 + $0xa0] sm:$0xff]
    %v2370 = vld [vmem:[%s2348 + $0xa8] sm:$0xff]
    %v2371 = vld [vmem:[%s2348 + $0xb0] sm:$0xff]
    %v2372 = vld [vmem:[%s2348 + $0xb8] sm:$0xff]
    %v2373 = vld [vmem:[%s2348 + $0xc0] sm:$0xff]
    %v2374 = vld [vmem:[%s2348 + $0xc8] sm:$0xff]
    %v2375 = vld [vmem:[%s2348 + $0xd0] sm:$0xff]
    %v2376 = vld [vmem:[%s2348 + $0xd8] sm:$0xff]
    %v2377 = vld [vmem:[%s2348 + $0xe0] sm:$0xff]
    %v2378 = vld [vmem:[%s2348 + $0xe8] sm:$0xff]
    %v2379 = vld [vmem:[%s2348 + $0xf0] sm:$0xff]
    %v2380 = vld [vmem:[%s2348 + $0xf8] sm:$0xff]
    %v2381 = vld [vmem:[%s2348 + $0x100] sm:$0xff]
    %v2382 = vld [vmem:[%s2348 + $0x108] sm:$0xff]
    %v2383 = vld [vmem:[%s2348 + $0x110] sm:$0xff]
    %v2384 = vld [vmem:[%s2348 + $0x118] sm:$0xff]
    %v2385 = vld [vmem:[%s2348 + $0x120] sm:$0xff]
    %v2386 = vld [vmem:[%s2348 + $0x128] sm:$0xff]
    %v2387 = vld [vmem:[%s2348 + $0x130] sm:$0xff]
    %v2388 = vld [vmem:[%s2348 + $0x138] sm:$0xff]
    %v2389 = vld [vmem:[%s2348 + $0x140] sm:$0xff]
    %v2390 = vld [vmem:[%s2348 + $0x148] sm:$0xff]
    %v2391 = vld [vmem:[%s2348 + $0x150] sm:$0xff]
    %v2392 = vld [vmem:[%s2348 + $0x158] sm:$0xff]
    %v2393 = vld [vmem:[%s2348 + $0x160] sm:$0xff]
    %v2394 = vld [vmem:[%s2348 + $0x168] sm:$0xff]
    %v2395 = vld [vmem:[%s2348 + $0x170] sm:$0xff]
    %v2396 = vld [vmem:[%s2348 + $0x178] sm:$0xff]
    %v2397 = vld [vmem:[%s2348 + $0x180] sm:$0xff]
    %v2398 = vld [vmem:[%s2348 + $0x188] sm:$0xff]
    %v2399 = vld [vmem:[%s2348 + $0x190] sm:$0xff]
    %v2400 = vld [vmem:[%s2348 + $0x198] sm:$0xff]
    %v2401 = vld [vmem:[%s2348 + $0x1a0] sm:$0xff]
    %v2402 = vld [vmem:[%s2348 + $0x1a8] sm:$0xff]
    %v2403 = vld [vmem:[%s2348 + $0x1b0] sm:$0xff]
    %v2404 = vld [vmem:[%s2348 + $0x1b8] sm:$0xff]
    %v2405 = vld [vmem:[%s2348 + $0x1c0] sm:$0xff]
    %v2406 = vld [vmem:[%s2348 + $0x1c8] sm:$0xff]
    %v2407 = vld [vmem:[%s2348 + $0x1d0] sm:$0xff]
    %v2408 = vld [vmem:[%s2348 + $0x1d8] sm:$0xff]
    %v2409 = vld [vmem:[%s2348 + $0x1e0] sm:$0xff]
    %v2410 = vld [vmem:[%s2348 + $0x1e8] sm:$0xff]
    %v2411 = vld [vmem:[%s2348 + $0x1f0] sm:$0xff]
    %v2412 = vld [vmem:[%s2348 + $0x1f8] sm:$0xff]
    %s2413 = scalar_lea.vmem %s3, 4
    %v2414 = vld [vmem:[%s2413] sm:$0xf]
    %v2416 = vlaneseq
    %v2417 = vshrl.u32 %v2416, 7
    %v2418 = vsub.s32 0, %v2417
    %v2419 = vrot.slane %v2414, %v2418
    %v2420 = vlaneseq
    %v2421 = vshrl.u32 %v2420, 7
    %v2422 = vsub.s32 1, %v2421
    %v2423 = vrot.slane %v2414, %v2422
    %v2424 = vlaneseq
    %v2425 = vshrl.u32 %v2424, 7
    %v2426 = vsub.s32 2, %v2425
    %v2427 = vrot.slane %v2414, %v2426
    %v2428 = vlaneseq
    %v2429 = vshrl.u32 %v2428, 7
    %v2430 = vsub.s32 3, %v2429
    %v2431 = vrot.slane %v2414, %v2430
    %2436 = vmatprep.subr.mxu0 %v2350
    %2437 = vmatpush1.msra.mxu0 %v2349
    %2438 = vmatprep.subr.mxu0 %v2354
    %2439 = vmatpush1.msra.mxu0 %v2353
    %2440 = vmatprep.subr.mxu0 %v2358
    %2441 = vmatpush1.msra.mxu0 %v2357
    %2442 = vmatprep.subr.mxu0 %v2362
    %2443 = vmatpush1.msra.mxu0 %v2361
    %2444 = vmatprep.subr.mxu0 %v2366
    %2445 = vmatpush1.msra.mxu0 %v2365
    %2446 = vmatprep.subr.mxu0 %v2370
    %2447 = vmatpush1.msra.mxu0 %v2369
    %2448 = vmatprep.subr.mxu0 %v2374
    %2449 = vmatpush1.msra.mxu0 %v2373
    %2450 = vmatprep.subr.mxu0 %v2378
    %2451 = vmatpush1.msra.mxu0 %v2377
    %2452 = vmatprep.subr.mxu0 %v2382
    %2453 = vmatpush1.msra.mxu0 %v2381
    %2454 = vmatprep.subr.mxu0 %v2386
    %2455 = vmatpush1.msra.mxu0 %v2385
    %2456 = vmatprep.subr.mxu0 %v2390
    %2457 = vmatpush1.msra.mxu0 %v2389
    %2458 = vmatprep.subr.mxu0 %v2394
    %2459 = vmatpush1.msra.mxu0 %v2393
    %2460 = vmatprep.subr.mxu0 %v2398
    %2461 = vmatpush1.msra.mxu0 %v2397
    %2462 = vmatprep.subr.mxu0 %v2402
    %2463 = vmatpush1.msra.mxu0 %v2401
    %2464 = vmatprep.subr.mxu0 %v2406
    %2465 = vmatpush1.msra.mxu0 %v2405
    %2466 = vmatprep.subr.mxu0 %v2410
    %2467 = vmatpush1.msra.mxu0 %v2409
    %2468 = vmatprep.subr.mxu0 0.0
    %2469 = vmatpush1.msra.mxu0 0.0
    %2470 = vmatprep.subr.mxu0 0.0
    %2471 = vmatpush1.msra.mxu0 0.0
    %2472 = vmatprep.subr.mxu0 0.0
    %2473 = vmatpush1.msra.mxu0 0.0
    %2474 = vmatprep.subr.mxu0 0.0
    %2475 = vmatpush1.msra.mxu0 0.0
    %2476 = vmatprep.subr.mxu0 0.0
    %2477 = vmatpush1.msra.mxu0 0.0
    %2478 = vmatprep.subr.mxu0 0.0
    %2479 = vmatpush1.msra.mxu0 0.0
    %2480 = vmatprep.subr.mxu0 0.0
    %2481 = vmatpush1.msra.mxu0 0.0
    %2482 = vmatprep.subr.mxu0 0.0
    %2483 = vmatpush1.msra.mxu0 0.0
    %2484 = vmatprep.subr.mxu0 0.0
    %2485 = vmatpush1.msra.mxu0 0.0
    %2486 = vmatprep.subr.mxu0 0.0
    %2487 = vmatpush1.msra.mxu0 0.0
    %2488 = vmatprep.subr.mxu0 0.0
    %2489 = vmatpush1.msra.mxu0 0.0
    %2490 = vmatprep.subr.mxu0 0.0
    %2491 = vmatpush1.msra.mxu0 0.0
    %2492 = vmatprep.subr.mxu0 0.0
    %2493 = vmatpush1.msra.mxu0 0.0
    %2494 = vmatprep.subr.mxu0 0.0
    %2495 = vmatpush1.msra.mxu0 0.0
    %2496 = vmatprep.subr.mxu0 0.0
    %2497 = vmatpush1.msra.mxu0 0.0
    %2498 = vmatprep.subr.mxu0 0.0
    %2499 = vmatpush1.msra.mxu0 0.0
    %2500 = vmatprep.mubr.f32.mxu0 0.0
    %2501 = vmatmul.mubr.f32.gmra.mrb[0].mxu0 %v2340
    %v2502 = vpop.f32.mrb[0].mxu0
    %v2503 = vadd.f32 %v2419, %v2502
    %v2504 = vpop.f32.mrb[0].mxu0
    %v2505 = vadd.f32 %v2423, %v2504
    %2506 = vmatprep.mubr.f32.mxu0 0.0
    %2507 = vmatmul.mubr.f32.gmra.mrb[0].mxu0 %v2341
    %v2508 = vpop.f32.mrb[0].mxu0
    %v2509 = vadd.f32 %v2419, %v2508
    %v2510 = vpop.f32.mrb[0].mxu0
    %v2511 = vadd.f32 %v2423, %v2510
    %2512 = vmatprep.mubr.f32.mxu0 0.0
    %2513 = vmatmul.mubr.f32.gmra.mrb[0].mxu0 %v2342
    %v2514 = vpop.f32.mrb[0].mxu0
    %v2515 = vadd.f32 %v2419, %v2514
    %v2516 = vpop.f32.mrb[0].mxu0
    %v2517 = vadd.f32 %v2423, %v2516
    %2518 = vmatprep.mubr.f32.mxu0 0.0
    %2519 = vmatmul.mubr.f32.gmra.mrb[0].mxu0 %v2343
    %v2520 = vpop.f32.mrb[0].mxu0
    %v2521 = vadd.f32 %v2419, %v2520
    %v2522 = vpop.f32.mrb[0].mxu0
    %v2523 = vadd.f32 %v2423, %v2522
    %2524 = vmatprep.mubr.f32.mxu0 0.0
    %2525 = vmatmul.mubr.f32.gmra.mrb[0].mxu0 %v2344
    %v2526 = vpop.f32.mrb[0].mxu0
    %v2527 = vadd.f32 %v2419, %v2526
    %v2528 = vpop.f32.mrb[0].mxu0
    %v2529 = vadd.f32 %v2423, %v2528
    %2530 = vmatprep.mubr.f32.mxu0 0.0
    %2531 = vmatmul.mubr.f32.gmra.mrb[0].mxu0 %v2345
    %v2532 = vpop.f32.mrb[0].mxu0
    %v2533 = vadd.f32 %v2419, %v2532
    %v2534 = vpop.f32.mrb[0].mxu0
    %v2535 = vadd.f32 %v2423, %v2534
    %2536 = vmatprep.mubr.f32.mxu0 0.0
    %2537 = vmatmul.mubr.f32.gmra.mrb[0].mxu0 %v2346
    %v2538 = vpop.f32.mrb[0].mxu0
    %v2539 = vadd.f32 %v2419, %v2538
    %v2540 = vpop.f32.mrb[0].mxu0
    %v2541 = vadd.f32 %v2423, %v2540
    %2542 = vmatprep.mubr.f32.mxu0 0.0
    %2543 = vmatmul.mubr.f32.gmra.mrb[0].mxu0 %v2347
    %v2544 = vpop.f32.mrb[0].mxu0
    %v2545 = vadd.f32 %v2419, %v2544
    %v2546 = vpop.f32.mrb[0].mxu0
    %v2547 = vadd.f32 %v2423, %v2546
    %2548 = vdwg.mxu0
    %2549 = vmatprep.subr.mxu0 %v2352
    %2550 = vmatpush1.msra.mxu0 %v2351
    %2551 = vmatprep.subr.mxu0 %v2356
    %2552 = vmatpush1.msra.mxu0 %v2355
    %2553 = vmatprep.subr.mxu0 %v2360
    %2554 = vmatpush1.msra.mxu0 %v2359
    %2555 = vmatprep.subr.mxu0 %v2364
    %2556 = vmatpush1.msra.mxu0 %v2363
    %2557 = vmatprep.subr.mxu0 %v2368
    %2558 = vmatpush1.msra.mxu0 %v2367
    %2559 = vmatprep.subr.mxu0 %v2372
    %2560 = vmatpush1.msra.mxu0 %v2371
    %2561 = vmatprep.subr.mxu0 %v2376
    %2562 = vmatpush1.msra.mxu0 %v2375
    %2563 = vmatprep.subr.mxu0 %v2380
    %2564 = vmatpush1.msra.mxu0 %v2379
    %2565 = vmatprep.subr.mxu0 %v2384
    %2566 = vmatpush1.msra.mxu0 %v2383
    %2567 = vmatprep.subr.mxu0 %v2388
    %2568 = vmatpush1.msra.mxu0 %v2387
    %2569 = vmatprep.subr.mxu0 %v2392
    %2570 = vmatpush1.msra.mxu0 %v2391
    %2571 = vmatprep.subr.mxu0 %v2396
    %2572 = vmatpush1.msra.mxu0 %v2395
    %2573 = vmatprep.subr.mxu0 %v2400
    %2574 = vmatpush1.msra.mxu0 %v2399
    %2575 = vmatprep.subr.mxu0 %v2404
    %2576 = vmatpush1.msra.mxu0 %v2403
    %2577 = vmatprep.subr.mxu0 %v2408
    %2578 = vmatpush1.msra.mxu0 %v2407
    %2579 = vmatprep.subr.mxu0 %v2412
    %2580 = vmatpush1.msra.mxu0 %v2411
    %2581 = vmatprep.subr.mxu0 0.0
    %2582 = vmatpush1.msra.mxu0 0.0
    %2583 = vmatprep.subr.mxu0 0.0
    %2584 = vmatpush1.msra.mxu0 0.0
    %2585 = vmatprep.subr.mxu0 0.0
    %2586 = vmatpush1.msra.mxu0 0.0
    %2587 = vmatprep.subr.mxu0 0.0
    %2588 = vmatpush1.msra.mxu0 0.0
    %2589 = vmatprep.subr.mxu0 0.0
    %2590 = vmatpush1.msra.mxu0 0.0
    %2591 = vmatprep.subr.mxu0 0.0
    %2592 = vmatpush1.msra.mxu0 0.0
    %2593 = vmatprep.subr.mxu0 0.0
    %2594 = vmatpush1.msra.mxu0 0.0
    %2595 = vmatprep.subr.mxu0 0.0
    %2596 = vmatpush1.msra.mxu0 0.0
    %2597 = vmatprep.subr.mxu0 0.0
    %2598 = vmatpush1.msra.mxu0 0.0
    %2599 = vmatprep.subr.mxu0 0.0
    %2600 = vmatpush1.msra.mxu0 0.0
    %2601 = vmatprep.subr.mxu0 0.0
    %2602 = vmatpush1.msra.mxu0 0.0
    %2603 = vmatprep.subr.mxu0 0.0
    %2604 = vmatpush1.msra.mxu0 0.0
    %2605 = vmatprep.subr.mxu0 0.0
    %2606 = vmatpush1.msra.mxu0 0.0
    %2607 = vmatprep.subr.mxu0 0.0
    %2608 = vmatpush1.msra.mxu0 0.0
    %2609 = vmatprep.subr.mxu0 0.0
    %2610 = vmatpush1.msra.mxu0 0.0
    %2611 = vmatprep.subr.mxu0 0.0
    %2612 = vmatpush1.msra.mxu0 0.0
    %2613 = vmatprep.mubr.f32.mxu0 0.0
    %2614 = vmatmul.mubr.f32.gmra.mrb[0].mxu0 %v2340
    %v2615 = vpop.f32.mrb[0].mxu0
    %v2616 = vadd.f32 %v2427, %v2615
    %v2617 = vpop.f32.mrb[0].mxu0
    %v2618 = vadd.f32 %v2431, %v2617
    %2619 = vmatprep.mubr.f32.mxu0 0.0
    %2620 = vmatmul.mubr.f32.gmra.mrb[0].mxu0 %v2341
    %v2621 = vpop.f32.mrb[0].mxu0
    %v2622 = vadd.f32 %v2427, %v2621
    %v2623 = vpop.f32.mrb[0].mxu0
    %v2624 = vadd.f32 %v2431, %v2623
    %2625 = vmatprep.mubr.f32.mxu0 0.0
    %2626 = vmatmul.mubr.f32.gmra.mrb[0].mxu0 %v2342
    %v2627 = vpop.f32.mrb[0].mxu0
    %v2628 = vadd.f32 %v2427, %v2627
    %v2629 = vpop.f32.mrb[0].mxu0
    %v2630 = vadd.f32 %v2431, %v2629
    %2631 = vmatprep.mubr.f32.mxu0 0.0
    %2632 = vmatmul.mubr.f32.gmra.mrb[0].mxu0 %v2343
    %v2633 = vpop.f32.mrb[0].mxu0
    %v2634 = vadd.f32 %v2427, %v2633
    %v2635 = vpop.f32.mrb[0].mxu0
    %v2636 = vadd.f32 %v2431, %v2635
    %2637 = vmatprep.mubr.f32.mxu0 0.0
    %2638 = vmatmul.mubr.f32.gmra.mrb[0].mxu0 %v2344
    %v2639 = vpop.f32.mrb[0].mxu0
    %v2640 = vadd.f32 %v2427, %v2639
    %v2641 = vpop.f32.mrb[0].mxu0
    %v2642 = vadd.f32 %v2431, %v2641
    %2643 = vmatprep.mubr.f32.mxu0 0.0
    %2644 = vmatmul.mubr.f32.gmra.mrb[0].mxu0 %v2345
    %v2645 = vpop.f32.mrb[0].mxu0
    %v2646 = vadd.f32 %v2427, %v2645
    %v2647 = vpop.f32.mrb[0].mxu0
    %v2648 = vadd.f32 %v2431, %v2647
    %2649 = vmatprep.mubr.f32.mxu0 0.0
    %2650 = vmatmul.mubr.f32.gmra.mrb[0].mxu0 %v2346
    %v2651 = vpop.f32.mrb[0].mxu0
    %v2652 = vadd.f32 %v2427, %v2651
    %v2653 = vpop.f32.mrb[0].mxu0
    %v2654 = vadd.f32 %v2431, %v2653
    %2655 = vmatprep.mubr.f32.mxu0 0.0
    %2656 = vmatmul.mubr.f32.gmra.mrb[0].mxu0 %v2347
    %v2657 = vpop.f32.mrb[0].mxu0
    %v2658 = vadd.f32 %v2427, %v2657
    %v2659 = vpop.f32.mrb[0].mxu0
    %v2660 = vadd.f32 %v2431, %v2659
    %2661 = vdwg.mxu0
    %2662 = vst [vmem:[#allocation3] sm:$0xff] %v2503
    %2663 = vst [vmem:[#allocation3 + $0x8] sm:$0xff] %v2505
    %2664 = vst [vmem:[#allocation3 + $0x10] sm:$0xff] %v2616
    %2665 = vst [vmem:[#allocation3 + $0x18] sm:$0xff] %v2618
    %2666 = vst [vmem:[#allocation3 + $0x20] sm:$0xff] %v2509
    %2667 = vst [vmem:[#allocation3 + $0x28] sm:$0xff] %v2511
    %2668 = vst [vmem:[#allocation3 + $0x30] sm:$0xff] %v2622
    %2669 = vst [vmem:[#allocation3 + $0x38] sm:$0xff] %v2624
    %2670 = vst [vmem:[#allocation3 + $0x40] sm:$0xff] %v2515
    %2671 = vst [vmem:[#allocation3 + $0x48] sm:$0xff] %v2517
    %2672 = vst [vmem:[#allocation3 + $0x50] sm:$0xff] %v2628
    %2673 = vst [vmem:[#allocation3 + $0x58] sm:$0xff] %v2630
    %2674 = vst [vmem:[#allocation3 + $0x60] sm:$0xff] %v2521
    %2675 = vst [vmem:[#allocation3 + $0x68] sm:$0xff] %v2523
    %2676 = vst [vmem:[#allocation3 + $0x70] sm:$0xff] %v2634
    %2677 = vst [vmem:[#allocation3 + $0x78] sm:$0xff] %v2636
    %2678 = vst [vmem:[#allocation3 + $0x80] sm:$0xff] %v2527
    %2679 = vst [vmem:[#allocation3 + $0x88] sm:$0xff] %v2529
    %2680 = vst [vmem:[#allocation3 + $0x90] sm:$0xff] %v2640
    %2681 = vst [vmem:[#allocation3 + $0x98] sm:$0xff] %v2642
    %2682 = vst [vmem:[#allocation3 + $0xa0] sm:$0xff] %v2533
    %2683 = vst [vmem:[#allocation3 + $0xa8] sm:$0xff] %v2535
    %2684 = vst [vmem:[#allocation3 + $0xb0] sm:$0xff] %v2646
    %2685 = vst [vmem:[#allocation3 + $0xb8] sm:$0xff] %v2648
    %2686 = vst [vmem:[#allocation3 + $0xc0] sm:$0xff] %v2539
    %2687 = vst [vmem:[#allocation3 + $0xc8] sm:$0xff] %v2541
    %2688 = vst [vmem:[#allocation3 + $0xd0] sm:$0xff] %v2652
    %2689 = vst [vmem:[#allocation3 + $0xd8] sm:$0xff] %v2654
    %2690 = vst [vmem:[#allocation3 + $0xe0] sm:$0xff] %v2545
    %2691 = vst [vmem:[#allocation3 + $0xe8] sm:$0xff] %v2547
    %2692 = vst [vmem:[#allocation3 + $0xf0] sm:$0xff] %v2658
    %2693 = vst [vmem:[#allocation3 + $0xf8] sm:$0xff] %v2660
    %v2694 = vld [vmem:[%s399] sm:$0xff]
    %v2695 = vld [vmem:[%s399 + $0x8] sm:$0xff]
    %v2696 = vld [vmem:[%s399 + $0x10] sm:$0xff]
    %v2697 = vld [vmem:[%s399 + $0x18] sm:$0xff]
    %s2698 = scalar_lea.vmem [#allocation6], 512
    %v2699 = vld [vmem:[%s2698] sm:$0xff]
    %v2700 = vld [vmem:[%s2698 + $0x8] sm:$0xff]
    %v2701 = vld [vmem:[%s2698 + $0x10] sm:$0xff]
    %v2702 = vld [vmem:[%s2698 + $0x18] sm:$0xff]
    %v2703 = vld [vmem:[%s2698 + $0x20] sm:$0xff]
    %v2704 = vld [vmem:[%s2698 + $0x28] sm:$0xff]
    %v2705 = vld [vmem:[%s2698 + $0x30] sm:$0xff]
    %v2706 = vld [vmem:[%s2698 + $0x38] sm:$0xff]
    %v2707 = vld [vmem:[%s2698 + $0x40] sm:$0xff]
    %v2708 = vld [vmem:[%s2698 + $0x48] sm:$0xff]
    %v2709 = vld [vmem:[%s2698 + $0x50] sm:$0xff]
    %v2710 = vld [vmem:[%s2698 + $0x58] sm:$0xff]
    %v2711 = vld [vmem:[%s2698 + $0x60] sm:$0xff]
    %v2712 = vld [vmem:[%s2698 + $0x68] sm:$0xff]
    %v2713 = vld [vmem:[%s2698 + $0x70] sm:$0xff]
    %v2714 = vld [vmem:[%s2698 + $0x78] sm:$0xff]
    %v2715 = vld [vmem:[%s2698 + $0x80] sm:$0xff]
    %v2716 = vld [vmem:[%s2698 + $0x88] sm:$0xff]
    %v2717 = vld [vmem:[%s2698 + $0x90] sm:$0xff]
    %v2718 = vld [vmem:[%s2698 + $0x98] sm:$0xff]
    %v2719 = vld [vmem:[%s2698 + $0xa0] sm:$0xff]
    %v2720 = vld [vmem:[%s2698 + $0xa8] sm:$0xff]
    %v2721 = vld [vmem:[%s2698 + $0xb0] sm:$0xff]
    %v2722 = vld [vmem:[%s2698 + $0xb8] sm:$0xff]
    %v2723 = vld [vmem:[%s2698 + $0xc0] sm:$0xff]
    %v2724 = vld [vmem:[%s2698 + $0xc8] sm:$0xff]
    %v2725 = vld [vmem:[%s2698 + $0xd0] sm:$0xff]
    %v2726 = vld [vmem:[%s2698 + $0xd8] sm:$0xff]
    %v2727 = vld [vmem:[%s2698 + $0xe0] sm:$0xff]
    %v2728 = vld [vmem:[%s2698 + $0xe8] sm:$0xff]
    %v2729 = vld [vmem:[%s2698 + $0xf0] sm:$0xff]
    %v2730 = vld [vmem:[%s2698 + $0xf8] sm:$0xff]
    %v2731 = vld [vmem:[%s2698 + $0x100] sm:$0xff]
    %v2732 = vld [vmem:[%s2698 + $0x108] sm:$0xff]
    %v2733 = vld [vmem:[%s2698 + $0x110] sm:$0xff]
    %v2734 = vld [vmem:[%s2698 + $0x118] sm:$0xff]
    %v2735 = vld [vmem:[%s2698 + $0x120] sm:$0xff]
    %v2736 = vld [vmem:[%s2698 + $0x128] sm:$0xff]
    %v2737 = vld [vmem:[%s2698 + $0x130] sm:$0xff]
    %v2738 = vld [vmem:[%s2698 + $0x138] sm:$0xff]
    %v2739 = vld [vmem:[%s2698 + $0x140] sm:$0xff]
    %v2740 = vld [vmem:[%s2698 + $0x148] sm:$0xff]
    %v2741 = vld [vmem:[%s2698 + $0x150] sm:$0xff]
    %v2742 = vld [vmem:[%s2698 + $0x158] sm:$0xff]
    %v2743 = vld [vmem:[%s2698 + $0x160] sm:$0xff]
    %v2744 = vld [vmem:[%s2698 + $0x168] sm:$0xff]
    %v2745 = vld [vmem:[%s2698 + $0x170] sm:$0xff]
    %v2746 = vld [vmem:[%s2698 + $0x178] sm:$0xff]
    %v2747 = vld [vmem:[%s2698 + $0x180] sm:$0xff]
    %v2748 = vld [vmem:[%s2698 + $0x188] sm:$0xff]
    %v2749 = vld [vmem:[%s2698 + $0x190] sm:$0xff]
    %v2750 = vld [vmem:[%s2698 + $0x198] sm:$0xff]
    %v2751 = vld [vmem:[%s2698 + $0x1a0] sm:$0xff]
    %v2752 = vld [vmem:[%s2698 + $0x1a8] sm:$0xff]
    %v2753 = vld [vmem:[%s2698 + $0x1b0] sm:$0xff]
    %v2754 = vld [vmem:[%s2698 + $0x1b8] sm:$0xff]
    %v2755 = vld [vmem:[%s2698 + $0x1c0] sm:$0xff]
    %v2756 = vld [vmem:[%s2698 + $0x1c8] sm:$0xff]
    %v2757 = vld [vmem:[%s2698 + $0x1d0] sm:$0xff]
    %v2758 = vld [vmem:[%s2698 + $0x1d8] sm:$0xff]
    %v2759 = vld [vmem:[%s2698 + $0x1e0] sm:$0xff]
    %v2760 = vld [vmem:[%s2698 + $0x1e8] sm:$0xff]
    %v2761 = vld [vmem:[%s2698 + $0x1f0] sm:$0xff]
    %v2762 = vld [vmem:[%s2698 + $0x1f8] sm:$0xff]
    %2763 = vmatprep.subr.mxu0 %v2700
    %2764 = vmatpush1.msra.mxu0 %v2699
    %2765 = vmatprep.subr.mxu0 %v2704
    %2766 = vmatpush1.msra.mxu0 %v2703
    %2767 = vmatprep.subr.mxu0 %v2708
    %2768 = vmatpush1.msra.mxu0 %v2707
    %2769 = vmatprep.subr.mxu0 %v2712
    %2770 = vmatpush1.msra.mxu0 %v2711
    %2771 = vmatprep.subr.mxu0 %v2716
    %2772 = vmatpush1.msra.mxu0 %v2715
    %2773 = vmatprep.subr.mxu0 %v2720
    %2774 = vmatpush1.msra.mxu0 %v2719
    %2775 = vmatprep.subr.mxu0 %v2724
    %2776 = vmatpush1.msra.mxu0 %v2723
    %2777 = vmatprep.subr.mxu0 %v2728
    %2778 = vmatpush1.msra.mxu0 %v2727
    %2779 = vmatprep.subr.mxu0 %v2732
    %2780 = vmatpush1.msra.mxu0 %v2731
    %2781 = vmatprep.subr.mxu0 %v2736
    %2782 = vmatpush1.msra.mxu0 %v2735
    %2783 = vmatprep.subr.mxu0 %v2740
    %2784 = vmatpush1.msra.mxu0 %v2739
    %2785 = vmatprep.subr.mxu0 %v2744
    %2786 = vmatpush1.msra.mxu0 %v2743
    %2787 = vmatprep.subr.mxu0 %v2748
    %2788 = vmatpush1.msra.mxu0 %v2747
    %2789 = vmatprep.subr.mxu0 %v2752
    %2790 = vmatpush1.msra.mxu0 %v2751
    %2791 = vmatprep.subr.mxu0 %v2756
    %2792 = vmatpush1.msra.mxu0 %v2755
    %2793 = vmatprep.subr.mxu0 %v2760
    %2794 = vmatpush1.msra.mxu0 %v2759
    %2795 = vmatprep.subr.mxu0 0.0
    %2796 = vmatpush1.msra.mxu0 0.0
    %2797 = vmatprep.subr.mxu0 0.0
    %2798 = vmatpush1.msra.mxu0 0.0
    %2799 = vmatprep.subr.mxu0 0.0
    %2800 = vmatpush1.msra.mxu0 0.0
    %2801 = vmatprep.subr.mxu0 0.0
    %2802 = vmatpush1.msra.mxu0 0.0
    %2803 = vmatprep.subr.mxu0 0.0
    %2804 = vmatpush1.msra.mxu0 0.0
    %2805 = vmatprep.subr.mxu0 0.0
    %2806 = vmatpush1.msra.mxu0 0.0
    %2807 = vmatprep.subr.mxu0 0.0
    %2808 = vmatpush1.msra.mxu0 0.0
    %2809 = vmatprep.subr.mxu0 0.0
    %2810 = vmatpush1.msra.mxu0 0.0
    %2811 = vmatprep.subr.mxu0 0.0
    %2812 = vmatpush1.msra.mxu0 0.0
    %2813 = vmatprep.subr.mxu0 0.0
    %2814 = vmatpush1.msra.mxu0 0.0
    %2815 = vmatprep.subr.mxu0 0.0
    %2816 = vmatpush1.msra.mxu0 0.0
    %2817 = vmatprep.subr.mxu0 0.0
    %2818 = vmatpush1.msra.mxu0 0.0
    %2819 = vmatprep.subr.mxu0 0.0
    %2820 = vmatpush1.msra.mxu0 0.0
    %2821 = vmatprep.subr.mxu0 0.0
    %2822 = vmatpush1.msra.mxu0 0.0
    %2823 = vmatprep.subr.mxu0 0.0
    %2824 = vmatpush1.msra.mxu0 0.0
    %2825 = vmatprep.subr.mxu0 0.0
    %2826 = vmatpush1.msra.mxu0 0.0
    %2827 = vmatprep.mubr.f32.mxu0 0.0
    %2828 = vmatmul.mubr.f32.gmra.mrb[0].mxu0 0.0
    %v2829 = vpop.f32.mrb[0].mxu0
    %v2830 = vadd.f32 0.0, %v2829
    %v2831 = vpop.f32.mrb[0].mxu0
    %v2832 = vadd.f32 0.0, %v2831
    %2833 = vdwg.mxu0
    %2834 = vmatprep.subr.mxu0 %v2702
    %2835 = vmatpush1.msra.mxu0 %v2701
    %2836 = vmatprep.subr.mxu0 %v2706
    %2837 = vmatpush1.msra.mxu0 %v2705
    %2838 = vmatprep.subr.mxu0 %v2710
    %2839 = vmatpush1.msra.mxu0 %v2709
    %2840 = vmatprep.subr.mxu0 %v2714
    %2841 = vmatpush1.msra.mxu0 %v2713
    %2842 = vmatprep.subr.mxu0 %v2718
    %2843 = vmatpush1.msra.mxu0 %v2717
    %2844 = vmatprep.subr.mxu0 %v2722
    %2845 = vmatpush1.msra.mxu0 %v2721
    %2846 = vmatprep.subr.mxu0 %v2726
    %2847 = vmatpush1.msra.mxu0 %v2725
    %2848 = vmatprep.subr.mxu0 %v2730
    %2849 = vmatpush1.msra.mxu0 %v2729
    %2850 = vmatprep.subr.mxu0 %v2734
    %2851 = vmatpush1.msra.mxu0 %v2733
    %2852 = vmatprep.subr.mxu0 %v2738
    %2853 = vmatpush1.msra.mxu0 %v2737
    %2854 = vmatprep.subr.mxu0 %v2742
    %2855 = vmatpush1.msra.mxu0 %v2741
    %2856 = vmatprep.subr.mxu0 %v2746
    %2857 = vmatpush1.msra.mxu0 %v2745
    %2858 = vmatprep.subr.mxu0 %v2750
    %2859 = vmatpush1.msra.mxu0 %v2749
    %2860 = vmatprep.subr.mxu0 %v2754
    %2861 = vmatpush1.msra.mxu0 %v2753
    %2862 = vmatprep.subr.mxu0 %v2758
    %2863 = vmatpush1.msra.mxu0 %v2757
    %2864 = vmatprep.subr.mxu0 %v2762
    %2865 = vmatpush1.msra.mxu0 %v2761
    %2866 = vmatprep.subr.mxu0 0.0
    %2867 = vmatpush1.msra.mxu0 0.0
    %2868 = vmatprep.subr.mxu0 0.0
    %2869 = vmatpush1.msra.mxu0 0.0
    %2870 = vmatprep.subr.mxu0 0.0
    %2871 = vmatpush1.msra.mxu0 0.0
    %2872 = vmatprep.subr.mxu0 0.0
    %2873 = vmatpush1.msra.mxu0 0.0
    %2874 = vmatprep.subr.mxu0 0.0
    %2875 = vmatpush1.msra.mxu0 0.0
    %2876 = vmatprep.subr.mxu0 0.0
    %2877 = vmatpush1.msra.mxu0 0.0
    %2878 = vmatprep.subr.mxu0 0.0
    %2879 = vmatpush1.msra.mxu0 0.0
    %2880 = vmatprep.subr.mxu0 0.0
    %2881 = vmatpush1.msra.mxu0 0.0
    %2882 = vmatprep.subr.mxu0 0.0
    %2883 = vmatpush1.msra.mxu0 0.0
    %2884 = vmatprep.subr.mxu0 0.0
    %2885 = vmatpush1.msra.mxu0 0.0
    %2886 = vmatprep.subr.mxu0 0.0
    %2887 = vmatpush1.msra.mxu0 0.0
    %2888 = vmatprep.subr.mxu0 0.0
    %2889 = vmatpush1.msra.mxu0 0.0
    %2890 = vmatprep.subr.mxu0 0.0
    %2891 = vmatpush1.msra.mxu0 0.0
    %2892 = vmatprep.subr.mxu0 0.0
    %2893 = vmatpush1.msra.mxu0 0.0
    %2894 = vmatprep.subr.mxu0 0.0
    %2895 = vmatpush1.msra.mxu0 0.0
    %2896 = vmatprep.subr.mxu0 0.0
    %2897 = vmatpush1.msra.mxu0 0.0
    %2898 = vmatprep.mubr.f32.mxu0 0.0
    %2899 = vmatmul.mubr.f32.gmra.mrb[0].mxu0 0.0
    %v2900 = vpop.f32.mrb[0].mxu0
    %v2901 = vadd.f32 0.0, %v2900
    %v2902 = vpop.f32.mrb[0].mxu0
    %v2903 = vadd.f32 0.0, %v2902
    %2904 = vdwg.mxu0
    %v2905 = vadd.f32 %v2694, %v2830
    %v2906 = vadd.f32 %v2695, %v2832
    %v2907 = vadd.f32 %v2696, %v2901
    %v2908 = vadd.f32 %v2697, %v2903
    %v2909 = vxor.u32 %v2905, 2147483648
    %v2910 = vmul.f32 %v2909, 1.442695
    %v2911 = vpow.pop %v2910
    %v2912 = vadd.f32 %v2911, 1.0
    %v2913 = vrcp.pop %v2912
    %v2914 = vmul.f32 1.0, %v2913
    %v2915 = vxor.u32 %v2906, 2147483648
    %v2916 = vmul.f32 %v2915, 1.442695
    %v2917 = vpow.pop %v2916
    %v2918 = vadd.f32 %v2917, 1.0
    %v2919 = vrcp.pop %v2918
    %v2920 = vmul.f32 1.0, %v2919
    %v2921 = vtanh.pop %v2907
    %v2922 = vxor.u32 %v2908, 2147483648
    %v2923 = vmul.f32 %v2922, 1.442695
    %v2924 = vpow.pop %v2923
    %v2925 = vadd.f32 %v2924, 1.0
    %v2926 = vrcp.pop %v2925
    %v2927 = vmul.f32 1.0, %v2926
    %v2928 = vmul.f32 %v2920, 0.0
    %v2929 = vmul.f32 %v2914, %v2921
    %v2930 = vadd.f32 %v2928, %v2929
    %v2931 = vtanh.pop %v2930
    %v2932 = vmul.f32 %v2927, %v2931
    %2933 = vst [vmem:[%s4] sm:$0xff] %v2932
    %v2934 = vld [vmem:[%s641] sm:$0xff]
    %v2935 = vld [vmem:[%s641 + $0x8] sm:$0xff]
    %v2936 = vld [vmem:[%s641 + $0x10] sm:$0xff]
    %v2937 = vld [vmem:[%s641 + $0x18] sm:$0xff]
    %v2938 = vld [vmem:[%s2698] sm:$0xff]
    %v2939 = vld [vmem:[%s2698 + $0x8] sm:$0xff]
    %v2940 = vld [vmem:[%s2698 + $0x10] sm:$0xff]
    %v2941 = vld [vmem:[%s2698 + $0x18] sm:$0xff]
    %v2942 = vld [vmem:[%s2698 + $0x20] sm:$0xff]
    %v2943 = vld [vmem:[%s2698 + $0x28] sm:$0xff]
    %v2944 = vld [vmem:[%s2698 + $0x30] sm:$0xff]
    %v2945 = vld [vmem:[%s2698 + $0x38] sm:$0xff]
    %v2946 = vld [vmem:[%s2698 + $0x40] sm:$0xff]
    %v2947 = vld [vmem:[%s2698 + $0x48] sm:$0xff]
    %v2948 = vld [vmem:[%s2698 + $0x50] sm:$0xff]
    %v2949 = vld [vmem:[%s2698 + $0x58] sm:$0xff]
    %v2950 = vld [vmem:[%s2698 + $0x60] sm:$0xff]
    %v2951 = vld [vmem:[%s2698 + $0x68] sm:$0xff]
    %v2952 = vld [vmem:[%s2698 + $0x70] sm:$0xff]
    %v2953 = vld [vmem:[%s2698 + $0x78] sm:$0xff]
    %v2954 = vld [vmem:[%s2698 + $0x80] sm:$0xff]
    %v2955 = vld [vmem:[%s2698 + $0x88] sm:$0xff]
    %v2956 = vld [vmem:[%s2698 + $0x90] sm:$0xff]
    %v2957 = vld [vmem:[%s2698 + $0x98] sm:$0xff]
    %v2958 = vld [vmem:[%s2698 + $0xa0] sm:$0xff]
    %v2959 = vld [vmem:[%s2698 + $0xa8] sm:$0xff]
    %v2960 = vld [vmem:[%s2698 + $0xb0] sm:$0xff]
    %v2961 = vld [vmem:[%s2698 + $0xb8] sm:$0xff]
    %v2962 = vld [vmem:[%s2698 + $0xc0] sm:$0xff]
    %v2963 = vld [vmem:[%s2698 + $0xc8] sm:$0xff]
    %v2964 = vld [vmem:[%s2698 + $0xd0] sm:$0xff]
    %v2965 = vld [vmem:[%s2698 + $0xd8] sm:$0xff]
    %v2966 = vld [vmem:[%s2698 + $0xe0] sm:$0xff]
    %v2967 = vld [vmem:[%s2698 + $0xe8] sm:$0xff]
    %v2968 = vld [vmem:[%s2698 + $0xf0] sm:$0xff]
    %v2969 = vld [vmem:[%s2698 + $0xf8] sm:$0xff]
    %v2970 = vld [vmem:[%s2698 + $0x100] sm:$0xff]
    %v2971 = vld [vmem:[%s2698 + $0x108] sm:$0xff]
    %v2972 = vld [vmem:[%s2698 + $0x110] sm:$0xff]
    %v2973 = vld [vmem:[%s2698 + $0x118] sm:$0xff]
    %v2974 = vld [vmem:[%s2698 + $0x120] sm:$0xff]
    %v2975 = vld [vmem:[%s2698 + $0x128] sm:$0xff]
    %v2976 = vld [vmem:[%s2698 + $0x130] sm:$0xff]
    %v2977 = vld [vmem:[%s2698 + $0x138] sm:$0xff]
    %v2978 = vld [vmem:[%s2698 + $0x140] sm:$0xff]
    %v2979 = vld [vmem:[%s2698 + $0x148] sm:$0xff]
    %v2980 = vld [vmem:[%s2698 + $0x150] sm:$0xff]
    %v2981 = vld [vmem:[%s2698 + $0x158] sm:$0xff]
    %v2982 = vld [vmem:[%s2698 + $0x160] sm:$0xff]
    %v2983 = vld [vmem:[%s2698 + $0x168] sm:$0xff]
    %v2984 = vld [vmem:[%s2698 + $0x170] sm:$0xff]
    %v2985 = vld [vmem:[%s2698 + $0x178] sm:$0xff]
    %v2986 = vld [vmem:[%s2698 + $0x180] sm:$0xff]
    %v2987 = vld [vmem:[%s2698 + $0x188] sm:$0xff]
    %v2988 = vld [vmem:[%s2698 + $0x190] sm:$0xff]
    %v2989 = vld [vmem:[%s2698 + $0x198] sm:$0xff]
    %v2990 = vld [vmem:[%s2698 + $0x1a0] sm:$0xff]
    %v2991 = vld [vmem:[%s2698 + $0x1a8] sm:$0xff]
    %v2992 = vld [vmem:[%s2698 + $0x1b0] sm:$0xff]
    %v2993 = vld [vmem:[%s2698 + $0x1b8] sm:$0xff]
    %v2994 = vld [vmem:[%s2698 + $0x1c0] sm:$0xff]
    %v2995 = vld [vmem:[%s2698 + $0x1c8] sm:$0xff]
    %v2996 = vld [vmem:[%s2698 + $0x1d0] sm:$0xff]
    %v2997 = vld [vmem:[%s2698 + $0x1d8] sm:$0xff]
    %v2998 = vld [vmem:[%s2698 + $0x1e0] sm:$0xff]
    %v2999 = vld [vmem:[%s2698 + $0x1e8] sm:$0xff]
    %v3000 = vld [vmem:[%s2698 + $0x1f0] sm:$0xff]
    %v3001 = vld [vmem:[%s2698 + $0x1f8] sm:$0xff]
    %3002 = vmatprep.subr.mxu0 %v2939
    %3003 = vmatpush1.msra.mxu0 %v2938
    %3004 = vmatprep.subr.mxu0 %v2943
    %3005 = vmatpush1.msra.mxu0 %v2942
    %3006 = vmatprep.subr.mxu0 %v2947
    %3007 = vmatpush1.msra.mxu0 %v2946
    %3008 = vmatprep.subr.mxu0 %v2951
    %3009 = vmatpush1.msra.mxu0 %v2950
    %3010 = vmatprep.subr.mxu0 %v2955
    %3011 = vmatpush1.msra.mxu0 %v2954
    %3012 = vmatprep.subr.mxu0 %v2959
    %3013 = vmatpush1.msra.mxu0 %v2958
    %3014 = vmatprep.subr.mxu0 %v2963
    %3015 = vmatpush1.msra.mxu0 %v2962
    %3016 = vmatprep.subr.mxu0 %v2967
    %3017 = vmatpush1.msra.mxu0 %v2966
    %3018 = vmatprep.subr.mxu0 %v2971
    %3019 = vmatpush1.msra.mxu0 %v2970
    %3020 = vmatprep.subr.mxu0 %v2975
    %3021 = vmatpush1.msra.mxu0 %v2974
    %3022 = vmatprep.subr.mxu0 %v2979
    %3023 = vmatpush1.msra.mxu0 %v2978
    %3024 = vmatprep.subr.mxu0 %v2983
    %3025 = vmatpush1.msra.mxu0 %v2982
    %3026 = vmatprep.subr.mxu0 %v2987
    %3027 = vmatpush1.msra.mxu0 %v2986
    %3028 = vmatprep.subr.mxu0 %v2991
    %3029 = vmatpush1.msra.mxu0 %v2990
    %3030 = vmatprep.subr.mxu0 %v2995
    %3031 = vmatpush1.msra.mxu0 %v2994
    %3032 = vmatprep.subr.mxu0 %v2999
    %3033 = vmatpush1.msra.mxu0 %v2998
    %3034 = vmatprep.subr.mxu0 0.0
    %3035 = vmatpush1.msra.mxu0 0.0
    %3036 = vmatprep.subr.mxu0 0.0
    %3037 = vmatpush1.msra.mxu0 0.0
    %3038 = vmatprep.subr.mxu0 0.0
    %3039 = vmatpush1.msra.mxu0 0.0
    %3040 = vmatprep.subr.mxu0 0.0
    %3041 = vmatpush1.msra.mxu0 0.0
    %3042 = vmatprep.subr.mxu0 0.0
    %3043 = vmatpush1.msra.mxu0 0.0
    %3044 = vmatprep.subr.mxu0 0.0
    %3045 = vmatpush1.msra.mxu0 0.0
    %3046 = vmatprep.subr.mxu0 0.0
    %3047 = vmatpush1.msra.mxu0 0.0
    %3048 = vmatprep.subr.mxu0 0.0
    %3049 = vmatpush1.msra.mxu0 0.0
    %3050 = vmatprep.subr.mxu0 0.0
    %3051 = vmatpush1.msra.mxu0 0.0
    %3052 = vmatprep.subr.mxu0 0.0
    %3053 = vmatpush1.msra.mxu0 0.0
    %3054 = vmatprep.subr.mxu0 0.0
    %3055 = vmatpush1.msra.mxu0 0.0
    %3056 = vmatprep.subr.mxu0 0.0
    %3057 = vmatpush1.msra.mxu0 0.0
    %3058 = vmatprep.subr.mxu0 0.0
    %3059 = vmatpush1.msra.mxu0 0.0
    %3060 = vmatprep.subr.mxu0 0.0
    %3061 = vmatpush1.msra.mxu0 0.0
    %3062 = vmatprep.subr.mxu0 0.0
    %3063 = vmatpush1.msra.mxu0 0.0
    %3064 = vmatprep.subr.mxu0 0.0
    %3065 = vmatpush1.msra.mxu0 0.0
    %3066 = vmatprep.mubr.f32.mxu0 0.0
    %3067 = vmatmul.mubr.f32.gmra.mrb[0].mxu0 %v2932
    %v3068 = vpop.f32.mrb[0].mxu0
    %v3069 = vadd.f32 0.0, %v3068
    %v3070 = vpop.f32.mrb[0].mxu0
    %v3071 = vadd.f32 0.0, %v3070
    %3072 = vdwg.mxu0
    %3073 = vmatprep.subr.mxu0 %v2941
    %3074 = vmatpush1.msra.mxu0 %v2940
    %3075 = vmatprep.subr.mxu0 %v2945
    %3076 = vmatpush1.msra.mxu0 %v2944
    %3077 = vmatprep.subr.mxu0 %v2949
    %3078 = vmatpush1.msra.mxu0 %v2948
    %3079 = vmatprep.subr.mxu0 %v2953
    %3080 = vmatpush1.msra.mxu0 %v2952
    %3081 = vmatprep.subr.mxu0 %v2957
    %3082 = vmatpush1.msra.mxu0 %v2956
    %3083 = vmatprep.subr.mxu0 %v2961
    %3084 = vmatpush1.msra.mxu0 %v2960
    %3085 = vmatprep.subr.mxu0 %v2965
    %3086 = vmatpush1.msra.mxu0 %v2964
    %3087 = vmatprep.subr.mxu0 %v2969
    %3088 = vmatpush1.msra.mxu0 %v2968
    %3089 = vmatprep.subr.mxu0 %v2973
    %3090 = vmatpush1.msra.mxu0 %v2972
    %3091 = vmatprep.subr.mxu0 %v2977
    %3092 = vmatpush1.msra.mxu0 %v2976
    %3093 = vmatprep.subr.mxu0 %v2981
    %3094 = vmatpush1.msra.mxu0 %v2980
    %3095 = vmatprep.subr.mxu0 %v2985
    %3096 = vmatpush1.msra.mxu0 %v2984
    %3097 = vmatprep.subr.mxu0 %v2989
    %3098 = vmatpush1.msra.mxu0 %v2988
    %3099 = vmatprep.subr.mxu0 %v2993
    %3100 = vmatpush1.msra.mxu0 %v2992
    %3101 = vmatprep.subr.mxu0 %v2997
    %3102 = vmatpush1.msra.mxu0 %v2996
    %3103 = vmatprep.subr.mxu0 %v3001
    %3104 = vmatpush1.msra.mxu0 %v3000
    %3105 = vmatprep.subr.mxu0 0.0
    %3106 = vmatpush1.msra.mxu0 0.0
    %3107 = vmatprep.subr.mxu0 0.0
    %3108 = vmatpush1.msra.mxu0 0.0
    %3109 = vmatprep.subr.mxu0 0.0
    %3110 = vmatpush1.msra.mxu0 0.0
    %3111 = vmatprep.subr.mxu0 0.0
    %3112 = vmatpush1.msra.mxu0 0.0
    %3113 = vmatprep.subr.mxu0 0.0
    %3114 = vmatpush1.msra.mxu0 0.0
    %3115 = vmatprep.subr.mxu0 0.0
    %3116 = vmatpush1.msra.mxu0 0.0
    %3117 = vmatprep.subr.mxu0 0.0
    %3118 = vmatpush1.msra.mxu0 0.0
    %3119 = vmatprep.subr.mxu0 0.0
    %3120 = vmatpush1.msra.mxu0 0.0
    %3121 = vmatprep.subr.mxu0 0.0
    %3122 = vmatpush1.msra.mxu0 0.0
    %3123 = vmatprep.subr.mxu0 0.0
    %3124 = vmatpush1.msra.mxu0 0.0
    %3125 = vmatprep.subr.mxu0 0.0
    %3126 = vmatpush1.msra.mxu0 0.0
    %3127 = vmatprep.subr.mxu0 0.0
    %3128 = vmatpush1.msra.mxu0 0.0
    %3129 = vmatprep.subr.mxu0 0.0
    %3130 = vmatpush1.msra.mxu0 0.0
    %3131 = vmatprep.subr.mxu0 0.0
    %3132 = vmatpush1.msra.mxu0 0.0
    %3133 = vmatprep.subr.mxu0 0.0
    %3134 = vmatpush1.msra.mxu0 0.0
    %3135 = vmatprep.subr.mxu0 0.0
    %3136 = vmatpush1.msra.mxu0 0.0
    %3137 = vmatprep.mubr.f32.mxu0 0.0
    %3138 = vmatmul.mubr.f32.gmra.mrb[0].mxu0 %v2932
    %v3139 = vpop.f32.mrb[0].mxu0
    %v3140 = vadd.f32 0.0, %v3139
    %v3141 = vpop.f32.mrb[0].mxu0
    %v3142 = vadd.f32 0.0, %v3141
    %3143 = vdwg.mxu0
    %v3144 = vadd.f32 %v2934, %v3069
    %v3145 = vadd.f32 %v2935, %v3071
    %v3146 = vadd.f32 %v2936, %v3140
    %v3147 = vadd.f32 %v2937, %v3142
    %v3148 = vxor.u32 %v3144, 2147483648
    %v3149 = vmul.f32 %v3148, 1.442695
    %v3150 = vpow.pop %v3149
    %v3151 = vadd.f32 %v3150, 1.0
    %v3152 = vrcp.pop %v3151
    %v3153 = vmul.f32 1.0, %v3152
    %v3154 = vxor.u32 %v3145, 2147483648
    %v3155 = vmul.f32 %v3154, 1.442695
    %v3156 = vpow.pop %v3155
    %v3157 = vadd.f32 %v3156, 1.0
    %v3158 = vrcp.pop %v3157
    %v3159 = vmul.f32 1.0, %v3158
    %v3160 = vtanh.pop %v3146
    %v3161 = vxor.u32 %v3147, 2147483648
    %v3162 = vmul.f32 %v3161, 1.442695
    %v3163 = vpow.pop %v3162
    %v3164 = vadd.f32 %v3163, 1.0
    %v3165 = vrcp.pop %v3164
    %v3166 = vmul.f32 1.0, %v3165
    %v3167 = vmul.f32 %v3159, %v2930
    %v3168 = vmul.f32 %v3153, %v3160
    %v3169 = vadd.f32 %v3167, %v3168
    %v3170 = vtanh.pop %v3169
    %v3171 = vmul.f32 %v3166, %v3170
    %s3172 = scalar_lea.vmem %s4, 8
    %3173 = vst [vmem:[%s3172] sm:$0xff] %v3171
    %v3174 = vld [vmem:[%s884] sm:$0xff]
    %v3175 = vld [vmem:[%s884 + $0x8] sm:$0xff]
    %v3176 = vld [vmem:[%s884 + $0x10] sm:$0xff]
    %v3177 = vld [vmem:[%s884 + $0x18] sm:$0xff]
    %v3178 = vld [vmem:[%s2698] sm:$0xff]
    %v3179 = vld [vmem:[%s2698 + $0x8] sm:$0xff]
    %v3180 = vld [vmem:[%s2698 + $0x10] sm:$0xff]
    %v3181 = vld [vmem:[%s2698 + $0x18] sm:$0xff]
    %v3182 = vld [vmem:[%s2698 + $0x20] sm:$0xff]
    %v3183 = vld [vmem:[%s2698 + $0x28] sm:$0xff]
    %v3184 = vld [vmem:[%s2698 + $0x30] sm:$0xff]
    %v3185 = vld [vmem:[%s2698 + $0x38] sm:$0xff]
    %v3186 = vld [vmem:[%s2698 + $0x40] sm:$0xff]
    %v3187 = vld [vmem:[%s2698 + $0x48] sm:$0xff]
    %v3188 = vld [vmem:[%s2698 + $0x50] sm:$0xff]
    %v3189 = vld [vmem:[%s2698 + $0x58] sm:$0xff]
    %v3190 = vld [vmem:[%s2698 + $0x60] sm:$0xff]
    %v3191 = vld [vmem:[%s2698 + $0x68] sm:$0xff]
    %v3192 = vld [vmem:[%s2698 + $0x70] sm:$0xff]
    %v3193 = vld [vmem:[%s2698 + $0x78] sm:$0xff]
    %v3194 = vld [vmem:[%s2698 + $0x80] sm:$0xff]
    %v3195 = vld [vmem:[%s2698 + $0x88] sm:$0xff]
    %v3196 = vld [vmem:[%s2698 + $0x90] sm:$0xff]
    %v3197 = vld [vmem:[%s2698 + $0x98] sm:$0xff]
    %v3198 = vld [vmem:[%s2698 + $0xa0] sm:$0xff]
    %v3199 = vld [vmem:[%s2698 + $0xa8] sm:$0xff]
    %v3200 = vld [vmem:[%s2698 + $0xb0] sm:$0xff]
    %v3201 = vld [vmem:[%s2698 + $0xb8] sm:$0xff]
    %v3202 = vld [vmem:[%s2698 + $0xc0] sm:$0xff]
    %v3203 = vld [vmem:[%s2698 + $0xc8] sm:$0xff]
    %v3204 = vld [vmem:[%s2698 + $0xd0] sm:$0xff]
    %v3205 = vld [vmem:[%s2698 + $0xd8] sm:$0xff]
    %v3206 = vld [vmem:[%s2698 + $0xe0] sm:$0xff]
    %v3207 = vld [vmem:[%s2698 + $0xe8] sm:$0xff]
    %v3208 = vld [vmem:[%s2698 + $0xf0] sm:$0xff]
    %v3209 = vld [vmem:[%s2698 + $0xf8] sm:$0xff]
    %v3210 = vld [vmem:[%s2698 + $0x100] sm:$0xff]
    %v3211 = vld [vmem:[%s2698 + $0x108] sm:$0xff]
    %v3212 = vld [vmem:[%s2698 + $0x110] sm:$0xff]
    %v3213 = vld [vmem:[%s2698 + $0x118] sm:$0xff]
    %v3214 = vld [vmem:[%s2698 + $0x120] sm:$0xff]
    %v3215 = vld [vmem:[%s2698 + $0x128] sm:$0xff]
    %v3216 = vld [vmem:[%s2698 + $0x130] sm:$0xff]
    %v3217 = vld [vmem:[%s2698 + $0x138] sm:$0xff]
    %v3218 = vld [vmem:[%s2698 + $0x140] sm:$0xff]
    %v3219 = vld [vmem:[%s2698 + $0x148] sm:$0xff]
    %v3220 = vld [vmem:[%s2698 + $0x150] sm:$0xff]
    %v3221 = vld [vmem:[%s2698 + $0x158] sm:$0xff]
    %v3222 = vld [vmem:[%s2698 + $0x160] sm:$0xff]
    %v3223 = vld [vmem:[%s2698 + $0x168] sm:$0xff]
    %v3224 = vld [vmem:[%s2698 + $0x170] sm:$0xff]
    %v3225 = vld [vmem:[%s2698 + $0x178] sm:$0xff]
    %v3226 = vld [vmem:[%s2698 + $0x180] sm:$0xff]
    %v3227 = vld [vmem:[%s2698 + $0x188] sm:$0xff]
    %v3228 = vld [vmem:[%s2698 + $0x190] sm:$0xff]
    %v3229 = vld [vmem:[%s2698 + $0x198] sm:$0xff]
    %v3230 = vld [vmem:[%s2698 + $0x1a0] sm:$0xff]
    %v3231 = vld [vmem:[%s2698 + $0x1a8] sm:$0xff]
    %v3232 = vld [vmem:[%s2698 + $0x1b0] sm:$0xff]
    %v3233 = vld [vmem:[%s2698 + $0x1b8] sm:$0xff]
    %v3234 = vld [vmem:[%s2698 + $0x1c0] sm:$0xff]
    %v3235 = vld [vmem:[%s2698 + $0x1c8] sm:$0xff]
    %v3236 = vld [vmem:[%s2698 + $0x1d0] sm:$0xff]
    %v3237 = vld [vmem:[%s2698 + $0x1d8] sm:$0xff]
    %v3238 = vld [vmem:[%s2698 + $0x1e0] sm:$0xff]
    %v3239 = vld [vmem:[%s2698 + $0x1e8] sm:$0xff]
    %v3240 = vld [vmem:[%s2698 + $0x1f0] sm:$0xff]
    %v3241 = vld [vmem:[%s2698 + $0x1f8] sm:$0xff]
    %3242 = vmatprep.subr.mxu0 %v3179
    %3243 = vmatpush1.msra.mxu0 %v3178
    %3244 = vmatprep.subr.mxu0 %v3183
    %3245 = vmatpush1.msra.mxu0 %v3182
    %3246 = vmatprep.subr.mxu0 %v3187
    %3247 = vmatpush1.msra.mxu0 %v3186
    %3248 = vmatprep.subr.mxu0 %v3191
    %3249 = vmatpush1.msra.mxu0 %v3190
    %3250 = vmatprep.subr.mxu0 %v3195
    %3251 = vmatpush1.msra.mxu0 %v3194
    %3252 = vmatprep.subr.mxu0 %v3199
    %3253 = vmatpush1.msra.mxu0 %v3198
    %3254 = vmatprep.subr.mxu0 %v3203
    %3255 = vmatpush1.msra.mxu0 %v3202
    %3256 = vmatprep.subr.mxu0 %v3207
    %3257 = vmatpush1.msra.mxu0 %v3206
    %3258 = vmatprep.subr.mxu0 %v3211
    %3259 = vmatpush1.msra.mxu0 %v3210
    %3260 = vmatprep.subr.mxu0 %v3215
    %3261 = vmatpush1.msra.mxu0 %v3214
    %3262 = vmatprep.subr.mxu0 %v3219
    %3263 = vmatpush1.msra.mxu0 %v3218
    %3264 = vmatprep.subr.mxu0 %v3223
    %3265 = vmatpush1.msra.mxu0 %v3222
    %3266 = vmatprep.subr.mxu0 %v3227
    %3267 = vmatpush1.msra.mxu0 %v3226
    %3268 = vmatprep.subr.mxu0 %v3231
    %3269 = vmatpush1.msra.mxu0 %v3230
    %3270 = vmatprep.subr.mxu0 %v3235
    %3271 = vmatpush1.msra.mxu0 %v3234
    %3272 = vmatprep.subr.mxu0 %v3239
    %3273 = vmatpush1.msra.mxu0 %v3238
    %3274 = vmatprep.subr.mxu0 0.0
    %3275 = vmatpush1.msra.mxu0 0.0
    %3276 = vmatprep.subr.mxu0 0.0
    %3277 = vmatpush1.msra.mxu0 0.0
    %3278 = vmatprep.subr.mxu0 0.0
    %3279 = vmatpush1.msra.mxu0 0.0
    %3280 = vmatprep.subr.mxu0 0.0
    %3281 = vmatpush1.msra.mxu0 0.0
    %3282 = vmatprep.subr.mxu0 0.0
    %3283 = vmatpush1.msra.mxu0 0.0
    %3284 = vmatprep.subr.mxu0 0.0
    %3285 = vmatpush1.msra.mxu0 0.0
    %3286 = vmatprep.subr.mxu0 0.0
    %3287 = vmatpush1.msra.mxu0 0.0
    %3288 = vmatprep.subr.mxu0 0.0
    %3289 = vmatpush1.msra.mxu0 0.0
    %3290 = vmatprep.subr.mxu0 0.0
    %3291 = vmatpush1.msra.mxu0 0.0
    %3292 = vmatprep.subr.mxu0 0.0
    %3293 = vmatpush1.msra.mxu0 0.0
    %3294 = vmatprep.subr.mxu0 0.0
    %3295 = vmatpush1.msra.mxu0 0.0
    %3296 = vmatprep.subr.mxu0 0.0
    %3297 = vmatpush1.msra.mxu0 0.0
    %3298 = vmatprep.subr.mxu0 0.0
    %3299 = vmatpush1.msra.mxu0 0.0
    %3300 = vmatprep.subr.mxu0 0.0
    %3301 = vmatpush1.msra.mxu0 0.0
    %3302 = vmatprep.subr.mxu0 0.0
    %3303 = vmatpush1.msra.mxu0 0.0
    %3304 = vmatprep.subr.mxu0 0.0
    %3305 = vmatpush1.msra.mxu0 0.0
    %3306 = vmatprep.mubr.f32.mxu0 0.0
    %3307 = vmatmul.mubr.f32.gmra.mrb[0].mxu0 %v3171
    %v3308 = vpop.f32.mrb[0].mxu0
    %v3309 = vadd.f32 0.0, %v3308
    %v3310 = vpop.f32.mrb[0].mxu0
    %v3311 = vadd.f32 0.0, %v3310
    %3312 = vdwg.mxu0
    %3313 = vmatprep.subr.mxu0 %v3181
    %3314 = vmatpush1.msra.mxu0 %v3180
    %3315 = vmatprep.subr.mxu0 %v3185
    %3316 = vmatpush1.msra.mxu0 %v3184
    %3317 = vmatprep.subr.mxu0 %v3189
    %3318 = vmatpush1.msra.mxu0 %v3188
    %3319 = vmatprep.subr.mxu0 %v3193
    %3320 = vmatpush1.msra.mxu0 %v3192
    %3321 = vmatprep.subr.mxu0 %v3197
    %3322 = vmatpush1.msra.mxu0 %v3196
    %3323 = vmatprep.subr.mxu0 %v3201
    %3324 = vmatpush1.msra.mxu0 %v3200
    %3325 = vmatprep.subr.mxu0 %v3205
    %3326 = vmatpush1.msra.mxu0 %v3204
    %3327 = vmatprep.subr.mxu0 %v3209
    %3328 = vmatpush1.msra.mxu0 %v3208
    %3329 = vmatprep.subr.mxu0 %v3213
    %3330 = vmatpush1.msra.mxu0 %v3212
    %3331 = vmatprep.subr.mxu0 %v3217
    %3332 = vmatpush1.msra.mxu0 %v3216
    %3333 = vmatprep.subr.mxu0 %v3221
    %3334 = vmatpush1.msra.mxu0 %v3220
    %3335 = vmatprep.subr.mxu0 %v3225
    %3336 = vmatpush1.msra.mxu0 %v3224
    %3337 = vmatprep.subr.mxu0 %v3229
    %3338 = vmatpush1.msra.mxu0 %v3228
    %3339 = vmatprep.subr.mxu0 %v3233
    %3340 = vmatpush1.msra.mxu0 %v3232
    %3341 = vmatprep.subr.mxu0 %v3237
    %3342 = vmatpush1.msra.mxu0 %v3236
    %3343 = vmatprep.subr.mxu0 %v3241
    %3344 = vmatpush1.msra.mxu0 %v3240
    %3345 = vmatprep.subr.mxu0 0.0
    %3346 = vmatpush1.msra.mxu0 0.0
    %3347 = vmatprep.subr.mxu0 0.0
    %3348 = vmatpush1.msra.mxu0 0.0
    %3349 = vmatprep.subr.mxu0 0.0
    %3350 = vmatpush1.msra.mxu0 0.0
    %3351 = vmatprep.subr.mxu0 0.0
    %3352 = vmatpush1.msra.mxu0 0.0
    %3353 = vmatprep.subr.mxu0 0.0
    %3354 = vmatpush1.msra.mxu0 0.0
    %3355 = vmatprep.subr.mxu0 0.0
    %3356 = vmatpush1.msra.mxu0 0.0
    %3357 = vmatprep.subr.mxu0 0.0
    %3358 = vmatpush1.msra.mxu0 0.0
    %3359 = vmatprep.subr.mxu0 0.0
    %3360 = vmatpush1.msra.mxu0 0.0
    %3361 = vmatprep.subr.mxu0 0.0
    %3362 = vmatpush1.msra.mxu0 0.0
    %3363 = vmatprep.subr.mxu0 0.0
    %3364 = vmatpush1.msra.mxu0 0.0
    %3365 = vmatprep.subr.mxu0 0.0
    %3366 = vmatpush1.msra.mxu0 0.0
    %3367 = vmatprep.subr.mxu0 0.0
    %3368 = vmatpush1.msra.mxu0 0.0
    %3369 = vmatprep.subr.mxu0 0.0
    %3370 = vmatpush1.msra.mxu0 0.0
    %3371 = vmatprep.subr.mxu0 0.0
    %3372 = vmatpush1.msra.mxu0 0.0
    %3373 = vmatprep.subr.mxu0 0.0
    %3374 = vmatpush1.msra.mxu0 0.0
    %3375 = vmatprep.subr.mxu0 0.0
    %3376 = vmatpush1.msra.mxu0 0.0
    %3377 = vmatprep.mubr.f32.mxu0 0.0
    %3378 = vmatmul.mubr.f32.gmra.mrb[0].mxu0 %v3171
    %v3379 = vpop.f32.mrb[0].mxu0
    %v3380 = vadd.f32 0.0, %v3379
    %v3381 = vpop.f32.mrb[0].mxu0
    %v3382 = vadd.f32 0.0, %v3381
    %3383 = vdwg.mxu0
    %v3384 = vadd.f32 %v3174, %v3309
    %v3385 = vadd.f32 %v3175, %v3311
    %v3386 = vadd.f32 %v3176, %v3380
    %v3387 = vadd.f32 %v3177, %v3382
    %v3388 = vxor.u32 %v3384, 2147483648
    %v3389 = vmul.f32 %v3388, 1.442695
    %v3390 = vpow.pop %v3389
    %v3391 = vadd.f32 %v3390, 1.0
    %v3392 = vrcp.pop %v3391
    %v3393 = vmul.f32 1.0, %v3392
    %v3394 = vxor.u32 %v3385, 2147483648
    %v3395 = vmul.f32 %v3394, 1.442695
    %v3396 = vpow.pop %v3395
    %v3397 = vadd.f32 %v3396, 1.0
    %v3398 = vrcp.pop %v3397
    %v3399 = vmul.f32 1.0, %v3398
    %v3400 = vtanh.pop %v3386
    %v3401 = vxor.u32 %v3387, 2147483648
    %v3402 = vmul.f32 %v3401, 1.442695
    %v3403 = vpow.pop %v3402
    %v3404 = vadd.f32 %v3403, 1.0
    %v3405 = vrcp.pop %v3404
    %v3406 = vmul.f32 1.0, %v3405
    %v3407 = vmul.f32 %v3399, %v3169
    %v3408 = vmul.f32 %v3393, %v3400
    %v3409 = vadd.f32 %v3407, %v3408
    %v3410 = vtanh.pop %v3409
    %v3411 = vmul.f32 %v3406, %v3410
    %s3412 = scalar_lea.vmem %s4, 16
    %3413 = vst [vmem:[%s3412] sm:$0xff] %v3411
    %v3414 = vld [vmem:[%s1127] sm:$0xff]
    %v3415 = vld [vmem:[%s1127 + $0x8] sm:$0xff]
    %v3416 = vld [vmem:[%s1127 + $0x10] sm:$0xff]
    %v3417 = vld [vmem:[%s1127 + $0x18] sm:$0xff]
    %v3418 = vld [vmem:[%s2698] sm:$0xff]
    %v3419 = vld [vmem:[%s2698 + $0x8] sm:$0xff]
    %v3420 = vld [vmem:[%s2698 + $0x10] sm:$0xff]
    %v3421 = vld [vmem:[%s2698 + $0x18] sm:$0xff]
    %v3422 = vld [vmem:[%s2698 + $0x20] sm:$0xff]
    %v3423 = vld [vmem:[%s2698 + $0x28] sm:$0xff]
    %v3424 = vld [vmem:[%s2698 + $0x30] sm:$0xff]
    %v3425 = vld [vmem:[%s2698 + $0x38] sm:$0xff]
    %v3426 = vld [vmem:[%s2698 + $0x40] sm:$0xff]
    %v3427 = vld [vmem:[%s2698 + $0x48] sm:$0xff]
    %v3428 = vld [vmem:[%s2698 + $0x50] sm:$0xff]
    %v3429 = vld [vmem:[%s2698 + $0x58] sm:$0xff]
    %v3430 = vld [vmem:[%s2698 + $0x60] sm:$0xff]
    %v3431 = vld [vmem:[%s2698 + $0x68] sm:$0xff]
    %v3432 = vld [vmem:[%s2698 + $0x70] sm:$0xff]
    %v3433 = vld [vmem:[%s2698 + $0x78] sm:$0xff]
    %v3434 = vld [vmem:[%s2698 + $0x80] sm:$0xff]
    %v3435 = vld [vmem:[%s2698 + $0x88] sm:$0xff]
    %v3436 = vld [vmem:[%s2698 + $0x90] sm:$0xff]
    %v3437 = vld [vmem:[%s2698 + $0x98] sm:$0xff]
    %v3438 = vld [vmem:[%s2698 + $0xa0] sm:$0xff]
    %v3439 = vld [vmem:[%s2698 + $0xa8] sm:$0xff]
    %v3440 = vld [vmem:[%s2698 + $0xb0] sm:$0xff]
    %v3441 = vld [vmem:[%s2698 + $0xb8] sm:$0xff]
    %v3442 = vld [vmem:[%s2698 + $0xc0] sm:$0xff]
    %v3443 = vld [vmem:[%s2698 + $0xc8] sm:$0xff]
    %v3444 = vld [vmem:[%s2698 + $0xd0] sm:$0xff]
    %v3445 = vld [vmem:[%s2698 + $0xd8] sm:$0xff]
    %v3446 = vld [vmem:[%s2698 + $0xe0] sm:$0xff]
    %v3447 = vld [vmem:[%s2698 + $0xe8] sm:$0xff]
    %v3448 = vld [vmem:[%s2698 + $0xf0] sm:$0xff]
    %v3449 = vld [vmem:[%s2698 + $0xf8] sm:$0xff]
    %v3450 = vld [vmem:[%s2698 + $0x100] sm:$0xff]
    %v3451 = vld [vmem:[%s2698 + $0x108] sm:$0xff]
    %v3452 = vld [vmem:[%s2698 + $0x110] sm:$0xff]
    %v3453 = vld [vmem:[%s2698 + $0x118] sm:$0xff]
    %v3454 = vld [vmem:[%s2698 + $0x120] sm:$0xff]
    %v3455 = vld [vmem:[%s2698 + $0x128] sm:$0xff]
    %v3456 = vld [vmem:[%s2698 + $0x130] sm:$0xff]
    %v3457 = vld [vmem:[%s2698 + $0x138] sm:$0xff]
    %v3458 = vld [vmem:[%s2698 + $0x140] sm:$0xff]
    %v3459 = vld [vmem:[%s2698 + $0x148] sm:$0xff]
    %v3460 = vld [vmem:[%s2698 + $0x150] sm:$0xff]
    %v3461 = vld [vmem:[%s2698 + $0x158] sm:$0xff]
    %v3462 = vld [vmem:[%s2698 + $0x160] sm:$0xff]
    %v3463 = vld [vmem:[%s2698 + $0x168] sm:$0xff]
    %v3464 = vld [vmem:[%s2698 + $0x170] sm:$0xff]
    %v3465 = vld [vmem:[%s2698 + $0x178] sm:$0xff]
    %v3466 = vld [vmem:[%s2698 + $0x180] sm:$0xff]
    %v3467 = vld [vmem:[%s2698 + $0x188] sm:$0xff]
    %v3468 = vld [vmem:[%s2698 + $0x190] sm:$0xff]
    %v3469 = vld [vmem:[%s2698 + $0x198] sm:$0xff]
    %v3470 = vld [vmem:[%s2698 + $0x1a0] sm:$0xff]
    %v3471 = vld [vmem:[%s2698 + $0x1a8] sm:$0xff]
    %v3472 = vld [vmem:[%s2698 + $0x1b0] sm:$0xff]
    %v3473 = vld [vmem:[%s2698 + $0x1b8] sm:$0xff]
    %v3474 = vld [vmem:[%s2698 + $0x1c0] sm:$0xff]
    %v3475 = vld [vmem:[%s2698 + $0x1c8] sm:$0xff]
    %v3476 = vld [vmem:[%s2698 + $0x1d0] sm:$0xff]
    %v3477 = vld [vmem:[%s2698 + $0x1d8] sm:$0xff]
    %v3478 = vld [vmem:[%s2698 + $0x1e0] sm:$0xff]
    %v3479 = vld [vmem:[%s2698 + $0x1e8] sm:$0xff]
    %v3480 = vld [vmem:[%s2698 + $0x1f0] sm:$0xff]
    %v3481 = vld [vmem:[%s2698 + $0x1f8] sm:$0xff]
    %3482 = vmatprep.subr.mxu0 %v3419
    %3483 = vmatpush1.msra.mxu0 %v3418
    %3484 = vmatprep.subr.mxu0 %v3423
    %3485 = vmatpush1.msra.mxu0 %v3422
    %3486 = vmatprep.subr.mxu0 %v3427
    %3487 = vmatpush1.msra.mxu0 %v3426
    %3488 = vmatprep.subr.mxu0 %v3431
    %3489 = vmatpush1.msra.mxu0 %v3430
    %3490 = vmatprep.subr.mxu0 %v3435
    %3491 = vmatpush1.msra.mxu0 %v3434
    %3492 = vmatprep.subr.mxu0 %v3439
    %3493 = vmatpush1.msra.mxu0 %v3438
    %3494 = vmatprep.subr.mxu0 %v3443
    %3495 = vmatpush1.msra.mxu0 %v3442
    %3496 = vmatprep.subr.mxu0 %v3447
    %3497 = vmatpush1.msra.mxu0 %v3446
    %3498 = vmatprep.subr.mxu0 %v3451
    %3499 = vmatpush1.msra.mxu0 %v3450
    %3500 = vmatprep.subr.mxu0 %v3455
    %3501 = vmatpush1.msra.mxu0 %v3454
    %3502 = vmatprep.subr.mxu0 %v3459
    %3503 = vmatpush1.msra.mxu0 %v3458
    %3504 = vmatprep.subr.mxu0 %v3463
    %3505 = vmatpush1.msra.mxu0 %v3462
    %3506 = vmatprep.subr.mxu0 %v3467
    %3507 = vmatpush1.msra.mxu0 %v3466
    %3508 = vmatprep.subr.mxu0 %v3471
    %3509 = vmatpush1.msra.mxu0 %v3470
    %3510 = vmatprep.subr.mxu0 %v3475
    %3511 = vmatpush1.msra.mxu0 %v3474
    %3512 = vmatprep.subr.mxu0 %v3479
    %3513 = vmatpush1.msra.mxu0 %v3478
    %3514 = vmatprep.subr.mxu0 0.0
    %3515 = vmatpush1.msra.mxu0 0.0
    %3516 = vmatprep.subr.mxu0 0.0
    %3517 = vmatpush1.msra.mxu0 0.0
    %3518 = vmatprep.subr.mxu0 0.0
    %3519 = vmatpush1.msra.mxu0 0.0
    %3520 = vmatprep.subr.mxu0 0.0
    %3521 = vmatpush1.msra.mxu0 0.0
    %3522 = vmatprep.subr.mxu0 0.0
    %3523 = vmatpush1.msra.mxu0 0.0
    %3524 = vmatprep.subr.mxu0 0.0
    %3525 = vmatpush1.msra.mxu0 0.0
    %3526 = vmatprep.subr.mxu0 0.0
    %3527 = vmatpush1.msra.mxu0 0.0
    %3528 = vmatprep.subr.mxu0 0.0
    %3529 = vmatpush1.msra.mxu0 0.0
    %3530 = vmatprep.subr.mxu0 0.0
    %3531 = vmatpush1.msra.mxu0 0.0
    %3532 = vmatprep.subr.mxu0 0.0
    %3533 = vmatpush1.msra.mxu0 0.0
    %3534 = vmatprep.subr.mxu0 0.0
    %3535 = vmatpush1.msra.mxu0 0.0
    %3536 = vmatprep.subr.mxu0 0.0
    %3537 = vmatpush1.msra.mxu0 0.0
    %3538 = vmatprep.subr.mxu0 0.0
    %3539 = vmatpush1.msra.mxu0 0.0
    %3540 = vmatprep.subr.mxu0 0.0
    %3541 = vmatpush1.msra.mxu0 0.0
    %3542 = vmatprep.subr.mxu0 0.0
    %3543 = vmatpush1.msra.mxu0 0.0
    %3544 = vmatprep.subr.mxu0 0.0
    %3545 = vmatpush1.msra.mxu0 0.0
    %3546 = vmatprep.mubr.f32.mxu0 0.0
    %3547 = vmatmul.mubr.f32.gmra.mrb[0].mxu0 %v3411
    %v3548 = vpop.f32.mrb[0].mxu0
    %v3549 = vadd.f32 0.0, %v3548
    %v3550 = vpop.f32.mrb[0].mxu0
    %v3551 = vadd.f32 0.0, %v3550
    %3552 = vdwg.mxu0
    %3553 = vmatprep.subr.mxu0 %v3421
    %3554 = vmatpush1.msra.mxu0 %v3420
    %3555 = vmatprep.subr.mxu0 %v3425
    %3556 = vmatpush1.msra.mxu0 %v3424
    %3557 = vmatprep.subr.mxu0 %v3429
    %3558 = vmatpush1.msra.mxu0 %v3428
    %3559 = vmatprep.subr.mxu0 %v3433
    %3560 = vmatpush1.msra.mxu0 %v3432
    %3561 = vmatprep.subr.mxu0 %v3437
    %3562 = vmatpush1.msra.mxu0 %v3436
    %3563 = vmatprep.subr.mxu0 %v3441
    %3564 = vmatpush1.msra.mxu0 %v3440
    %3565 = vmatprep.subr.mxu0 %v3445
    %3566 = vmatpush1.msra.mxu0 %v3444
    %3567 = vmatprep.subr.mxu0 %v3449
    %3568 = vmatpush1.msra.mxu0 %v3448
    %3569 = vmatprep.subr.mxu0 %v3453
    %3570 = vmatpush1.msra.mxu0 %v3452
    %3571 = vmatprep.subr.mxu0 %v3457
    %3572 = vmatpush1.msra.mxu0 %v3456
    %3573 = vmatprep.subr.mxu0 %v3461
    %3574 = vmatpush1.msra.mxu0 %v3460
    %3575 = vmatprep.subr.mxu0 %v3465
    %3576 = vmatpush1.msra.mxu0 %v3464
    %3577 = vmatprep.subr.mxu0 %v3469
    %3578 = vmatpush1.msra.mxu0 %v3468
    %3579 = vmatprep.subr.mxu0 %v3473
    %3580 = vmatpush1.msra.mxu0 %v3472
    %3581 = vmatprep.subr.mxu0 %v3477
    %3582 = vmatpush1.msra.mxu0 %v3476
    %3583 = vmatprep.subr.mxu0 %v3481
    %3584 = vmatpush1.msra.mxu0 %v3480
    %3585 = vmatprep.subr.mxu0 0.0
    %3586 = vmatpush1.msra.mxu0 0.0
    %3587 = vmatprep.subr.mxu0 0.0
    %3588 = vmatpush1.msra.mxu0 0.0
    %3589 = vmatprep.subr.mxu0 0.0
    %3590 = vmatpush1.msra.mxu0 0.0
    %3591 = vmatprep.subr.mxu0 0.0
    %3592 = vmatpush1.msra.mxu0 0.0
    %3593 = vmatprep.subr.mxu0 0.0
    %3594 = vmatpush1.msra.mxu0 0.0
    %3595 = vmatprep.subr.mxu0 0.0
    %3596 = vmatpush1.msra.mxu0 0.0
    %3597 = vmatprep.subr.mxu0 0.0
    %3598 = vmatpush1.msra.mxu0 0.0
    %3599 = vmatprep.subr.mxu0 0.0
    %3600 = vmatpush1.msra.mxu0 0.0
    %3601 = vmatprep.subr.mxu0 0.0
    %3602 = vmatpush1.msra.mxu0 0.0
    %3603 = vmatprep.subr.mxu0 0.0
    %3604 = vmatpush1.msra.mxu0 0.0
    %3605 = vmatprep.subr.mxu0 0.0
    %3606 = vmatpush1.msra.mxu0 0.0
    %3607 = vmatprep.subr.mxu0 0.0
    %3608 = vmatpush1.msra.mxu0 0.0
    %3609 = vmatprep.subr.mxu0 0.0
    %3610 = vmatpush1.msra.mxu0 0.0
    %3611 = vmatprep.subr.mxu0 0.0
    %3612 = vmatpush1.msra.mxu0 0.0
    %3613 = vmatprep.subr.mxu0 0.0
    %3614 = vmatpush1.msra.mxu0 0.0
    %3615 = vmatprep.subr.mxu0 0.0
    %3616 = vmatpush1.msra.mxu0 0.0
    %3617 = vmatprep.mubr.f32.mxu0 0.0
    %3618 = vmatmul.mubr.f32.gmra.mrb[0].mxu0 %v3411
    %v3619 = vpop.f32.mrb[0].mxu0
    %v3620 = vadd.f32 0.0, %v3619
    %v3621 = vpop.f32.mrb[0].mxu0
    %v3622 = vadd.f32 0.0, %v3621
    %3623 = vdwg.mxu0
    %v3624 = vadd.f32 %v3414, %v3549
    %v3625 = vadd.f32 %v3415, %v3551
    %v3626 = vadd.f32 %v3416, %v3620
    %v3627 = vadd.f32 %v3417, %v3622
    %v3628 = vxor.u32 %v3624, 2147483648
    %v3629 = vmul.f32 %v3628, 1.442695
    %v3630 = vpow.pop %v3629
    %v3631 = vadd.f32 %v3630, 1.0
    %v3632 = vrcp.pop %v3631
    %v3633 = vmul.f32 1.0, %v3632
    %v3634 = vxor.u32 %v3625, 2147483648
    %v3635 = vmul.f32 %v3634, 1.442695
    %v3636 = vpow.pop %v3635
    %v3637 = vadd.f32 %v3636, 1.0
    %v3638 = vrcp.pop %v3637
    %v3639 = vmul.f32 1.0, %v3638
    %v3640 = vtanh.pop %v3626
    %v3641 = vxor.u32 %v3627, 2147483648
    %v3642 = vmul.f32 %v3641, 1.442695
    %v3643 = vpow.pop %v3642
    %v3644 = vadd.f32 %v3643, 1.0
    %v3645 = vrcp.pop %v3644
    %v3646 = vmul.f32 1.0, %v3645
    %v3647 = vmul.f32 %v3639, %v3409
    %v3648 = vmul.f32 %v3633, %v3640
    %v3649 = vadd.f32 %v3647, %v3648
    %v3650 = vtanh.pop %v3649
    %v3651 = vmul.f32 %v3646, %v3650
    %s3652 = scalar_lea.vmem %s4, 24
    %3653 = vst [vmem:[%s3652] sm:$0xff] %v3651
    %v3654 = vld [vmem:[%s1370] sm:$0xff]
    %v3655 = vld [vmem:[%s1370 + $0x8] sm:$0xff]
    %v3656 = vld [vmem:[%s1370 + $0x10] sm:$0xff]
    %v3657 = vld [vmem:[%s1370 + $0x18] sm:$0xff]
    %v3658 = vld [vmem:[%s2698] sm:$0xff]
    %v3659 = vld [vmem:[%s2698 + $0x8] sm:$0xff]
    %v3660 = vld [vmem:[%s2698 + $0x10] sm:$0xff]
    %v3661 = vld [vmem:[%s2698 + $0x18] sm:$0xff]
    %v3662 = vld [vmem:[%s2698 + $0x20] sm:$0xff]
    %v3663 = vld [vmem:[%s2698 + $0x28] sm:$0xff]
    %v3664 = vld [vmem:[%s2698 + $0x30] sm:$0xff]
    %v3665 = vld [vmem:[%s2698 + $0x38] sm:$0xff]
    %v3666 = vld [vmem:[%s2698 + $0x40] sm:$0xff]
    %v3667 = vld [vmem:[%s2698 + $0x48] sm:$0xff]
    %v3668 = vld [vmem:[%s2698 + $0x50] sm:$0xff]
    %v3669 = vld [vmem:[%s2698 + $0x58] sm:$0xff]
    %v3670 = vld [vmem:[%s2698 + $0x60] sm:$0xff]
    %v3671 = vld [vmem:[%s2698 + $0x68] sm:$0xff]
    %v3672 = vld [vmem:[%s2698 + $0x70] sm:$0xff]
    %v3673 = vld [vmem:[%s2698 + $0x78] sm:$0xff]
    %v3674 = vld [vmem:[%s2698 + $0x80] sm:$0xff]
    %v3675 = vld [vmem:[%s2698 + $0x88] sm:$0xff]
    %v3676 = vld [vmem:[%s2698 + $0x90] sm:$0xff]
    %v3677 = vld [vmem:[%s2698 + $0x98] sm:$0xff]
    %v3678 = vld [vmem:[%s2698 + $0xa0] sm:$0xff]
    %v3679 = vld [vmem:[%s2698 + $0xa8] sm:$0xff]
    %v3680 = vld [vmem:[%s2698 + $0xb0] sm:$0xff]
    %v3681 = vld [vmem:[%s2698 + $0xb8] sm:$0xff]
    %v3682 = vld [vmem:[%s2698 + $0xc0] sm:$0xff]
    %v3683 = vld [vmem:[%s2698 + $0xc8] sm:$0xff]
    %v3684 = vld [vmem:[%s2698 + $0xd0] sm:$0xff]
    %v3685 = vld [vmem:[%s2698 + $0xd8] sm:$0xff]
    %v3686 = vld [vmem:[%s2698 + $0xe0] sm:$0xff]
    %v3687 = vld [vmem:[%s2698 + $0xe8] sm:$0xff]
    %v3688 = vld [vmem:[%s2698 + $0xf0] sm:$0xff]
    %v3689 = vld [vmem:[%s2698 + $0xf8] sm:$0xff]
    %v3690 = vld [vmem:[%s2698 + $0x100] sm:$0xff]
    %v3691 = vld [vmem:[%s2698 + $0x108] sm:$0xff]
    %v3692 = vld [vmem:[%s2698 + $0x110] sm:$0xff]
    %v3693 = vld [vmem:[%s2698 + $0x118] sm:$0xff]
    %v3694 = vld [vmem:[%s2698 + $0x120] sm:$0xff]
    %v3695 = vld [vmem:[%s2698 + $0x128] sm:$0xff]
    %v3696 = vld [vmem:[%s2698 + $0x130] sm:$0xff]
    %v3697 = vld [vmem:[%s2698 + $0x138] sm:$0xff]
    %v3698 = vld [vmem:[%s2698 + $0x140] sm:$0xff]
    %v3699 = vld [vmem:[%s2698 + $0x148] sm:$0xff]
    %v3700 = vld [vmem:[%s2698 + $0x150] sm:$0xff]
    %v3701 = vld [vmem:[%s2698 + $0x158] sm:$0xff]
    %v3702 = vld [vmem:[%s2698 + $0x160] sm:$0xff]
    %v3703 = vld [vmem:[%s2698 + $0x168] sm:$0xff]
    %v3704 = vld [vmem:[%s2698 + $0x170] sm:$0xff]
    %v3705 = vld [vmem:[%s2698 + $0x178] sm:$0xff]
    %v3706 = vld [vmem:[%s2698 + $0x180] sm:$0xff]
    %v3707 = vld [vmem:[%s2698 + $0x188] sm:$0xff]
    %v3708 = vld [vmem:[%s2698 + $0x190] sm:$0xff]
    %v3709 = vld [vmem:[%s2698 + $0x198] sm:$0xff]
    %v3710 = vld [vmem:[%s2698 + $0x1a0] sm:$0xff]
    %v3711 = vld [vmem:[%s2698 + $0x1a8] sm:$0xff]
    %v3712 = vld [vmem:[%s2698 + $0x1b0] sm:$0xff]
    %v3713 = vld [vmem:[%s2698 + $0x1b8] sm:$0xff]
    %v3714 = vld [vmem:[%s2698 + $0x1c0] sm:$0xff]
    %v3715 = vld [vmem:[%s2698 + $0x1c8] sm:$0xff]
    %v3716 = vld [vmem:[%s2698 + $0x1d0] sm:$0xff]
    %v3717 = vld [vmem:[%s2698 + $0x1d8] sm:$0xff]
    %v3718 = vld [vmem:[%s2698 + $0x1e0] sm:$0xff]
    %v3719 = vld [vmem:[%s2698 + $0x1e8] sm:$0xff]
    %v3720 = vld [vmem:[%s2698 + $0x1f0] sm:$0xff]
    %v3721 = vld [vmem:[%s2698 + $0x1f8] sm:$0xff]
    %3722 = vmatprep.subr.mxu0 %v3659
    %3723 = vmatpush1.msra.mxu0 %v3658
    %3724 = vmatprep.subr.mxu0 %v3663
    %3725 = vmatpush1.msra.mxu0 %v3662
    %3726 = vmatprep.subr.mxu0 %v3667
    %3727 = vmatpush1.msra.mxu0 %v3666
    %3728 = vmatprep.subr.mxu0 %v3671
    %3729 = vmatpush1.msra.mxu0 %v3670
    %3730 = vmatprep.subr.mxu0 %v3675
    %3731 = vmatpush1.msra.mxu0 %v3674
    %3732 = vmatprep.subr.mxu0 %v3679
    %3733 = vmatpush1.msra.mxu0 %v3678
    %3734 = vmatprep.subr.mxu0 %v3683
    %3735 = vmatpush1.msra.mxu0 %v3682
    %3736 = vmatprep.subr.mxu0 %v3687
    %3737 = vmatpush1.msra.mxu0 %v3686
    %3738 = vmatprep.subr.mxu0 %v3691
    %3739 = vmatpush1.msra.mxu0 %v3690
    %3740 = vmatprep.subr.mxu0 %v3695
    %3741 = vmatpush1.msra.mxu0 %v3694
    %3742 = vmatprep.subr.mxu0 %v3699
    %3743 = vmatpush1.msra.mxu0 %v3698
    %3744 = vmatprep.subr.mxu0 %v3703
    %3745 = vmatpush1.msra.mxu0 %v3702
    %3746 = vmatprep.subr.mxu0 %v3707
    %3747 = vmatpush1.msra.mxu0 %v3706
    %3748 = vmatprep.subr.mxu0 %v3711
    %3749 = vmatpush1.msra.mxu0 %v3710
    %3750 = vmatprep.subr.mxu0 %v3715
    %3751 = vmatpush1.msra.mxu0 %v3714
    %3752 = vmatprep.subr.mxu0 %v3719
    %3753 = vmatpush1.msra.mxu0 %v3718
    %3754 = vmatprep.subr.mxu0 0.0
    %3755 = vmatpush1.msra.mxu0 0.0
    %3756 = vmatprep.subr.mxu0 0.0
    %3757 = vmatpush1.msra.mxu0 0.0
    %3758 = vmatprep.subr.mxu0 0.0
    %3759 = vmatpush1.msra.mxu0 0.0
    %3760 = vmatprep.subr.mxu0 0.0
    %3761 = vmatpush1.msra.mxu0 0.0
    %3762 = vmatprep.subr.mxu0 0.0
    %3763 = vmatpush1.msra.mxu0 0.0
    %3764 = vmatprep.subr.mxu0 0.0
    %3765 = vmatpush1.msra.mxu0 0.0
    %3766 = vmatprep.subr.mxu0 0.0
    %3767 = vmatpush1.msra.mxu0 0.0
    %3768 = vmatprep.subr.mxu0 0.0
    %3769 = vmatpush1.msra.mxu0 0.0
    %3770 = vmatprep.subr.mxu0 0.0
    %3771 = vmatpush1.msra.mxu0 0.0
    %3772 = vmatprep.subr.mxu0 0.0
    %3773 = vmatpush1.msra.mxu0 0.0
    %3774 = vmatprep.subr.mxu0 0.0
    %3775 = vmatpush1.msra.mxu0 0.0
    %3776 = vmatprep.subr.mxu0 0.0
    %3777 = vmatpush1.msra.mxu0 0.0
    %3778 = vmatprep.subr.mxu0 0.0
    %3779 = vmatpush1.msra.mxu0 0.0
    %3780 = vmatprep.subr.mxu0 0.0
    %3781 = vmatpush1.msra.mxu0 0.0
    %3782 = vmatprep.subr.mxu0 0.0
    %3783 = vmatpush1.msra.mxu0 0.0
    %3784 = vmatprep.subr.mxu0 0.0
    %3785 = vmatpush1.msra.mxu0 0.0
    %3786 = vmatprep.mubr.f32.mxu0 0.0
    %3787 = vmatmul.mubr.f32.gmra.mrb[0].mxu0 %v3651
    %v3788 = vpop.f32.mrb[0].mxu0
    %v3789 = vadd.f32 0.0, %v3788
    %v3790 = vpop.f32.mrb[0].mxu0
    %v3791 = vadd.f32 0.0, %v3790
    %3792 = vdwg.mxu0
    %3793 = vmatprep.subr.mxu0 %v3661
    %3794 = vmatpush1.msra.mxu0 %v3660
    %3795 = vmatprep.subr.mxu0 %v3665
    %3796 = vmatpush1.msra.mxu0 %v3664
    %3797 = vmatprep.subr.mxu0 %v3669
    %3798 = vmatpush1.msra.mxu0 %v3668
    %3799 = vmatprep.subr.mxu0 %v3673
    %3800 = vmatpush1.msra.mxu0 %v3672
    %3801 = vmatprep.subr.mxu0 %v3677
    %3802 = vmatpush1.msra.mxu0 %v3676
    %3803 = vmatprep.subr.mxu0 %v3681
    %3804 = vmatpush1.msra.mxu0 %v3680
    %3805 = vmatprep.subr.mxu0 %v3685
    %3806 = vmatpush1.msra.mxu0 %v3684
    %3807 = vmatprep.subr.mxu0 %v3689
    %3808 = vmatpush1.msra.mxu0 %v3688
    %3809 = vmatprep.subr.mxu0 %v3693
    %3810 = vmatpush1.msra.mxu0 %v3692
    %3811 = vmatprep.subr.mxu0 %v3697
    %3812 = vmatpush1.msra.mxu0 %v3696
    %3813 = vmatprep.subr.mxu0 %v3701
    %3814 = vmatpush1.msra.mxu0 %v3700
    %3815 = vmatprep.subr.mxu0 %v3705
    %3816 = vmatpush1.msra.mxu0 %v3704
    %3817 = vmatprep.subr.mxu0 %v3709
    %3818 = vmatpush1.msra.mxu0 %v3708
    %3819 = vmatprep.subr.mxu0 %v3713
    %3820 = vmatpush1.msra.mxu0 %v3712
    %3821 = vmatprep.subr.mxu0 %v3717
    %3822 = vmatpush1.msra.mxu0 %v3716
    %3823 = vmatprep.subr.mxu0 %v3721
    %3824 = vmatpush1.msra.mxu0 %v3720
    %3825 = vmatprep.subr.mxu0 0.0
    %3826 = vmatpush1.msra.mxu0 0.0
    %3827 = vmatprep.subr.mxu0 0.0
    %3828 = vmatpush1.msra.mxu0 0.0
    %3829 = vmatprep.subr.mxu0 0.0
    %3830 = vmatpush1.msra.mxu0 0.0
    %3831 = vmatprep.subr.mxu0 0.0
    %3832 = vmatpush1.msra.mxu0 0.0
    %3833 = vmatprep.subr.mxu0 0.0
    %3834 = vmatpush1.msra.mxu0 0.0
    %3835 = vmatprep.subr.mxu0 0.0
    %3836 = vmatpush1.msra.mxu0 0.0
    %3837 = vmatprep.subr.mxu0 0.0
    %3838 = vmatpush1.msra.mxu0 0.0
    %3839 = vmatprep.subr.mxu0 0.0
    %3840 = vmatpush1.msra.mxu0 0.0
    %3841 = vmatprep.subr.mxu0 0.0
    %3842 = vmatpush1.msra.mxu0 0.0
    %3843 = vmatprep.subr.mxu0 0.0
    %3844 = vmatpush1.msra.mxu0 0.0
    %3845 = vmatprep.subr.mxu0 0.0
    %3846 = vmatpush1.msra.mxu0 0.0
    %3847 = vmatprep.subr.mxu0 0.0
    %3848 = vmatpush1.msra.mxu0 0.0
    %3849 = vmatprep.subr.mxu0 0.0
    %3850 = vmatpush1.msra.mxu0 0.0
    %3851 = vmatprep.subr.mxu0 0.0
    %3852 = vmatpush1.msra.mxu0 0.0
    %3853 = vmatprep.subr.mxu0 0.0
    %3854 = vmatpush1.msra.mxu0 0.0
    %3855 = vmatprep.subr.mxu0 0.0
    %3856 = vmatpush1.msra.mxu0 0.0
    %3857 = vmatprep.mubr.f32.mxu0 0.0
    %3858 = vmatmul.mubr.f32.gmra.mrb[0].mxu0 %v3651
    %v3859 = vpop.f32.mrb[0].mxu0
    %v3860 = vadd.f32 0.0, %v3859
    %v3861 = vpop.f32.mrb[0].mxu0
    %v3862 = vadd.f32 0.0, %v3861
    %3863 = vdwg.mxu0
    %v3864 = vadd.f32 %v3654, %v3789
    %v3865 = vadd.f32 %v3655, %v3791
    %v3866 = vadd.f32 %v3656, %v3860
    %v3867 = vadd.f32 %v3657, %v3862
    %v3868 = vxor.u32 %v3864, 2147483648
    %v3869 = vmul.f32 %v3868, 1.442695
    %v3870 = vpow.pop %v3869
    %v3871 = vadd.f32 %v3870, 1.0
    %v3872 = vrcp.pop %v3871
    %v3873 = vmul.f32 1.0, %v3872
    %v3874 = vxor.u32 %v3865, 2147483648
    %v3875 = vmul.f32 %v3874, 1.442695
    %v3876 = vpow.pop %v3875
    %v3877 = vadd.f32 %v3876, 1.0
    %v3878 = vrcp.pop %v3877
    %v3879 = vmul.f32 1.0, %v3878
    %v3880 = vtanh.pop %v3866
    %v3881 = vxor.u32 %v3867, 2147483648
    %v3882 = vmul.f32 %v3881, 1.442695
    %v3883 = vpow.pop %v3882
    %v3884 = vadd.f32 %v3883, 1.0
    %v3885 = vrcp.pop %v3884
    %v3886 = vmul.f32 1.0, %v3885
    %v3887 = vmul.f32 %v3879, %v3649
    %v3888 = vmul.f32 %v3873, %v3880
    %v3889 = vadd.f32 %v3887, %v3888
    %v3890 = vtanh.pop %v3889
    %v3891 = vmul.f32 %v3886, %v3890
    %s3892 = scalar_lea.vmem %s4, 32
    %3893 = vst [vmem:[%s3892] sm:$0xff] %v3891
    %v3894 = vld [vmem:[%s1613] sm:$0xff]
    %v3895 = vld [vmem:[%s1613 + $0x8] sm:$0xff]
    %v3896 = vld [vmem:[%s1613 + $0x10] sm:$0xff]
    %v3897 = vld [vmem:[%s1613 + $0x18] sm:$0xff]
    %v3898 = vld [vmem:[%s2698] sm:$0xff]
    %v3899 = vld [vmem:[%s2698 + $0x8] sm:$0xff]
    %v3900 = vld [vmem:[%s2698 + $0x10] sm:$0xff]
    %v3901 = vld [vmem:[%s2698 + $0x18] sm:$0xff]
    %v3902 = vld [vmem:[%s2698 + $0x20] sm:$0xff]
    %v3903 = vld [vmem:[%s2698 + $0x28] sm:$0xff]
    %v3904 = vld [vmem:[%s2698 + $0x30] sm:$0xff]
    %v3905 = vld [vmem:[%s2698 + $0x38] sm:$0xff]
    %v3906 = vld [vmem:[%s2698 + $0x40] sm:$0xff]
    %v3907 = vld [vmem:[%s2698 + $0x48] sm:$0xff]
    %v3908 = vld [vmem:[%s2698 + $0x50] sm:$0xff]
    %v3909 = vld [vmem:[%s2698 + $0x58] sm:$0xff]
    %v3910 = vld [vmem:[%s2698 + $0x60] sm:$0xff]
    %v3911 = vld [vmem:[%s2698 + $0x68] sm:$0xff]
    %v3912 = vld [vmem:[%s2698 + $0x70] sm:$0xff]
    %v3913 = vld [vmem:[%s2698 + $0x78] sm:$0xff]
    %v3914 = vld [vmem:[%s2698 + $0x80] sm:$0xff]
    %v3915 = vld [vmem:[%s2698 + $0x88] sm:$0xff]
    %v3916 = vld [vmem:[%s2698 + $0x90] sm:$0xff]
    %v3917 = vld [vmem:[%s2698 + $0x98] sm:$0xff]
    %v3918 = vld [vmem:[%s2698 + $0xa0] sm:$0xff]
    %v3919 = vld [vmem:[%s2698 + $0xa8] sm:$0xff]
    %v3920 = vld [vmem:[%s2698 + $0xb0] sm:$0xff]
    %v3921 = vld [vmem:[%s2698 + $0xb8] sm:$0xff]
    %v3922 = vld [vmem:[%s2698 + $0xc0] sm:$0xff]
    %v3923 = vld [vmem:[%s2698 + $0xc8] sm:$0xff]
    %v3924 = vld [vmem:[%s2698 + $0xd0] sm:$0xff]
    %v3925 = vld [vmem:[%s2698 + $0xd8] sm:$0xff]
    %v3926 = vld [vmem:[%s2698 + $0xe0] sm:$0xff]
    %v3927 = vld [vmem:[%s2698 + $0xe8] sm:$0xff]
    %v3928 = vld [vmem:[%s2698 + $0xf0] sm:$0xff]
    %v3929 = vld [vmem:[%s2698 + $0xf8] sm:$0xff]
    %v3930 = vld [vmem:[%s2698 + $0x100] sm:$0xff]
    %v3931 = vld [vmem:[%s2698 + $0x108] sm:$0xff]
    %v3932 = vld [vmem:[%s2698 + $0x110] sm:$0xff]
    %v3933 = vld [vmem:[%s2698 + $0x118] sm:$0xff]
    %v3934 = vld [vmem:[%s2698 + $0x120] sm:$0xff]
    %v3935 = vld [vmem:[%s2698 + $0x128] sm:$0xff]
    %v3936 = vld [vmem:[%s2698 + $0x130] sm:$0xff]
    %v3937 = vld [vmem:[%s2698 + $0x138] sm:$0xff]
    %v3938 = vld [vmem:[%s2698 + $0x140] sm:$0xff]
    %v3939 = vld [vmem:[%s2698 + $0x148] sm:$0xff]
    %v3940 = vld [vmem:[%s2698 + $0x150] sm:$0xff]
    %v3941 = vld [vmem:[%s2698 + $0x158] sm:$0xff]
    %v3942 = vld [vmem:[%s2698 + $0x160] sm:$0xff]
    %v3943 = vld [vmem:[%s2698 + $0x168] sm:$0xff]
    %v3944 = vld [vmem:[%s2698 + $0x170] sm:$0xff]
    %v3945 = vld [vmem:[%s2698 + $0x178] sm:$0xff]
    %v3946 = vld [vmem:[%s2698 + $0x180] sm:$0xff]
    %v3947 = vld [vmem:[%s2698 + $0x188] sm:$0xff]
    %v3948 = vld [vmem:[%s2698 + $0x190] sm:$0xff]
    %v3949 = vld [vmem:[%s2698 + $0x198] sm:$0xff]
    %v3950 = vld [vmem:[%s2698 + $0x1a0] sm:$0xff]
    %v3951 = vld [vmem:[%s2698 + $0x1a8] sm:$0xff]
    %v3952 = vld [vmem:[%s2698 + $0x1b0] sm:$0xff]
    %v3953 = vld [vmem:[%s2698 + $0x1b8] sm:$0xff]
    %v3954 = vld [vmem:[%s2698 + $0x1c0] sm:$0xff]
    %v3955 = vld [vmem:[%s2698 + $0x1c8] sm:$0xff]
    %v3956 = vld [vmem:[%s2698 + $0x1d0] sm:$0xff]
    %v3957 = vld [vmem:[%s2698 + $0x1d8] sm:$0xff]
    %v3958 = vld [vmem:[%s2698 + $0x1e0] sm:$0xff]
    %v3959 = vld [vmem:[%s2698 + $0x1e8] sm:$0xff]
    %v3960 = vld [vmem:[%s2698 + $0x1f0] sm:$0xff]
    %v3961 = vld [vmem:[%s2698 + $0x1f8] sm:$0xff]
    %3962 = vmatprep.subr.mxu0 %v3899
    %3963 = vmatpush1.msra.mxu0 %v3898
    %3964 = vmatprep.subr.mxu0 %v3903
    %3965 = vmatpush1.msra.mxu0 %v3902
    %3966 = vmatprep.subr.mxu0 %v3907
    %3967 = vmatpush1.msra.mxu0 %v3906
    %3968 = vmatprep.subr.mxu0 %v3911
    %3969 = vmatpush1.msra.mxu0 %v3910
    %3970 = vmatprep.subr.mxu0 %v3915
    %3971 = vmatpush1.msra.mxu0 %v3914
    %3972 = vmatprep.subr.mxu0 %v3919
    %3973 = vmatpush1.msra.mxu0 %v3918
    %3974 = vmatprep.subr.mxu0 %v3923
    %3975 = vmatpush1.msra.mxu0 %v3922
    %3976 = vmatprep.subr.mxu0 %v3927
    %3977 = vmatpush1.msra.mxu0 %v3926
    %3978 = vmatprep.subr.mxu0 %v3931
    %3979 = vmatpush1.msra.mxu0 %v3930
    %3980 = vmatprep.subr.mxu0 %v3935
    %3981 = vmatpush1.msra.mxu0 %v3934
    %3982 = vmatprep.subr.mxu0 %v3939
    %3983 = vmatpush1.msra.mxu0 %v3938
    %3984 = vmatprep.subr.mxu0 %v3943
    %3985 = vmatpush1.msra.mxu0 %v3942
    %3986 = vmatprep.subr.mxu0 %v3947
    %3987 = vmatpush1.msra.mxu0 %v3946
    %3988 = vmatprep.subr.mxu0 %v3951
    %3989 = vmatpush1.msra.mxu0 %v3950
    %3990 = vmatprep.subr.mxu0 %v3955
    %3991 = vmatpush1.msra.mxu0 %v3954
    %3992 = vmatprep.subr.mxu0 %v3959
    %3993 = vmatpush1.msra.mxu0 %v3958
    %3994 = vmatprep.subr.mxu0 0.0
    %3995 = vmatpush1.msra.mxu0 0.0
    %3996 = vmatprep.subr.mxu0 0.0
    %3997 = vmatpush1.msra.mxu0 0.0
    %3998 = vmatprep.subr.mxu0 0.0
    %3999 = vmatpush1.msra.mxu0 0.0
    %4000 = vmatprep.subr.mxu0 0.0
    %4001 = vmatpush1.msra.mxu0 0.0
    %4002 = vmatprep.subr.mxu0 0.0
    %4003 = vmatpush1.msra.mxu0 0.0
    %4004 = vmatprep.subr.mxu0 0.0
    %4005 = vmatpush1.msra.mxu0 0.0
    %4006 = vmatprep.subr.mxu0 0.0
    %4007 = vmatpush1.msra.mxu0 0.0
    %4008 = vmatprep.subr.mxu0 0.0
    %4009 = vmatpush1.msra.mxu0 0.0
    %4010 = vmatprep.subr.mxu0 0.0
    %4011 = vmatpush1.msra.mxu0 0.0
    %4012 = vmatprep.subr.mxu0 0.0
    %4013 = vmatpush1.msra.mxu0 0.0
    %4014 = vmatprep.subr.mxu0 0.0
    %4015 = vmatpush1.msra.mxu0 0.0
    %4016 = vmatprep.subr.mxu0 0.0
    %4017 = vmatpush1.msra.mxu0 0.0
    %4018 = vmatprep.subr.mxu0 0.0
    %4019 = vmatpush1.msra.mxu0 0.0
    %4020 = vmatprep.subr.mxu0 0.0
    %4021 = vmatpush1.msra.mxu0 0.0
    %4022 = vmatprep.subr.mxu0 0.0
    %4023 = vmatpush1.msra.mxu0 0.0
    %4024 = vmatprep.subr.mxu0 0.0
    %4025 = vmatpush1.msra.mxu0 0.0
    %4026 = vmatprep.mubr.f32.mxu0 0.0
    %4027 = vmatmul.mubr.f32.gmra.mrb[0].mxu0 %v3891
    %v4028 = vpop.f32.mrb[0].mxu0
    %v4029 = vadd.f32 0.0, %v4028
    %v4030 = vpop.f32.mrb[0].mxu0
    %v4031 = vadd.f32 0.0, %v4030
    %4032 = vdwg.mxu0
    %4033 = vmatprep.subr.mxu0 %v3901
    %4034 = vmatpush1.msra.mxu0 %v3900
    %4035 = vmatprep.subr.mxu0 %v3905
    %4036 = vmatpush1.msra.mxu0 %v3904
    %4037 = vmatprep.subr.mxu0 %v3909
    %4038 = vmatpush1.msra.mxu0 %v3908
    %4039 = vmatprep.subr.mxu0 %v3913
    %4040 = vmatpush1.msra.mxu0 %v3912
    %4041 = vmatprep.subr.mxu0 %v3917
    %4042 = vmatpush1.msra.mxu0 %v3916
    %4043 = vmatprep.subr.mxu0 %v3921
    %4044 = vmatpush1.msra.mxu0 %v3920
    %4045 = vmatprep.subr.mxu0 %v3925
    %4046 = vmatpush1.msra.mxu0 %v3924
    %4047 = vmatprep.subr.mxu0 %v3929
    %4048 = vmatpush1.msra.mxu0 %v3928
    %4049 = vmatprep.subr.mxu0 %v3933
    %4050 = vmatpush1.msra.mxu0 %v3932
    %4051 = vmatprep.subr.mxu0 %v3937
    %4052 = vmatpush1.msra.mxu0 %v3936
    %4053 = vmatprep.subr.mxu0 %v3941
    %4054 = vmatpush1.msra.mxu0 %v3940
    %4055 = vmatprep.subr.mxu0 %v3945
    %4056 = vmatpush1.msra.mxu0 %v3944
    %4057 = vmatprep.subr.mxu0 %v3949
    %4058 = vmatpush1.msra.mxu0 %v3948
    %4059 = vmatprep.subr.mxu0 %v3953
    %4060 = vmatpush1.msra.mxu0 %v3952
    %4061 = vmatprep.subr.mxu0 %v3957
    %4062 = vmatpush1.msra.mxu0 %v3956
    %4063 = vmatprep.subr.mxu0 %v3961
    %4064 = vmatpush1.msra.mxu0 %v3960
    %4065 = vmatprep.subr.mxu0 0.0
    %4066 = vmatpush1.msra.mxu0 0.0
    %4067 = vmatprep.subr.mxu0 0.0
    %4068 = vmatpush1.msra.mxu0 0.0
    %4069 = vmatprep.subr.mxu0 0.0
    %4070 = vmatpush1.msra.mxu0 0.0
    %4071 = vmatprep.subr.mxu0 0.0
    %4072 = vmatpush1.msra.mxu0 0.0
    %4073 = vmatprep.subr.mxu0 0.0
    %4074 = vmatpush1.msra.mxu0 0.0
    %4075 = vmatprep.subr.mxu0 0.0
    %4076 = vmatpush1.msra.mxu0 0.0
    %4077 = vmatprep.subr.mxu0 0.0
    %4078 = vmatpush1.msra.mxu0 0.0
    %4079 = vmatprep.subr.mxu0 0.0
    %4080 = vmatpush1.msra.mxu0 0.0
    %4081 = vmatprep.subr.mxu0 0.0
    %4082 = vmatpush1.msra.mxu0 0.0
    %4083 = vmatprep.subr.mxu0 0.0
    %4084 = vmatpush1.msra.mxu0 0.0
    %4085 = vmatprep.subr.mxu0 0.0
    %4086 = vmatpush1.msra.mxu0 0.0
    %4087 = vmatprep.subr.mxu0 0.0
    %4088 = vmatpush1.msra.mxu0 0.0
    %4089 = vmatprep.subr.mxu0 0.0
    %4090 = vmatpush1.msra.mxu0 0.0
    %4091 = vmatprep.subr.mxu0 0.0
    %4092 = vmatpush1.msra.mxu0 0.0
    %4093 = vmatprep.subr.mxu0 0.0
    %4094 = vmatpush1.msra.mxu0 0.0
    %4095 = vmatprep.subr.mxu0 0.0
    %4096 = vmatpush1.msra.mxu0 0.0
    %4097 = vmatprep.mubr.f32.mxu0 0.0
    %4098 = vmatmul.mubr.f32.gmra.mrb[0].mxu0 %v3891
    %v4099 = vpop.f32.mrb[0].mxu0
    %v4100 = vadd.f32 0.0, %v4099
    %v4101 = vpop.f32.mrb[0].mxu0
    %v4102 = vadd.f32 0.0, %v4101
    %4103 = vdwg.mxu0
    %v4104 = vadd.f32 %v3894, %v4029
    %v4105 = vadd.f32 %v3895, %v4031
    %v4106 = vadd.f32 %v3896, %v4100
    %v4107 = vadd.f32 %v3897, %v4102
    %v4108 = vxor.u32 %v4104, 2147483648
    %v4109 = vmul.f32 %v4108, 1.442695
    %v4110 = vpow.pop %v4109
    %v4111 = vadd.f32 %v4110, 1.0
    %v4112 = vrcp.pop %v4111
    %v4113 = vmul.f32 1.0, %v4112
    %v4114 = vxor.u32 %v4105, 2147483648
    %v4115 = vmul.f32 %v4114, 1.442695
    %v4116 = vpow.pop %v4115
    %v4117 = vadd.f32 %v4116, 1.0
    %v4118 = vrcp.pop %v4117
    %v4119 = vmul.f32 1.0, %v4118
    %v4120 = vtanh.pop %v4106
    %v4121 = vxor.u32 %v4107, 2147483648
    %v4122 = vmul.f32 %v4121, 1.442695
    %v4123 = vpow.pop %v4122
    %v4124 = vadd.f32 %v4123, 1.0
    %v4125 = vrcp.pop %v4124
    %v4126 = vmul.f32 1.0, %v4125
    %v4127 = vmul.f32 %v4119, %v3889
    %v4128 = vmul.f32 %v4113, %v4120
    %v4129 = vadd.f32 %v4127, %v4128
    %v4130 = vtanh.pop %v4129
    %v4131 = vmul.f32 %v4126, %v4130
    %s4132 = scalar_lea.vmem %s4, 40
    %4133 = vst [vmem:[%s4132] sm:$0xff] %v4131
    %v4134 = vld [vmem:[%s1856] sm:$0xff]
    %v4135 = vld [vmem:[%s1856 + $0x8] sm:$0xff]
    %v4136 = vld [vmem:[%s1856 + $0x10] sm:$0xff]
    %v4137 = vld [vmem:[%s1856 + $0x18] sm:$0xff]
    %v4138 = vld [vmem:[%s2698] sm:$0xff]
    %v4139 = vld [vmem:[%s2698 + $0x8] sm:$0xff]
    %v4140 = vld [vmem:[%s2698 + $0x10] sm:$0xff]
    %v4141 = vld [vmem:[%s2698 + $0x18] sm:$0xff]
    %v4142 = vld [vmem:[%s2698 + $0x20] sm:$0xff]
    %v4143 = vld [vmem:[%s2698 + $0x28] sm:$0xff]
    %v4144 = vld [vmem:[%s2698 + $0x30] sm:$0xff]
    %v4145 = vld [vmem:[%s2698 + $0x38] sm:$0xff]
    %v4146 = vld [vmem:[%s2698 + $0x40] sm:$0xff]
    %v4147 = vld [vmem:[%s2698 + $0x48] sm:$0xff]
    %v4148 = vld [vmem:[%s2698 + $0x50] sm:$0xff]
    %v4149 = vld [vmem:[%s2698 + $0x58] sm:$0xff]
    %v4150 = vld [vmem:[%s2698 + $0x60] sm:$0xff]
    %v4151 = vld [vmem:[%s2698 + $0x68] sm:$0xff]
    %v4152 = vld [vmem:[%s2698 + $0x70] sm:$0xff]
    %v4153 = vld [vmem:[%s2698 + $0x78] sm:$0xff]
    %v4154 = vld [vmem:[%s2698 + $0x80] sm:$0xff]
    %v4155 = vld [vmem:[%s2698 + $0x88] sm:$0xff]
    %v4156 = vld [vmem:[%s2698 + $0x90] sm:$0xff]
    %v4157 = vld [vmem:[%s2698 + $0x98] sm:$0xff]
    %v4158 = vld [vmem:[%s2698 + $0xa0] sm:$0xff]
    %v4159 = vld [vmem:[%s2698 + $0xa8] sm:$0xff]
    %v4160 = vld [vmem:[%s2698 + $0xb0] sm:$0xff]
    %v4161 = vld [vmem:[%s2698 + $0xb8] sm:$0xff]
    %v4162 = vld [vmem:[%s2698 + $0xc0] sm:$0xff]
    %v4163 = vld [vmem:[%s2698 + $0xc8] sm:$0xff]
    %v4164 = vld [vmem:[%s2698 + $0xd0] sm:$0xff]
    %v4165 = vld [vmem:[%s2698 + $0xd8] sm:$0xff]
    %v4166 = vld [vmem:[%s2698 + $0xe0] sm:$0xff]
    %v4167 = vld [vmem:[%s2698 + $0xe8] sm:$0xff]
    %v4168 = vld [vmem:[%s2698 + $0xf0] sm:$0xff]
    %v4169 = vld [vmem:[%s2698 + $0xf8] sm:$0xff]
    %v4170 = vld [vmem:[%s2698 + $0x100] sm:$0xff]
    %v4171 = vld [vmem:[%s2698 + $0x108] sm:$0xff]
    %v4172 = vld [vmem:[%s2698 + $0x110] sm:$0xff]
    %v4173 = vld [vmem:[%s2698 + $0x118] sm:$0xff]
    %v4174 = vld [vmem:[%s2698 + $0x120] sm:$0xff]
    %v4175 = vld [vmem:[%s2698 + $0x128] sm:$0xff]
    %v4176 = vld [vmem:[%s2698 + $0x130] sm:$0xff]
    %v4177 = vld [vmem:[%s2698 + $0x138] sm:$0xff]
    %v4178 = vld [vmem:[%s2698 + $0x140] sm:$0xff]
    %v4179 = vld [vmem:[%s2698 + $0x148] sm:$0xff]
    %v4180 = vld [vmem:[%s2698 + $0x150] sm:$0xff]
    %v4181 = vld [vmem:[%s2698 + $0x158] sm:$0xff]
    %v4182 = vld [vmem:[%s2698 + $0x160] sm:$0xff]
    %v4183 = vld [vmem:[%s2698 + $0x168] sm:$0xff]
    %v4184 = vld [vmem:[%s2698 + $0x170] sm:$0xff]
    %v4185 = vld [vmem:[%s2698 + $0x178] sm:$0xff]
    %v4186 = vld [vmem:[%s2698 + $0x180] sm:$0xff]
    %v4187 = vld [vmem:[%s2698 + $0x188] sm:$0xff]
    %v4188 = vld [vmem:[%s2698 + $0x190] sm:$0xff]
    %v4189 = vld [vmem:[%s2698 + $0x198] sm:$0xff]
    %v4190 = vld [vmem:[%s2698 + $0x1a0] sm:$0xff]
    %v4191 = vld [vmem:[%s2698 + $0x1a8] sm:$0xff]
    %v4192 = vld [vmem:[%s2698 + $0x1b0] sm:$0xff]
    %v4193 = vld [vmem:[%s2698 + $0x1b8] sm:$0xff]
    %v4194 = vld [vmem:[%s2698 + $0x1c0] sm:$0xff]
    %v4195 = vld [vmem:[%s2698 + $0x1c8] sm:$0xff]
    %v4196 = vld [vmem:[%s2698 + $0x1d0] sm:$0xff]
    %v4197 = vld [vmem:[%s2698 + $0x1d8] sm:$0xff]
    %v4198 = vld [vmem:[%s2698 + $0x1e0] sm:$0xff]
    %v4199 = vld [vmem:[%s2698 + $0x1e8] sm:$0xff]
    %v4200 = vld [vmem:[%s2698 + $0x1f0] sm:$0xff]
    %v4201 = vld [vmem:[%s2698 + $0x1f8] sm:$0xff]
    %4202 = vmatprep.subr.mxu0 %v4139
    %4203 = vmatpush1.msra.mxu0 %v4138
    %4204 = vmatprep.subr.mxu0 %v4143
    %4205 = vmatpush1.msra.mxu0 %v4142
    %4206 = vmatprep.subr.mxu0 %v4147
    %4207 = vmatpush1.msra.mxu0 %v4146
    %4208 = vmatprep.subr.mxu0 %v4151
    %4209 = vmatpush1.msra.mxu0 %v4150
    %4210 = vmatprep.subr.mxu0 %v4155
    %4211 = vmatpush1.msra.mxu0 %v4154
    %4212 = vmatprep.subr.mxu0 %v4159
    %4213 = vmatpush1.msra.mxu0 %v4158
    %4214 = vmatprep.subr.mxu0 %v4163
    %4215 = vmatpush1.msra.mxu0 %v4162
    %4216 = vmatprep.subr.mxu0 %v4167
    %4217 = vmatpush1.msra.mxu0 %v4166
    %4218 = vmatprep.subr.mxu0 %v4171
    %4219 = vmatpush1.msra.mxu0 %v4170
    %4220 = vmatprep.subr.mxu0 %v4175
    %4221 = vmatpush1.msra.mxu0 %v4174
    %4222 = vmatprep.subr.mxu0 %v4179
    %4223 = vmatpush1.msra.mxu0 %v4178
    %4224 = vmatprep.subr.mxu0 %v4183
    %4225 = vmatpush1.msra.mxu0 %v4182
    %4226 = vmatprep.subr.mxu0 %v4187
    %4227 = vmatpush1.msra.mxu0 %v4186
    %4228 = vmatprep.subr.mxu0 %v4191
    %4229 = vmatpush1.msra.mxu0 %v4190
    %4230 = vmatprep.subr.mxu0 %v4195
    %4231 = vmatpush1.msra.mxu0 %v4194
    %4232 = vmatprep.subr.mxu0 %v4199
    %4233 = vmatpush1.msra.mxu0 %v4198
    %4234 = vmatprep.subr.mxu0 0.0
    %4235 = vmatpush1.msra.mxu0 0.0
    %4236 = vmatprep.subr.mxu0 0.0
    %4237 = vmatpush1.msra.mxu0 0.0
    %4238 = vmatprep.subr.mxu0 0.0
    %4239 = vmatpush1.msra.mxu0 0.0
    %4240 = vmatprep.subr.mxu0 0.0
    %4241 = vmatpush1.msra.mxu0 0.0
    %4242 = vmatprep.subr.mxu0 0.0
    %4243 = vmatpush1.msra.mxu0 0.0
    %4244 = vmatprep.subr.mxu0 0.0
    %4245 = vmatpush1.msra.mxu0 0.0
    %4246 = vmatprep.subr.mxu0 0.0
    %4247 = vmatpush1.msra.mxu0 0.0
    %4248 = vmatprep.subr.mxu0 0.0
    %4249 = vmatpush1.msra.mxu0 0.0
    %4250 = vmatprep.subr.mxu0 0.0
    %4251 = vmatpush1.msra.mxu0 0.0
    %4252 = vmatprep.subr.mxu0 0.0
    %4253 = vmatpush1.msra.mxu0 0.0
    %4254 = vmatprep.subr.mxu0 0.0
    %4255 = vmatpush1.msra.mxu0 0.0
    %4256 = vmatprep.subr.mxu0 0.0
    %4257 = vmatpush1.msra.mxu0 0.0
    %4258 = vmatprep.subr.mxu0 0.0
    %4259 = vmatpush1.msra.mxu0 0.0
    %4260 = vmatprep.subr.mxu0 0.0
    %4261 = vmatpush1.msra.mxu0 0.0
    %4262 = vmatprep.subr.mxu0 0.0
    %4263 = vmatpush1.msra.mxu0 0.0
    %4264 = vmatprep.subr.mxu0 0.0
    %4265 = vmatpush1.msra.mxu0 0.0
    %4266 = vmatprep.mubr.f32.mxu0 0.0
    %4267 = vmatmul.mubr.f32.gmra.mrb[0].mxu0 %v4131
    %v4268 = vpop.f32.mrb[0].mxu0
    %v4269 = vadd.f32 0.0, %v4268
    %v4270 = vpop.f32.mrb[0].mxu0
    %v4271 = vadd.f32 0.0, %v4270
    %4272 = vdwg.mxu0
    %4273 = vmatprep.subr.mxu0 %v4141
    %4274 = vmatpush1.msra.mxu0 %v4140
    %4275 = vmatprep.subr.mxu0 %v4145
    %4276 = vmatpush1.msra.mxu0 %v4144
    %4277 = vmatprep.subr.mxu0 %v4149
    %4278 = vmatpush1.msra.mxu0 %v4148
    %4279 = vmatprep.subr.mxu0 %v4153
    %4280 = vmatpush1.msra.mxu0 %v4152
    %4281 = vmatprep.subr.mxu0 %v4157
    %4282 = vmatpush1.msra.mxu0 %v4156
    %4283 = vmatprep.subr.mxu0 %v4161
    %4284 = vmatpush1.msra.mxu0 %v4160
    %4285 = vmatprep.subr.mxu0 %v4165
    %4286 = vmatpush1.msra.mxu0 %v4164
    %4287 = vmatprep.subr.mxu0 %v4169
    %4288 = vmatpush1.msra.mxu0 %v4168
    %4289 = vmatprep.subr.mxu0 %v4173
    %4290 = vmatpush1.msra.mxu0 %v4172
    %4291 = vmatprep.subr.mxu0 %v4177
    %4292 = vmatpush1.msra.mxu0 %v4176
    %4293 = vmatprep.subr.mxu0 %v4181
    %4294 = vmatpush1.msra.mxu0 %v4180
    %4295 = vmatprep.subr.mxu0 %v4185
    %4296 = vmatpush1.msra.mxu0 %v4184
    %4297 = vmatprep.subr.mxu0 %v4189
    %4298 = vmatpush1.msra.mxu0 %v4188
    %4299 = vmatprep.subr.mxu0 %v4193
    %4300 = vmatpush1.msra.mxu0 %v4192
    %4301 = vmatprep.subr.mxu0 %v4197
    %4302 = vmatpush1.msra.mxu0 %v4196
    %4303 = vmatprep.subr.mxu0 %v4201
    %4304 = vmatpush1.msra.mxu0 %v4200
    %4305 = vmatprep.subr.mxu0 0.0
    %4306 = vmatpush1.msra.mxu0 0.0
    %4307 = vmatprep.subr.mxu0 0.0
    %4308 = vmatpush1.msra.mxu0 0.0
    %4309 = vmatprep.subr.mxu0 0.0
    %4310 = vmatpush1.msra.mxu0 0.0
    %4311 = vmatprep.subr.mxu0 0.0
    %4312 = vmatpush1.msra.mxu0 0.0
    %4313 = vmatprep.subr.mxu0 0.0
    %4314 = vmatpush1.msra.mxu0 0.0
    %4315 = vmatprep.subr.mxu0 0.0
    %4316 = vmatpush1.msra.mxu0 0.0
    %4317 = vmatprep.subr.mxu0 0.0
    %4318 = vmatpush1.msra.mxu0 0.0
    %4319 = vmatprep.subr.mxu0 0.0
    %4320 = vmatpush1.msra.mxu0 0.0
    %4321 = vmatprep.subr.mxu0 0.0
    %4322 = vmatpush1.msra.mxu0 0.0
    %4323 = vmatprep.subr.mxu0 0.0
    %4324 = vmatpush1.msra.mxu0 0.0
    %4325 = vmatprep.subr.mxu0 0.0
    %4326 = vmatpush1.msra.mxu0 0.0
    %4327 = vmatprep.subr.mxu0 0.0
    %4328 = vmatpush1.msra.mxu0 0.0
    %4329 = vmatprep.subr.mxu0 0.0
    %4330 = vmatpush1.msra.mxu0 0.0
    %4331 = vmatprep.subr.mxu0 0.0
    %4332 = vmatpush1.msra.mxu0 0.0
    %4333 = vmatprep.subr.mxu0 0.0
    %4334 = vmatpush1.msra.mxu0 0.0
    %4335 = vmatprep.subr.mxu0 0.0
    %4336 = vmatpush1.msra.mxu0 0.0
    %4337 = vmatprep.mubr.f32.mxu0 0.0
    %4338 = vmatmul.mubr.f32.gmra.mrb[0].mxu0 %v4131
    %v4339 = vpop.f32.mrb[0].mxu0
    %v4340 = vadd.f32 0.0, %v4339
    %v4341 = vpop.f32.mrb[0].mxu0
    %v4342 = vadd.f32 0.0, %v4341
    %4343 = vdwg.mxu0
    %v4344 = vadd.f32 %v4134, %v4269
    %v4345 = vadd.f32 %v4135, %v4271
    %v4346 = vadd.f32 %v4136, %v4340
    %v4347 = vadd.f32 %v4137, %v4342
    %v4348 = vxor.u32 %v4344, 2147483648
    %v4349 = vmul.f32 %v4348, 1.442695
    %v4350 = vpow.pop %v4349
    %v4351 = vadd.f32 %v4350, 1.0
    %v4352 = vrcp.pop %v4351
    %v4353 = vmul.f32 1.0, %v4352
    %v4354 = vxor.u32 %v4345, 2147483648
    %v4355 = vmul.f32 %v4354, 1.442695
    %v4356 = vpow.pop %v4355
    %v4357 = vadd.f32 %v4356, 1.0
    %v4358 = vrcp.pop %v4357
    %v4359 = vmul.f32 1.0, %v4358
    %v4360 = vtanh.pop %v4346
    %v4361 = vxor.u32 %v4347, 2147483648
    %v4362 = vmul.f32 %v4361, 1.442695
    %v4363 = vpow.pop %v4362
    %v4364 = vadd.f32 %v4363, 1.0
    %v4365 = vrcp.pop %v4364
    %v4366 = vmul.f32 1.0, %v4365
    %v4367 = vmul.f32 %v4359, %v4129
    %v4368 = vmul.f32 %v4353, %v4360
    %v4369 = vadd.f32 %v4367, %v4368
    %v4370 = vtanh.pop %v4369
    %v4371 = vmul.f32 %v4366, %v4370
    %s4372 = scalar_lea.vmem %s4, 48
    %4373 = vst [vmem:[%s4372] sm:$0xff] %v4371
    %v4374 = vld [vmem:[%s2099] sm:$0xff]
    %v4375 = vld [vmem:[%s2099 + $0x8] sm:$0xff]
    %v4376 = vld [vmem:[%s2099 + $0x10] sm:$0xff]
    %v4377 = vld [vmem:[%s2099 + $0x18] sm:$0xff]
    %v4378 = vld [vmem:[%s2698] sm:$0xff]
    %v4379 = vld [vmem:[%s2698 + $0x8] sm:$0xff]
    %v4380 = vld [vmem:[%s2698 + $0x10] sm:$0xff]
    %v4381 = vld [vmem:[%s2698 + $0x18] sm:$0xff]
    %v4382 = vld [vmem:[%s2698 + $0x20] sm:$0xff]
    %v4383 = vld [vmem:[%s2698 + $0x28] sm:$0xff]
    %v4384 = vld [vmem:[%s2698 + $0x30] sm:$0xff]
    %v4385 = vld [vmem:[%s2698 + $0x38] sm:$0xff]
    %v4386 = vld [vmem:[%s2698 + $0x40] sm:$0xff]
    %v4387 = vld [vmem:[%s2698 + $0x48] sm:$0xff]
    %v4388 = vld [vmem:[%s2698 + $0x50] sm:$0xff]
    %v4389 = vld [vmem:[%s2698 + $0x58] sm:$0xff]
    %v4390 = vld [vmem:[%s2698 + $0x60] sm:$0xff]
    %v4391 = vld [vmem:[%s2698 + $0x68] sm:$0xff]
    %v4392 = vld [vmem:[%s2698 + $0x70] sm:$0xff]
    %v4393 = vld [vmem:[%s2698 + $0x78] sm:$0xff]
    %v4394 = vld [vmem:[%s2698 + $0x80] sm:$0xff]
    %v4395 = vld [vmem:[%s2698 + $0x88] sm:$0xff]
    %v4396 = vld [vmem:[%s2698 + $0x90] sm:$0xff]
    %v4397 = vld [vmem:[%s2698 + $0x98] sm:$0xff]
    %v4398 = vld [vmem:[%s2698 + $0xa0] sm:$0xff]
    %v4399 = vld [vmem:[%s2698 + $0xa8] sm:$0xff]
    %v4400 = vld [vmem:[%s2698 + $0xb0] sm:$0xff]
    %v4401 = vld [vmem:[%s2698 + $0xb8] sm:$0xff]
    %v4402 = vld [vmem:[%s2698 + $0xc0] sm:$0xff]
    %v4403 = vld [vmem:[%s2698 + $0xc8] sm:$0xff]
    %v4404 = vld [vmem:[%s2698 + $0xd0] sm:$0xff]
    %v4405 = vld [vmem:[%s2698 + $0xd8] sm:$0xff]
    %v4406 = vld [vmem:[%s2698 + $0xe0] sm:$0xff]
    %v4407 = vld [vmem:[%s2698 + $0xe8] sm:$0xff]
    %v4408 = vld [vmem:[%s2698 + $0xf0] sm:$0xff]
    %v4409 = vld [vmem:[%s2698 + $0xf8] sm:$0xff]
    %v4410 = vld [vmem:[%s2698 + $0x100] sm:$0xff]
    %v4411 = vld [vmem:[%s2698 + $0x108] sm:$0xff]
    %v4412 = vld [vmem:[%s2698 + $0x110] sm:$0xff]
    %v4413 = vld [vmem:[%s2698 + $0x118] sm:$0xff]
    %v4414 = vld [vmem:[%s2698 + $0x120] sm:$0xff]
    %v4415 = vld [vmem:[%s2698 + $0x128] sm:$0xff]
    %v4416 = vld [vmem:[%s2698 + $0x130] sm:$0xff]
    %v4417 = vld [vmem:[%s2698 + $0x138] sm:$0xff]
    %v4418 = vld [vmem:[%s2698 + $0x140] sm:$0xff]
    %v4419 = vld [vmem:[%s2698 + $0x148] sm:$0xff]
    %v4420 = vld [vmem:[%s2698 + $0x150] sm:$0xff]
    %v4421 = vld [vmem:[%s2698 + $0x158] sm:$0xff]
    %v4422 = vld [vmem:[%s2698 + $0x160] sm:$0xff]
    %v4423 = vld [vmem:[%s2698 + $0x168] sm:$0xff]
    %v4424 = vld [vmem:[%s2698 + $0x170] sm:$0xff]
    %v4425 = vld [vmem:[%s2698 + $0x178] sm:$0xff]
    %v4426 = vld [vmem:[%s2698 + $0x180] sm:$0xff]
    %v4427 = vld [vmem:[%s2698 + $0x188] sm:$0xff]
    %v4428 = vld [vmem:[%s2698 + $0x190] sm:$0xff]
    %v4429 = vld [vmem:[%s2698 + $0x198] sm:$0xff]
    %v4430 = vld [vmem:[%s2698 + $0x1a0] sm:$0xff]
    %v4431 = vld [vmem:[%s2698 + $0x1a8] sm:$0xff]
    %v4432 = vld [vmem:[%s2698 + $0x1b0] sm:$0xff]
    %v4433 = vld [vmem:[%s2698 + $0x1b8] sm:$0xff]
    %v4434 = vld [vmem:[%s2698 + $0x1c0] sm:$0xff]
    %v4435 = vld [vmem:[%s2698 + $0x1c8] sm:$0xff]
    %v4436 = vld [vmem:[%s2698 + $0x1d0] sm:$0xff]
    %v4437 = vld [vmem:[%s2698 + $0x1d8] sm:$0xff]
    %v4438 = vld [vmem:[%s2698 + $0x1e0] sm:$0xff]
    %v4439 = vld [vmem:[%s2698 + $0x1e8] sm:$0xff]
    %v4440 = vld [vmem:[%s2698 + $0x1f0] sm:$0xff]
    %v4441 = vld [vmem:[%s2698 + $0x1f8] sm:$0xff]
    %4442 = vmatprep.subr.mxu0 %v4379
    %4443 = vmatpush1.msra.mxu0 %v4378
    %4444 = vmatprep.subr.mxu0 %v4383
    %4445 = vmatpush1.msra.mxu0 %v4382
    %4446 = vmatprep.subr.mxu0 %v4387
    %4447 = vmatpush1.msra.mxu0 %v4386
    %4448 = vmatprep.subr.mxu0 %v4391
    %4449 = vmatpush1.msra.mxu0 %v4390
    %4450 = vmatprep.subr.mxu0 %v4395
    %4451 = vmatpush1.msra.mxu0 %v4394
    %4452 = vmatprep.subr.mxu0 %v4399
    %4453 = vmatpush1.msra.mxu0 %v4398
    %4454 = vmatprep.subr.mxu0 %v4403
    %4455 = vmatpush1.msra.mxu0 %v4402
    %4456 = vmatprep.subr.mxu0 %v4407
    %4457 = vmatpush1.msra.mxu0 %v4406
    %4458 = vmatprep.subr.mxu0 %v4411
    %4459 = vmatpush1.msra.mxu0 %v4410
    %4460 = vmatprep.subr.mxu0 %v4415
    %4461 = vmatpush1.msra.mxu0 %v4414
    %4462 = vmatprep.subr.mxu0 %v4419
    %4463 = vmatpush1.msra.mxu0 %v4418
    %4464 = vmatprep.subr.mxu0 %v4423
    %4465 = vmatpush1.msra.mxu0 %v4422
    %4466 = vmatprep.subr.mxu0 %v4427
    %4467 = vmatpush1.msra.mxu0 %v4426
    %4468 = vmatprep.subr.mxu0 %v4431
    %4469 = vmatpush1.msra.mxu0 %v4430
    %4470 = vmatprep.subr.mxu0 %v4435
    %4471 = vmatpush1.msra.mxu0 %v4434
    %4472 = vmatprep.subr.mxu0 %v4439
    %4473 = vmatpush1.msra.mxu0 %v4438
    %4474 = vmatprep.subr.mxu0 0.0
    %4475 = vmatpush1.msra.mxu0 0.0
    %4476 = vmatprep.subr.mxu0 0.0
    %4477 = vmatpush1.msra.mxu0 0.0
    %4478 = vmatprep.subr.mxu0 0.0
    %4479 = vmatpush1.msra.mxu0 0.0
    %4480 = vmatprep.subr.mxu0 0.0
    %4481 = vmatpush1.msra.mxu0 0.0
    %4482 = vmatprep.subr.mxu0 0.0
    %4483 = vmatpush1.msra.mxu0 0.0
    %4484 = vmatprep.subr.mxu0 0.0
    %4485 = vmatpush1.msra.mxu0 0.0
    %4486 = vmatprep.subr.mxu0 0.0
    %4487 = vmatpush1.msra.mxu0 0.0
    %4488 = vmatprep.subr.mxu0 0.0
    %4489 = vmatpush1.msra.mxu0 0.0
    %4490 = vmatprep.subr.mxu0 0.0
    %4491 = vmatpush1.msra.mxu0 0.0
    %4492 = vmatprep.subr.mxu0 0.0
    %4493 = vmatpush1.msra.mxu0 0.0
    %4494 = vmatprep.subr.mxu0 0.0
    %4495 = vmatpush1.msra.mxu0 0.0
    %4496 = vmatprep.subr.mxu0 0.0
    %4497 = vmatpush1.msra.mxu0 0.0
    %4498 = vmatprep.subr.mxu0 0.0
    %4499 = vmatpush1.msra.mxu0 0.0
    %4500 = vmatprep.subr.mxu0 0.0
    %4501 = vmatpush1.msra.mxu0 0.0
    %4502 = vmatprep.subr.mxu0 0.0
    %4503 = vmatpush1.msra.mxu0 0.0
    %4504 = vmatprep.subr.mxu0 0.0
    %4505 = vmatpush1.msra.mxu0 0.0
    %4506 = vmatprep.mubr.f32.mxu0 0.0
    %4507 = vmatmul.mubr.f32.gmra.mrb[0].mxu0 %v4371
    %v4508 = vpop.f32.mrb[0].mxu0
    %v4509 = vadd.f32 0.0, %v4508
    %v4510 = vpop.f32.mrb[0].mxu0
    %v4511 = vadd.f32 0.0, %v4510
    %4512 = vdwg.mxu0
    %4513 = vmatprep.subr.mxu0 %v4381
    %4514 = vmatpush1.msra.mxu0 %v4380
    %4515 = vmatprep.subr.mxu0 %v4385
    %4516 = vmatpush1.msra.mxu0 %v4384
    %4517 = vmatprep.subr.mxu0 %v4389
    %4518 = vmatpush1.msra.mxu0 %v4388
    %4519 = vmatprep.subr.mxu0 %v4393
    %4520 = vmatpush1.msra.mxu0 %v4392
    %4521 = vmatprep.subr.mxu0 %v4397
    %4522 = vmatpush1.msra.mxu0 %v4396
    %4523 = vmatprep.subr.mxu0 %v4401
    %4524 = vmatpush1.msra.mxu0 %v4400
    %4525 = vmatprep.subr.mxu0 %v4405
    %4526 = vmatpush1.msra.mxu0 %v4404
    %4527 = vmatprep.subr.mxu0 %v4409
    %4528 = vmatpush1.msra.mxu0 %v4408
    %4529 = vmatprep.subr.mxu0 %v4413
    %4530 = vmatpush1.msra.mxu0 %v4412
    %4531 = vmatprep.subr.mxu0 %v4417
    %4532 = vmatpush1.msra.mxu0 %v4416
    %4533 = vmatprep.subr.mxu0 %v4421
    %4534 = vmatpush1.msra.mxu0 %v4420
    %4535 = vmatprep.subr.mxu0 %v4425
    %4536 = vmatpush1.msra.mxu0 %v4424
    %4537 = vmatprep.subr.mxu0 %v4429
    %4538 = vmatpush1.msra.mxu0 %v4428
    %4539 = vmatprep.subr.mxu0 %v4433
    %4540 = vmatpush1.msra.mxu0 %v4432
    %4541 = vmatprep.subr.mxu0 %v4437
    %4542 = vmatpush1.msra.mxu0 %v4436
    %4543 = vmatprep.subr.mxu0 %v4441
    %4544 = vmatpush1.msra.mxu0 %v4440
    %4545 = vmatprep.subr.mxu0 0.0
    %4546 = vmatpush1.msra.mxu0 0.0
    %4547 = vmatprep.subr.mxu0 0.0
    %4548 = vmatpush1.msra.mxu0 0.0
    %4549 = vmatprep.subr.mxu0 0.0
    %4550 = vmatpush1.msra.mxu0 0.0
    %4551 = vmatprep.subr.mxu0 0.0
    %4552 = vmatpush1.msra.mxu0 0.0
    %4553 = vmatprep.subr.mxu0 0.0
    %4554 = vmatpush1.msra.mxu0 0.0
    %4555 = vmatprep.subr.mxu0 0.0
    %4556 = vmatpush1.msra.mxu0 0.0
    %4557 = vmatprep.subr.mxu0 0.0
    %4558 = vmatpush1.msra.mxu0 0.0
    %4559 = vmatprep.subr.mxu0 0.0
    %4560 = vmatpush1.msra.mxu0 0.0
    %4561 = vmatprep.subr.mxu0 0.0
    %4562 = vmatpush1.msra.mxu0 0.0
    %4563 = vmatprep.subr.mxu0 0.0
    %4564 = vmatpush1.msra.mxu0 0.0
    %4565 = vmatprep.subr.mxu0 0.0
    %4566 = vmatpush1.msra.mxu0 0.0
    %4567 = vmatprep.subr.mxu0 0.0
    %4568 = vmatpush1.msra.mxu0 0.0
    %4569 = vmatprep.subr.mxu0 0.0
    %4570 = vmatpush1.msra.mxu0 0.0
    %4571 = vmatprep.subr.mxu0 0.0
    %4572 = vmatpush1.msra.mxu0 0.0
    %4573 = vmatprep.subr.mxu0 0.0
    %4574 = vmatpush1.msra.mxu0 0.0
    %4575 = vmatprep.subr.mxu0 0.0
    %4576 = vmatpush1.msra.mxu0 0.0
    %4577 = vmatprep.mubr.f32.mxu0 0.0
    %4578 = vmatmul.mubr.f32.gmra.mrb[0].mxu0 %v4371
    %v4579 = vpop.f32.mrb[0].mxu0
    %v4580 = vadd.f32 0.0, %v4579
    %v4581 = vpop.f32.mrb[0].mxu0
    %v4582 = vadd.f32 0.0, %v4581
    %4583 = vdwg.mxu0
    %v4584 = vadd.f32 %v4374, %v4509
    %v4585 = vadd.f32 %v4375, %v4511
    %v4586 = vadd.f32 %v4376, %v4580
    %v4587 = vadd.f32 %v4377, %v4582
    %v4588 = vxor.u32 %v4584, 2147483648
    %v4589 = vmul.f32 %v4588, 1.442695
    %v4590 = vpow.pop %v4589
    %v4591 = vadd.f32 %v4590, 1.0
    %v4592 = vrcp.pop %v4591
    %v4593 = vmul.f32 1.0, %v4592
    %v4594 = vxor.u32 %v4585, 2147483648
    %v4595 = vmul.f32 %v4594, 1.442695
    %v4596 = vpow.pop %v4595
    %v4597 = vadd.f32 %v4596, 1.0
    %v4598 = vrcp.pop %v4597
    %v4599 = vmul.f32 1.0, %v4598
    %v4600 = vtanh.pop %v4586
    %v4601 = vxor.u32 %v4587, 2147483648
    %v4602 = vmul.f32 %v4601, 1.442695
    %v4603 = vpow.pop %v4602
    %v4604 = vadd.f32 %v4603, 1.0
    %v4605 = vrcp.pop %v4604
    %v4606 = vmul.f32 1.0, %v4605
    %v4607 = vmul.f32 %v4599, %v4369
    %v4608 = vmul.f32 %v4593, %v4600
    %v4609 = vadd.f32 %v4607, %v4608
    %v4610 = vtanh.pop %v4609
    %v4611 = vmul.f32 %v4606, %v4610
    %s4612 = scalar_lea.vmem %s4, 56
    %4613 = vst [vmem:[%s4612] sm:$0xff] %v4611
    // Predicated region
    $region26: #{_encoder_forward_impl.1} parent=1 // pred_check
      _
    $region27: #{_encoder_forward_impl.1} parent=1 // pred_check_branch
      %4615 = sbr.rel (0) target = $region29
    $region28: #{_encoder_forward_impl.1} parent=1 // pred_region
      _
    $region29: #{_encoder_forward_impl.1} parent=1 // pred_fallthru
      _
    // Predicated region
    $region30: #{_encoder_forward_impl.1} parent=1 // pred_check
      _
    $region31: #{_encoder_forward_impl.1} parent=1 // pred_check_branch
      %4617 = sbr.rel (0) target = $region33
    $region32: #{_encoder_forward_impl.1} parent=1 // pred_region
      _
    $region33: #{_encoder_forward_impl.1} parent=1 // pred_fallthru
      _
    %4618 = vsyncpa [#allocation5], 1
    %4619 = vsyncpa [#allocation7], 1

</llo_original>
